<compile_context>
chip_gen: v5e
topology: v5e:2x2
jax: 0.10.0
libtpu: 0.0.40
codegen_flags: <defaults>
</compile_context>

<pallas_src>
import functools

import jax
import jax.numpy as jnp
from jax.experimental import pallas as pl
from jax.experimental.pallas import tpu as pltpu

EPS = 1e-5                       # torch.nn.BatchNorm1d default eps
_VMEM_LIMIT = 32 * 1024 * 1024   # conservative scoped-VMEM budget (fits v5e/v6e/v7x)
_ROW_TILE_TARGET = 1024          # rows per tile (amortizes per-step overhead, small in VMEM)


def _pick_row_tile(n, target=_ROW_TILE_TARGET):
    """Largest row tile <= target that divides n and keeps the sublane dim a multiple of 8."""
    if n <= target:
        return n
    for t in range(target, 7, -1):
        if n % t == 0 and t % 8 == 0:
            return t
    return n  # TODO(synk): pad + mask ragged N instead of falling back to one big block.


# ---------------------------------------------------------------------------
# Kernels
# ---------------------------------------------------------------------------
def _small_cin_matmul(x, w, b):
    """(TN, Cin) @ (Cin, C) + b with tiny Cin (=2): unrolled VPU broadcast-FMAs.
    Avoids a K=2 MXU matmul that would waste >98% of the systolic array."""
    y = x[:, 0:1] * w[0:1, :] + b
    for c in range(1, x.shape[1]):          # static, Cin == 2
        y = y + x[:, c:c + 1] * w[c:c + 1, :]
    return y


def _stats_pass1_kernel(x_ref, w1_ref, b1_ref, sum_ref, ssq_ref):
    """Per-batch sum / sum-of-squares of y1 = x @ w1 + b1, accumulated over row tiles."""
    t = pl.program_id(1)
    y = _small_cin_matmul(x_ref[0], w1_ref[0], b1_ref[...])            # (TN, C1)
    s = jnp.sum(y, axis=0, keepdims=True)
    q = jnp.sum(y * y, axis=0, keepdims=True)

    @pl.when(t == 0)
    def _():
        sum_ref[...] = jnp.zeros_like(sum_ref)
        ssq_ref[...] = jnp.zeros_like(ssq_ref)

    sum_ref[...] += s[None]
    ssq_ref[...] += q[None]


def _fused_pair_pass2_kernel(x_ref, w1_ref, b1_ref, sc1_ref, sh1_ref, w2_ref, b2_ref,
                             sum_ref, ssq_ref, max_ref, min_ref):
    """a1 = relu(BN1(x @ w1 + b1)) with BN1 folded to scale/shift; y2 = a1 @ w2 + b2.
    Accumulates per-batch sum/sumsq and running max/min of y2 — y2 never leaves VMEM."""
    t = pl.program_id(1)
    y1 = _small_cin_matmul(x_ref[0], w1_ref[0], b1_ref[...])           # (TN, C1) on the VPU
    a1 = jnp.maximum(y1 * sc1_ref[...] + sh1_ref[...], 0.0)            # fused BN1 + ReLU
    y2 = jnp.dot(a1, w2_ref[...], preferred_element_type=jnp.float32) + b2_ref[...]  # MXU

    s = jnp.sum(y2, axis=0, keepdims=True)
    q = jnp.sum(y2 * y2, axis=0, keepdims=True)
    mx = jnp.max(y2, axis=0, keepdims=True)
    mn = jnp.min(y2, axis=0, keepdims=True)

    @pl.when(t == 0)
    def _():
        sum_ref[...] = jnp.zeros_like(sum_ref)
        ssq_ref[...] = jnp.zeros_like(ssq_ref)
        max_ref[...] = jnp.full(max_ref.shape, -jnp.inf, max_ref.dtype)
        min_ref[...] = jnp.full(min_ref.shape, jnp.inf, min_ref.dtype)

    sum_ref[...] += s[None]
    ssq_ref[...] += q[None]
    max_ref[...] = jnp.maximum(max_ref[...], mx[None])
    min_ref[...] = jnp.minimum(min_ref[...], mn[None])


def _stn_head_kernel(mx_ref, mn_ref, sc2_ref, sh2_ref, w3_ref, b3_ref, g3_ref, bt3_ref,
                     w4_ref, b4_ref, eye_ref, o_ref):
    """Fused STN head on M=B rows: max-over-points (via pre-reduced max/min of the raw
    conv2 output) -> fc1 + BN3 + ReLU -> fc2 -> + identity."""
    sc = sc2_ref[...]                                                   # (1, C2)
    g = jnp.where(sc >= 0.0, sc * mx_ref[...], sc * mn_ref[...]) + sh2_ref[...]
    g = jnp.maximum(g, 0.0)                                             # relu(bn2) commutes with max
    h = jnp.dot(g, w3_ref[...], preferred_element_type=jnp.float32) + b3_ref[...]
    m = jnp.mean(h, axis=0, keepdims=True)                              # BN3 over the B rows
    v = jnp.maximum(jnp.mean(h * h, axis=0, keepdims=True) - m * m, 0.0)
    h = (h - m) * jax.lax.rsqrt(v + EPS) * g3_ref[...] + bt3_ref[...]
    h = jnp.maximum(h, 0.0)
    o_ref[...] = (jnp.dot(h, w4_ref[...], preferred_element_type=jnp.float32)
                  + b4_ref[...] + eye_ref[...])


# ---------------------------------------------------------------------------
# pallas_call wrappers
# ---------------------------------------------------------------------------
def conv_stats_pass(x_bnd, w1, b1):
    """Pass 1 over (B, N, Cin): per-batch sum / sumsq of x @ w1 + b1.
    w1 has shape (1, Cin, C1) (shared) or (B, Cin, C1) (per-batch, transform folded in)."""
    B, N, Cin = x_bnd.shape
    Bw, _, C1 = w1.shape
    TN = _pick_row_tile(N)
    w1_map = (lambda b, t: (b, 0, 0)) if Bw == B else (lambda b, t: (0, 0, 0))
    out = jax.ShapeDtypeStruct((B, 1, C1), jnp.float32)
    acc_spec = pl.BlockSpec((1, 1, C1), lambda b, t: (b, 0, 0))
    return pl.pallas_call(
        _stats_pass1_kernel,
        out_shape=(out, out),
        grid=(B, N // TN),
        in_specs=[
            pl.BlockSpec((1, TN, Cin), lambda b, t: (b, t, 0)),
            pl.BlockSpec((1, Cin, C1), w1_map),
            pl.BlockSpec((1, C1), lambda b, t: (0, 0)),
        ],
        out_specs=(acc_spec, acc_spec),
        compiler_params=pltpu.CompilerParams(
            dimension_semantics=("parallel", "arbitrary"),
            vmem_limit_bytes=_VMEM_LIMIT),
    )(x_bnd, w1, b1.reshape(1, C1))


def fused_pair_pass(x_bnd, w1, b1, scale1, shift1, w2, b2):
    """Pass 2: layer-1 (folded BN + ReLU) feeding layer-2's MXU matmul.  Returns
    per-batch (sum, sumsq, max, min) of the raw layer-2 output, each (B, 1, C2)."""
    B, N, Cin = x_bnd.shape
    Bw, _, C1 = w1.shape
    C2 = w2.shape[1]
    TN = _pick_row_tile(N)
    w1_map = (lambda b, t: (b, 0, 0)) if Bw == B else (lambda b, t: (0, 0, 0))
    vec1 = pl.BlockSpec((1, C1), lambda b, t: (0, 0))
    vec2 = pl.BlockSpec((1, C2), lambda b, t: (0, 0))
    out = jax.ShapeDtypeStruct((B, 1, C2), jnp.float32)
    acc_spec = pl.BlockSpec((1, 1, C2), lambda b, t: (b, 0, 0))
    return pl.pallas_call(
        _fused_pair_pass2_kernel,
        out_shape=(out, out, out, out),
        grid=(B, N // TN),
        in_specs=[
            pl.BlockSpec((1, TN, Cin), lambda b, t: (b, t, 0)),
            pl.BlockSpec((1, Cin, C1), w1_map),
            vec1, vec1, vec1,
            pl.BlockSpec((C1, C2), lambda b, t: (0, 0)),
            vec2,
        ],
        out_specs=(acc_spec, acc_spec, acc_spec, acc_spec),
        compiler_params=pltpu.CompilerParams(
            dimension_semantics=("parallel", "arbitrary"),
            vmem_limit_bytes=_VMEM_LIMIT),
    )(x_bnd, w1, b1.reshape(1, C1), scale1.reshape(1, C1), shift1.reshape(1, C1),
      w2, b2.reshape(1, C2))


def stn_head(mx, mn, scale2, shift2, fc1_w, fc1_b, bn3_g, bn3_b, fc2_w, fc2_b, d):
    """Single-block fused STN head (rows collapse to M=B)."""
    B, C2 = mx.shape
    H2 = fc1_w.shape[1]
    dd = d * d
    eye = jnp.eye(d, dtype=jnp.float32).reshape(1, dd)

    def full(shape):
        return pl.BlockSpec(shape, lambda i, _s=shape: tuple(0 for _ in _s))

    return pl.pallas_call(
        _stn_head_kernel,
        out_shape=jax.ShapeDtypeStruct((B, dd), jnp.float32),
        grid=(1,),
        in_specs=[
            full((B, C2)), full((B, C2)), full((1, C2)), full((1, C2)),
            full((C2, H2)), full((1, H2)), full((1, H2)), full((1, H2)),
            full((H2, dd)), full((1, dd)), full((1, dd)),
        ],
        out_specs=full((B, dd)),
        compiler_params=pltpu.CompilerParams(
            dimension_semantics=("arbitrary",),
            vmem_limit_bytes=_VMEM_LIMIT),
    )(mx, mn, scale2.reshape(1, C2), shift2.reshape(1, C2),
      fc1_w, fc1_b.reshape(1, H2), bn3_g.reshape(1, H2), bn3_b.reshape(1, H2),
      fc2_w, fc2_b.reshape(1, dd), eye)


# ---------------------------------------------------------------------------
# Model glue (tiny O(C) / O(B*C) math in plain JAX)
# ---------------------------------------------------------------------------
def _fold_bn(sum_b1c, ssq_b1c, n_rows, gamma, beta):
    """Fold training-mode BatchNorm (global biased stats over n_rows) into per-channel
    scale/shift, from per-batch partial sums.  Stats stay in f32."""
    s = jnp.sum(sum_b1c, axis=(0, 1))
    q = jnp.sum(ssq_b1c, axis=(0, 1))
    mean = s / n_rows
    var = jnp.maximum(q / n_rows - mean * mean, 0.0)
    scale = gamma * jax.lax.rsqrt(var + EPS)
    shift = beta - mean * scale
    return scale, shift


def shallow_pointnet_feat(x, p, *, global_feat=True):
    """ShallowPointNetfeat.forward (global_feat=True, feature_transform=False).
    x: (B, d, N) in PyTorch NCL layout."""
    B, d, N = x.shape
    stn_1 = p["stn_conv2_w"].shape[1]
    d_out = p["conv2_w"].shape[1]
    x_t = jnp.transpose(x, (0, 2, 1)).astype(jnp.float32)              # (B, N, d) channels-last

    # ---------------- ShallowSTNkd (conv trunk: two tiled passes) ----------------
    w1s = p["stn_conv1_w"][None]                                        # (1, d, 128) shared weight
    s1, q1 = conv_stats_pass(x_t, w1s, p["stn_conv1_b"])
    sc1, sh1 = _fold_bn(s1, q1, B * N, p["stn_bn1_g"], p["stn_bn1_b"])
    s2, q2, mx2, mn2 = fused_pair_pass(x_t, w1s, p["stn_conv1_b"], sc1, sh1,
                                       p["stn_conv2_w"], p["stn_conv2_b"])
    sc2, sh2 = _fold_bn(s2, q2, B * N, p["stn_bn2_g"], p["stn_bn2_b"])

    # ---------------- STN head (max -> fc1+bn3+relu -> fc2 -> +I) in one kernel ----
    trans = stn_head(mx2.reshape(B, stn_1), mn2.reshape(B, stn_1), sc2, sh2,
                     p["stn_fc1_w"], p["stn_fc1_b"], p["stn_bn3_g"], p["stn_bn3_b"],
                     p["stn_fc2_w"], p["stn_fc2_b"], d).reshape(B, d, d)

    # ---- fold the learned dxd transform into conv1's weights (replaces torch.bmm) ----
    eff_w1 = jnp.einsum("bij,jc->bic", trans, p["conv1_w"])             # (B, d, 64), tiny

    # ---------------- trunk: conv1+bn1+relu -> conv2+bn2 -> max over points --------
    t1, r1 = conv_stats_pass(x_t, eff_w1, p["conv1_b"])
    tsc1, tsh1 = _fold_bn(t1, r1, B * N, p["bn1_g"], p["bn1_b"])
    t2, r2, mxt, mnt = fused_pair_pass(x_t, eff_w1, p["conv1_b"], tsc1, tsh1,
                                       p["conv2_w"], p["conv2_b"])
    tsc2, tsh2 = _fold_bn(t2, r2, B * N, p["bn2_g"], p["bn2_b"])
    # torch.max over points of bn2(conv2(.)): BN is a per-channel affine map, so the
    # max is scale*max_raw (scale>=0) or scale*min_raw (scale<0), plus shift.
    gfeat = jnp.where(tsc2 >= 0.0,
                      tsc2 * mxt.reshape(B, d_out),
                      tsc2 * mnt.reshape(B, d_out)) + tsh2              # (B, d_out)

    if global_feat:
        return gfeat, trans, None                                        # trans_feat is None
    # TODO(synk): global_feat=False needs the (B, 64, N) pointfeat activation written back
    # to HBM (extra output on the trunk pass-2 kernel); not implemented here.
    raise NotImplementedError("global_feat=False path not implemented")


# ---------------------------------------------------------------------------
# Params + pure-JAX reference (same math) for the sanity check
# ---------------------------------------------------------------------------
def init_params(key, d=2, d_out=128, stn_1=128, stn_2=64):
    ks = jax.random.split(key, 22)

    def w(k, shape, scale=0.1):
        return (scale * jax.random.normal(k, shape)).astype(jnp.float32)

    p = {}
    # ShallowSTNkd(k=d, hidden_1=stn_1, hidden_2=stn_2)
    p["stn_conv1_w"], p["stn_conv1_b"] = w(ks[0], (d, 128)), w(ks[1], (128,))
    p["stn_bn1_g"], p["stn_bn1_b"] = 1.0 + w(ks[2], (128,)), w(ks[3], (128,))
    p["stn_conv2_w"], p["stn_conv2_b"] = w(ks[4], (128, stn_1)), w(ks[5], (stn_1,))
    p["stn_bn2_g"], p["stn_bn2_b"] = 1.0 + w(ks[6], (stn_1,)), w(ks[7], (stn_1,))
    p["stn_fc1_w"], p["stn_fc1_b"] = w(ks[8], (stn_1, stn_2)), w(ks[9], (stn_2,))
    p["stn_bn3_g"], p["stn_bn3_b"] = 1.0 + w(ks[10], (stn_2,)), w(ks[11], (stn_2,))
    p["stn_fc2_w"], p["stn_fc2_b"] = w(ks[12], (stn_2, d * d)), w(ks[13], (d * d,))
    # ShallowPointNetfeat trunk
    p["conv1_w"], p["conv1_b"] = w(ks[14], (d, 64)), w(ks[15], (64,))
    p["bn1_g"], p["bn1_b"] = 1.0 + w(ks[16], (64,)), w(ks[17], (64,))
    p["conv2_w"], p["conv2_b"] = w(ks[18], (64, d_out)), w(ks[19], (d_out,))
    p["bn2_g"], p["bn2_b"] = 1.0 + w(ks[20], (d_out,)), w(ks[21], (d_out,))
    # Flip the sign of some BN gammas so the scale<0 (min) branch of the folded max is exercised.
    p["bn2_g"] = p["bn2_g"] * jnp.where(jnp.arange(d_out) % 5 == 0, -1.0, 1.0)
    p["stn_bn2_g"] = p["stn_bn2_g"] * jnp.where(jnp.arange(stn_1) % 7 == 0, -1.0, 1.0)
    return p


def reference(x, p):
    B, d, N = x.shape

    def pw(h, w_, b_, g_=None, bt_=None, bn=True, relu=True):
        y = h @ w_ + b_
        if bn:
            m = y.mean(0, keepdims=True)
            v = ((y - m) ** 2).mean(0, keepdims=True)
            y = (y - m) / jnp.sqrt(v + EPS) * g_ + bt_
        if relu:
            y = jnp.maximum(y, 0.0)
        return y

    x_t = jnp.transpose(x, (0, 2, 1))
    flat = x_t.reshape(B * N, d)
    h = pw(flat, p["stn_conv1_w"], p["stn_conv1_b"], p["stn_bn1_g"], p["stn_bn1_b"])
    h = pw(h, p["stn_conv2_w"], p["stn_conv2_b"], p["stn_bn2_g"], p["stn_bn2_b"])
    h1 = p["stn_conv2_w"].shape[1]
    g = h.reshape(B, N, h1).max(axis=1)
    g = pw(g, p["stn_fc1_w"], p["stn_fc1_b"], p["stn_bn3_g"], p["stn_bn3_b"])
    g = pw(g, p["stn_fc2_w"], p["stn_fc2_b"], bn=False, relu=False)
    trans = (g + jnp.eye(d, dtype=jnp.float32).reshape(1, d * d)).reshape(B, d, d)
    xt = jnp.einsum("bnd,bde->bne", x_t, trans)
    f = pw(xt.reshape(B * N, d), p["conv1_w"], p["conv1_b"], p["bn1_g"], p["bn1_b"])
    f = pw(f, p["conv2_w"], p["conv2_b"], p["bn2_g"], p["bn2_b"], relu=False)
    gf = f.reshape(B, N, -1).max(axis=1)
    return gf, trans


if __name__ == "__main__":
    key = jax.random.PRNGKey(0)
    kx, kp = jax.random.split(key)

    B, d, N = 2, 2, 64            # batch=2, d=2 input channels, 64 points
    d_out, stn_1, stn_2 = 128, 128, 64

    x = jax.random.normal(kx, (B, d, N), jnp.float32)
    params = init_params(kp, d=d, d_out=d_out, stn_1=stn_1, stn_2=stn_2)

    fwd = jax.jit(functools.partial(shallow_pointnet_feat, global_feat=True))
    gfeat, trans, trans_feat = fwd(x, params)
    jax.block_until_ready((gfeat, trans))

    assert gfeat.shape == (B, d_out) and trans.shape == (B, d, d) and trans_feat is None

    ref_gf, ref_trans = reference(x, params)
    assert jnp.allclose(trans, ref_trans, rtol=3e-3, atol=3e-3), "trans mismatch"
    assert jnp.allclose(gfeat, ref_gf, rtol=3e-3, atol=3e-3), "global feature mismatch"

    print("KERNEL_OK")
</pallas_src>

<mosaic_0001>
module attributes {stable_mosaic.version = 11 : i64} {
  func.func @_fused_pair_pass2_kernel(%arg0: i32, %arg1: i32, %arg2: memref<1x64x2xf32, #tpu.memory_space<vmem>>, %arg3: memref<1x2x128xf32, #tpu.memory_space<vmem>>, %arg4: memref<1x128xf32, #tpu.memory_space<vmem>>, %arg5: memref<1x128xf32, #tpu.memory_space<vmem>>, %arg6: memref<1x128xf32, #tpu.memory_space<vmem>>, %arg7: memref<128x128xf32, #tpu.memory_space<vmem>>, %arg8: memref<1x128xf32, #tpu.memory_space<vmem>>, %arg9: memref<1x1x128xf32, #tpu.memory_space<vmem>>, %arg10: memref<1x1x128xf32, #tpu.memory_space<vmem>>, %arg11: memref<1x1x128xf32, #tpu.memory_space<vmem>>, %arg12: memref<1x1x128xf32, #tpu.memory_space<vmem>>) attributes {dimension_semantics = [#tpu.dimension_semantics<parallel>, #tpu.dimension_semantics<arbitrary>], iteration_bounds = array<i64: 2, 1>, scalar_prefetch = 0 : i64, scratch_operands = 0 : i64, tpu.core_type = #tpu.core_type<tc>, window_params = [{transform_indices = @transform_0, window_bounds = array<i64: 1, 64, 2>}, {pipeline_mode = #tpu.pipeline_mode<synchronous>, transform_indices = @transform_1, window_bounds = array<i64: 1, 2, 128>}, {pipeline_mode = #tpu.pipeline_mode<synchronous>, transform_indices = @transform_2, window_bounds = array<i64: 1, 128>}, {pipeline_mode = #tpu.pipeline_mode<synchronous>, transform_indices = @transform_3, window_bounds = array<i64: 1, 128>}, {pipeline_mode = #tpu.pipeline_mode<synchronous>, transform_indices = @transform_4, window_bounds = array<i64: 1, 128>}, {pipeline_mode = #tpu.pipeline_mode<synchronous>, transform_indices = @transform_5, window_bounds = array<i64: 128, 128>}, {pipeline_mode = #tpu.pipeline_mode<synchronous>, transform_indices = @transform_6, window_bounds = array<i64: 1, 128>}, {transform_indices = @transform_7, window_bounds = array<i64: 1, 1, 128>}, {transform_indices = @transform_8, window_bounds = array<i64: 1, 1, 128>}, {transform_indices = @transform_9, window_bounds = array<i64: 1, 1, 128>}, {transform_indices = @transform_10, window_bounds = array<i64: 1, 1, 128>}]} {
    %c0 = arith.constant 0 : index
    %c0_0 = arith.constant 0 : index
    %c0_1 = arith.constant 0 : index
    %0 = vector.load %arg2[%c0, %c0_0, %c0_1] : memref<1x64x2xf32, #tpu.memory_space<vmem>>, vector<1x64x2xf32>
    %1 = vector.shape_cast %0 : vector<1x64x2xf32> to vector<64x2xf32>
    %c0_2 = arith.constant 0 : index
    %c0_3 = arith.constant 0 : index
    %c0_4 = arith.constant 0 : index
    %2 = vector.load %arg3[%c0_2, %c0_3, %c0_4] : memref<1x2x128xf32, #tpu.memory_space<vmem>>, vector<1x2x128xf32>
    %3 = vector.shape_cast %2 : vector<1x2x128xf32> to vector<2x128xf32>
    %c0_5 = arith.constant 0 : index
    %c0_6 = arith.constant 0 : index
    %4 = vector.load %arg4[%c0_5, %c0_6] : memref<1x128xf32, #tpu.memory_space<vmem>>, vector<1x128xf32>
    %5 = vector.extract_strided_slice %1 {offsets = [0, 0], sizes = [64, 1], strides = [1, 1]} : vector<64x2xf32> to vector<64x1xf32>
    %6 = vector.extract_strided_slice %3 {offsets = [0, 0], sizes = [1, 128], strides = [1, 1]} : vector<2x128xf32> to vector<1x128xf32>
    %7 = vector.broadcast %5 : vector<64x1xf32> to vector<64x128xf32>
    %8 = vector.broadcast %6 : vector<1x128xf32> to vector<64x128xf32>
    %9 = arith.mulf %7, %8 : vector<64x128xf32>
    %10 = vector.broadcast %4 : vector<1x128xf32> to vector<64x128xf32>
    %11 = arith.addf %9, %10 : vector<64x128xf32>
    %12 = vector.extract_strided_slice %1 {offsets = [0, 1], sizes = [64, 1], strides = [1, 1]} : vector<64x2xf32> to vector<64x1xf32>
    %13 = vector.extract_strided_slice %3 {offsets = [1, 0], sizes = [1, 128], strides = [1, 1]} : vector<2x128xf32> to vector<1x128xf32>
    %14 = vector.broadcast %12 : vector<64x1xf32> to vector<64x128xf32>
    %15 = vector.broadcast %13 : vector<1x128xf32> to vector<64x128xf32>
    %16 = arith.mulf %14, %15 : vector<64x128xf32>
    %17 = arith.addf %11, %16 : vector<64x128xf32>
    %c0_7 = arith.constant 0 : index
    %c0_8 = arith.constant 0 : index
    %18 = vector.load %arg5[%c0_7, %c0_8] : memref<1x128xf32, #tpu.memory_space<vmem>>, vector<1x128xf32>
    %19 = vector.broadcast %18 : vector<1x128xf32> to vector<64x128xf32>
    %20 = arith.mulf %17, %19 : vector<64x128xf32>
    %c0_9 = arith.constant 0 : index
    %c0_10 = arith.constant 0 : index
    %21 = vector.load %arg6[%c0_9, %c0_10] : memref<1x128xf32, #tpu.memory_space<vmem>>, vector<1x128xf32>
    %22 = vector.broadcast %21 : vector<1x128xf32> to vector<64x128xf32>
    %23 = arith.addf %20, %22 : vector<64x128xf32>
    %cst = arith.constant 0.000000e+00 : f32
    %24 = vector.broadcast %cst : f32 to vector<64x128xf32>
    %25 = arith.maximumf %23, %24 : vector<64x128xf32>
    %c0_11 = arith.constant 0 : index
    %c0_12 = arith.constant 0 : index
    %26 = vector.load %arg7[%c0_11, %c0_12] : memref<128x128xf32, #tpu.memory_space<vmem>>, vector<128x128xf32>
    %cst_13 = arith.constant dense<0.000000e+00> : vector<64x128xf32>
    %27 = tpu.matmul %25, %26, %cst_13 {dimension_numbers = #tpu.dot_dimension_numbers<[1], [0], [0], [1], [0, 0, 1, 1], [], []>} : vector<64x128xf32>, vector<128x128xf32>, vector<64x128xf32> -> vector<64x128xf32>
    %c0_14 = arith.constant 0 : index
    %c0_15 = arith.constant 0 : index
    %28 = vector.load %arg8[%c0_14, %c0_15] : memref<1x128xf32, #tpu.memory_space<vmem>>, vector<1x128xf32>
    %29 = vector.broadcast %28 : vector<1x128xf32> to vector<64x128xf32>
    %30 = arith.addf %27, %29 : vector<64x128xf32>
    %cst_16 = arith.constant dense<0.000000e+00> : vector<128xf32>
    %31 = vector.multi_reduction <add>, %30, %cst_16 [0] : vector<64x128xf32> to vector<128xf32>
    %32 = vector.shape_cast %31 : vector<128xf32> to vector<1x128xf32>
    %33 = arith.mulf %30, %30 : vector<64x128xf32>
    %cst_17 = arith.constant dense<0.000000e+00> : vector<128xf32>
    %34 = vector.multi_reduction <add>, %33, %cst_17 [0] : vector<64x128xf32> to vector<128xf32>
    %35 = vector.shape_cast %34 : vector<128xf32> to vector<1x128xf32>
    %cst_18 = arith.constant dense<0xFF800000> : vector<128xf32>
    %36 = vector.multi_reduction <maximumf>, %30, %cst_18 [0] : vector<64x128xf32> to vector<128xf32>
    %37 = vector.shape_cast %36 : vector<128xf32> to vector<1x128xf32>
    %cst_19 = arith.constant dense<0x7F800000> : vector<128xf32>
    %38 = vector.multi_reduction <minimumf>, %30, %cst_19 [0] : vector<64x128xf32> to vector<128xf32>
    %39 = vector.shape_cast %38 : vector<128xf32> to vector<1x128xf32>
    %c0_i32 = arith.constant 0 : i32
    %40 = arith.cmpi eq, %arg1, %c0_i32 : i32
    %41 = arith.extui %40 : i1 to i32
    %c0_i32_20 = arith.constant 0 : i32
    %42 = arith.cmpi ne, %41, %c0_i32_20 : i32
    scf.if %42 {
      %cst_45 = arith.constant 0.000000e+00 : f32
      %59 = vector.broadcast %cst_45 : f32 to vector<1x1x128xf32>
      %c0_46 = arith.constant 0 : index
      %c0_47 = arith.constant 0 : index
      %c0_48 = arith.constant 0 : index
      %60 = vector.load %arg9[%c0_46, %c0_47, %c0_48] : memref<1x1x128xf32, #tpu.memory_space<vmem>>, vector<1x1x128xf32>
      tpu.vector_store %arg9[%c0_46, %c0_47, %c0_48], %59 {strides = array<i32>} : memref<1x1x128xf32, #tpu.memory_space<vmem>>, vector<1x1x128xf32>,
      %cst_49 = arith.constant 0.000000e+00 : f32
      %61 = vector.broadcast %cst_49 : f32 to vector<1x1x128xf32>
      %c0_50 = arith.constant 0 : index
      %c0_51 = arith.constant 0 : index
      %c0_52 = arith.constant 0 : index
      %62 = vector.load %arg10[%c0_50, %c0_51, %c0_52] : memref<1x1x128xf32, #tpu.memory_space<vmem>>, vector<1x1x128xf32>
      tpu.vector_store %arg10[%c0_50, %c0_51, %c0_52], %61 {strides = array<i32>} : memref<1x1x128xf32, #tpu.memory_space<vmem>>, vector<1x1x128xf32>,
      %cst_53 = arith.constant 0xFF800000 : f32
      %63 = vector.broadcast %cst_53 : f32 to vector<1x1x128xf32>
      %c0_54 = arith.constant 0 : index
      %c0_55 = arith.constant 0 : index
      %c0_56 = arith.constant 0 : index
      %64 = vector.load %arg11[%c0_54, %c0_55, %c0_56] : memref<1x1x128xf32, #tpu.memory_space<vmem>>, vector<1x1x128xf32>
      tpu.vector_store %arg11[%c0_54, %c0_55, %c0_56], %63 {strides = array<i32>} : memref<1x1x128xf32, #tpu.memory_space<vmem>>, vector<1x1x128xf32>,
      %cst_57 = arith.constant 0x7F800000 : f32
      %65 = vector.broadcast %cst_57 : f32 to vector<1x1x128xf32>
      %c0_58 = arith.constant 0 : index
      %c0_59 = arith.constant 0 : index
      %c0_60 = arith.constant 0 : index
      %66 = vector.load %arg12[%c0_58, %c0_59, %c0_60] : memref<1x1x128xf32, #tpu.memory_space<vmem>>, vector<1x1x128xf32>
      tpu.vector_store %arg12[%c0_58, %c0_59, %c0_60], %65 {strides = array<i32>} : memref<1x1x128xf32, #tpu.memory_space<vmem>>, vector<1x1x128xf32>,
    } else {
    }
    %c0_21 = arith.constant 0 : index
    %c0_22 = arith.constant 0 : index
    %c0_23 = arith.constant 0 : index
    %43 = vector.load %arg9[%c0_21, %c0_22, %c0_23] : memref<1x1x128xf32, #tpu.memory_space<vmem>>, vector<1x1x128xf32>
    %44 = vector.shape_cast %32 : vector<1x128xf32> to vector<1x1x128xf32>
    %45 = arith.addf %43, %44 : vector<1x1x128xf32>
    %c0_24 = arith.constant 0 : index
    %c0_25 = arith.constant 0 : index
    %c0_26 = arith.constant 0 : index
    %46 = vector.load %arg9[%c0_24, %c0_25, %c0_26] : memref<1x1x128xf32, #tpu.memory_space<vmem>>, vector<1x1x128xf32>
    tpu.vector_store %arg9[%c0_24, %c0_25, %c0_26], %45 {strides = array<i32>} : memref<1x1x128xf32, #tpu.memory_space<vmem>>, vector<1x1x128xf32>,
    %c0_27 = arith.constant 0 : index
    %c0_28 = arith.constant 0 : index
    %c0_29 = arith.constant 0 : index
    %47 = vector.load %arg10[%c0_27, %c0_28, %c0_29] : memref<1x1x128xf32, #tpu.memory_space<vmem>>, vector<1x1x128xf32>
    %48 = vector.shape_cast %35 : vector<1x128xf32> to vector<1x1x128xf32>
    %49 = arith.addf %47, %48 : vector<1x1x128xf32>
    %c0_30 = arith.constant 0 : index
    %c0_31 = arith.constant 0 : index
    %c0_32 = arith.constant 0 : index
    %50 = vector.load %arg10[%c0_30, %c0_31, %c0_32] : memref<1x1x128xf32, #tpu.memory_space<vmem>>, vector<1x1x128xf32>
    tpu.vector_store %arg10[%c0_30, %c0_31, %c0_32], %49 {strides = array<i32>} : memref<1x1x128xf32, #tpu.memory_space<vmem>>, vector<1x1x128xf32>,
    %c0_33 = arith.constant 0 : index
    %c0_34 = arith.constant 0 : index
    %c0_35 = arith.constant 0 : index
    %51 = vector.load %arg11[%c0_33, %c0_34, %c0_35] : memref<1x1x128xf32, #tpu.memory_space<vmem>>, vector<1x1x128xf32>
    %52 = vector.shape_cast %37 : vector<1x128xf32> to vector<1x1x128xf32>
    %53 = arith.maximumf %51, %52 : vector<1x1x128xf32>
    %c0_36 = arith.constant 0 : index
    %c0_37 = arith.constant 0 : index
    %c0_38 = arith.constant 0 : index
    %54 = vector.load %arg11[%c0_36, %c0_37, %c0_38] : memref<1x1x128xf32, #tpu.memory_space<vmem>>, vector<1x1x128xf32>
    tpu.vector_store %arg11[%c0_36, %c0_37, %c0_38], %53 {strides = array<i32>} : memref<1x1x128xf32, #tpu.memory_space<vmem>>, vector<1x1x128xf32>,
    %c0_39 = arith.constant 0 : index
    %c0_40 = arith.constant 0 : index
    %c0_41 = arith.constant 0 : index
    %55 = vector.load %arg12[%c0_39, %c0_40, %c0_41] : memref<1x1x128xf32, #tpu.memory_space<vmem>>, vector<1x1x128xf32>
    %56 = vector.shape_cast %39 : vector<1x128xf32> to vector<1x1x128xf32>
    %57 = arith.minimumf %55, %56 : vector<1x1x128xf32>
    %c0_42 = arith.constant 0 : index
    %c0_43 = arith.constant 0 : index
    %c0_44 = arith.constant 0 : index
    %58 = vector.load %arg12[%c0_42, %c0_43, %c0_44] : memref<1x1x128xf32, #tpu.memory_space<vmem>>, vector<1x1x128xf32>
    tpu.vector_store %arg12[%c0_42, %c0_43, %c0_44], %57 {strides = array<i32>} : memref<1x1x128xf32, #tpu.memory_space<vmem>>, vector<1x1x128xf32>,
    return
  }
  func.func @transform_0(%arg0: i32, %arg1: i32) -> (i32, i32, i32) {
    %c0_i32 = arith.constant 0 : i32
    %c0_i32_0 = arith.constant 0 : i32
    return %arg0, %arg1, %c0_i32 : i32, i32, i32
  }
  func.func @transform_1(%arg0: i32, %arg1: i32) -> (i32, i32, i32) {
    %c0_i32 = arith.constant 0 : i32
    %c0_i32_0 = arith.constant 0 : i32
    %c0_i32_1 = arith.constant 0 : i32
    %c0_i32_2 = arith.constant 0 : i32
    return %c0_i32, %c0_i32_0, %c0_i32_1 : i32, i32, i32
  }
  func.func @transform_2(%arg0: i32, %arg1: i32) -> (i32, i32) {
    %c0_i32 = arith.constant 0 : i32
    %c0_i32_0 = arith.constant 0 : i32
    %c0_i32_1 = arith.constant 0 : i32
    return %c0_i32, %c0_i32_0 : i32, i32
  }
  func.func @transform_3(%arg0: i32, %arg1: i32) -> (i32, i32) {
    %c0_i32 = arith.constant 0 : i32
    %c0_i32_0 = arith.constant 0 : i32
    %c0_i32_1 = arith.constant 0 : i32
    return %c0_i32, %c0_i32_0 : i32, i32
  }
  func.func @transform_4(%arg0: i32, %arg1: i32) -> (i32, i32) {
    %c0_i32 = arith.constant 0 : i32
    %c0_i32_0 = arith.constant 0 : i32
    %c0_i32_1 = arith.constant 0 : i32
    return %c0_i32, %c0_i32_0 : i32, i32
  }
  func.func @transform_5(%arg0: i32, %arg1: i32) -> (i32, i32) {
    %c0_i32 = arith.constant 0 : i32
    %c0_i32_0 = arith.constant 0 : i32
    %c0_i32_1 = arith.constant 0 : i32
    return %c0_i32, %c0_i32_0 : i32, i32
  }
  func.func @transform_6(%arg0: i32, %arg1: i32) -> (i32, i32) {
    %c0_i32 = arith.constant 0 : i32
    %c0_i32_0 = arith.constant 0 : i32
    %c0_i32_1 = arith.constant 0 : i32
    return %c0_i32, %c0_i32_0 : i32, i32
  }
  func.func @transform_7(%arg0: i32, %arg1: i32) -> (i32, i32, i32) {
    %c0_i32 = arith.constant 0 : i32
    %c0_i32_0 = arith.constant 0 : i32
    %c0_i32_1 = arith.constant 0 : i32
    return %arg0, %c0_i32, %c0_i32_0 : i32, i32, i32
  }
  func.func @transform_8(%arg0: i32, %arg1: i32) -> (i32, i32, i32) {
    %c0_i32 = arith.constant 0 : i32
    %c0_i32_0 = arith.constant 0 : i32
    %c0_i32_1 = arith.constant 0 : i32
    return %arg0, %c0_i32, %c0_i32_0 : i32, i32, i32
  }
  func.func @transform_9(%arg0: i32, %arg1: i32) -> (i32, i32, i32) {
    %c0_i32 = arith.constant 0 : i32
    %c0_i32_0 = arith.constant 0 : i32
    %c0_i32_1 = arith.constant 0 : i32
    return %arg0, %c0_i32, %c0_i32_0 : i32, i32, i32
  }
  func.func @transform_10(%arg0: i32, %arg1: i32) -> (i32, i32, i32) {
    %c0_i32 = arith.constant 0 : i32
    %c0_i32_0 = arith.constant 0 : i32
    %c0_i32_1 = arith.constant 0 : i32
    return %arg0, %c0_i32, %c0_i32_0 : i32, i32, i32
  }
}

module attributes {stable_mosaic.version = 11 : i64} {
  func.func @_stats_pass1_kernel(%arg0: i32, %arg1: i32, %arg2: memref<1x64x2xf32, #tpu.memory_space<vmem>>, %arg3: memref<1x2x128xf32, #tpu.memory_space<vmem>>, %arg4: memref<1x128xf32, #tpu.memory_space<vmem>>, %arg5: memref<1x1x128xf32, #tpu.memory_space<vmem>>, %arg6: memref<1x1x128xf32, #tpu.memory_space<vmem>>) attributes {dimension_semantics = [#tpu.dimension_semantics<parallel>, #tpu.dimension_semantics<arbitrary>], iteration_bounds = array<i64: 2, 1>, scalar_prefetch = 0 : i64, scratch_operands = 0 : i64, tpu.core_type = #tpu.core_type<tc>, window_params = [{transform_indices = @transform_0, window_bounds = array<i64: 1, 64, 2>}, {pipeline_mode = #tpu.pipeline_mode<synchronous>, transform_indices = @transform_1, window_bounds = array<i64: 1, 2, 128>}, {pipeline_mode = #tpu.pipeline_mode<synchronous>, transform_indices = @transform_2, window_bounds = array<i64: 1, 128>}, {transform_indices = @transform_3, window_bounds = array<i64: 1, 1, 128>}, {transform_indices = @transform_4, window_bounds = array<i64: 1, 1, 128>}]} {
    %c0 = arith.constant 0 : index
    %c0_0 = arith.constant 0 : index
    %c0_1 = arith.constant 0 : index
    %0 = vector.load %arg2[%c0, %c0_0, %c0_1] : memref<1x64x2xf32, #tpu.memory_space<vmem>>, vector<1x64x2xf32>
    %1 = vector.shape_cast %0 : vector<1x64x2xf32> to vector<64x2xf32>
    %c0_2 = arith.constant 0 : index
    %c0_3 = arith.constant 0 : index
    %c0_4 = arith.constant 0 : index
    %2 = vector.load %arg3[%c0_2, %c0_3, %c0_4] : memref<1x2x128xf32, #tpu.memory_space<vmem>>, vector<1x2x128xf32>
    %3 = vector.shape_cast %2 : vector<1x2x128xf32> to vector<2x128xf32>
    %c0_5 = arith.constant 0 : index
    %c0_6 = arith.constant 0 : index
    %4 = vector.load %arg4[%c0_5, %c0_6] : memref<1x128xf32, #tpu.memory_space<vmem>>, vector<1x128xf32>
    %5 = vector.extract_strided_slice %1 {offsets = [0, 0], sizes = [64, 1], strides = [1, 1]} : vector<64x2xf32> to vector<64x1xf32>
    %6 = vector.extract_strided_slice %3 {offsets = [0, 0], sizes = [1, 128], strides = [1, 1]} : vector<2x128xf32> to vector<1x128xf32>
    %7 = vector.broadcast %5 : vector<64x1xf32> to vector<64x128xf32>
    %8 = vector.broadcast %6 : vector<1x128xf32> to vector<64x128xf32>
    %9 = arith.mulf %7, %8 : vector<64x128xf32>
    %10 = vector.broadcast %4 : vector<1x128xf32> to vector<64x128xf32>
    %11 = arith.addf %9, %10 : vector<64x128xf32>
    %12 = vector.extract_strided_slice %1 {offsets = [0, 1], sizes = [64, 1], strides = [1, 1]} : vector<64x2xf32> to vector<64x1xf32>
    %13 = vector.extract_strided_slice %3 {offsets = [1, 0], sizes = [1, 128], strides = [1, 1]} : vector<2x128xf32> to vector<1x128xf32>
    %14 = vector.broadcast %12 : vector<64x1xf32> to vector<64x128xf32>
    %15 = vector.broadcast %13 : vector<1x128xf32> to vector<64x128xf32>
    %16 = arith.mulf %14, %15 : vector<64x128xf32>
    %17 = arith.addf %11, %16 : vector<64x128xf32>
    %cst = arith.constant dense<0.000000e+00> : vector<128xf32>
    %18 = vector.multi_reduction <add>, %17, %cst [0] : vector<64x128xf32> to vector<128xf32>
    %19 = vector.shape_cast %18 : vector<128xf32> to vector<1x128xf32>
    %20 = arith.mulf %17, %17 : vector<64x128xf32>
    %cst_7 = arith.constant dense<0.000000e+00> : vector<128xf32>
    %21 = vector.multi_reduction <add>, %20, %cst_7 [0] : vector<64x128xf32> to vector<128xf32>
    %22 = vector.shape_cast %21 : vector<128xf32> to vector<1x128xf32>
    %c0_i32 = arith.constant 0 : i32
    %23 = arith.cmpi eq, %arg1, %c0_i32 : i32
    %24 = arith.extui %23 : i1 to i32
    %c0_i32_8 = arith.constant 0 : i32
    %25 = arith.cmpi ne, %24, %c0_i32_8 : i32
    scf.if %25 {
      %cst_21 = arith.constant 0.000000e+00 : f32
      %34 = vector.broadcast %cst_21 : f32 to vector<1x1x128xf32>
      %c0_22 = arith.constant 0 : index
      %c0_23 = arith.constant 0 : index
      %c0_24 = arith.constant 0 : index
      %35 = vector.load %arg5[%c0_22, %c0_23, %c0_24] : memref<1x1x128xf32, #tpu.memory_space<vmem>>, vector<1x1x128xf32>
      tpu.vector_store %arg5[%c0_22, %c0_23, %c0_24], %34 {strides = array<i32>} : memref<1x1x128xf32, #tpu.memory_space<vmem>>, vector<1x1x128xf32>,
      %cst_25 = arith.constant 0.000000e+00 : f32
      %36 = vector.broadcast %cst_25 : f32 to vector<1x1x128xf32>
      %c0_26 = arith.constant 0 : index
      %c0_27 = arith.constant 0 : index
      %c0_28 = arith.constant 0 : index
      %37 = vector.load %arg6[%c0_26, %c0_27, %c0_28] : memref<1x1x128xf32, #tpu.memory_space<vmem>>, vector<1x1x128xf32>
      tpu.vector_store %arg6[%c0_26, %c0_27, %c0_28], %36 {strides = array<i32>} : memref<1x1x128xf32, #tpu.memory_space<vmem>>, vector<1x1x128xf32>,
    } else {
    }
    %c0_9 = arith.constant 0 : index
    %c0_10 = arith.constant 0 : index
    %c0_11 = arith.constant 0 : index
    %26 = vector.load %arg5[%c0_9, %c0_10, %c0_11] : memref<1x1x128xf32, #tpu.memory_space<vmem>>, vector<1x1x128xf32>
    %27 = vector.shape_cast %19 : vector<1x128xf32> to vector<1x1x128xf32>
    %28 = arith.addf %26, %27 : vector<1x1x128xf32>
    %c0_12 = arith.constant 0 : index
    %c0_13 = arith.constant 0 : index
    %c0_14 = arith.constant 0 : index
    %29 = vector.load %arg5[%c0_12, %c0_13, %c0_14] : memref<1x1x128xf32, #tpu.memory_space<vmem>>, vector<1x1x128xf32>
    tpu.vector_store %arg5[%c0_12, %c0_13, %c0_14], %28 {strides = array<i32>} : memref<1x1x128xf32, #tpu.memory_space<vmem>>, vector<1x1x128xf32>,
    %c0_15 = arith.constant 0 : index
    %c0_16 = arith.constant 0 : index
    %c0_17 = arith.constant 0 : index
    %30 = vector.load %arg6[%c0_15, %c0_16, %c0_17] : memref<1x1x128xf32, #tpu.memory_space<vmem>>, vector<1x1x128xf32>
    %31 = vector.shape_cast %22 : vector<1x128xf32> to vector<1x1x128xf32>
    %32 = arith.addf %30, %31 : vector<1x1x128xf32>
    %c0_18 = arith.constant 0 : index
    %c0_19 = arith.constant 0 : index
    %c0_20 = arith.constant 0 : index
    %33 = vector.load %arg6[%c0_18, %c0_19, %c0_20] : memref<1x1x128xf32, #tpu.memory_space<vmem>>, vector<1x1x128xf32>
    tpu.vector_store %arg6[%c0_18, %c0_19, %c0_20], %32 {strides = array<i32>} : memref<1x1x128xf32, #tpu.memory_space<vmem>>, vector<1x1x128xf32>,
    return
  }
  func.func @transform_0(%arg0: i32, %arg1: i32) -> (i32, i32, i32) {
    %c0_i32 = arith.constant 0 : i32
    %c0_i32_0 = arith.constant 0 : i32
    return %arg0, %arg1, %c0_i32 : i32, i32, i32
  }
  func.func @transform_1(%arg0: i32, %arg1: i32) -> (i32, i32, i32) {
    %c0_i32 = arith.constant 0 : i32
    %c0_i32_0 = arith.constant 0 : i32
    %c0_i32_1 = arith.constant 0 : i32
    %c0_i32_2 = arith.constant 0 : i32
    return %c0_i32, %c0_i32_0, %c0_i32_1 : i32, i32, i32
  }
  func.func @transform_2(%arg0: i32, %arg1: i32) -> (i32, i32) {
    %c0_i32 = arith.constant 0 : i32
    %c0_i32_0 = arith.constant 0 : i32
    %c0_i32_1 = arith.constant 0 : i32
    return %c0_i32, %c0_i32_0 : i32, i32
  }
  func.func @transform_3(%arg0: i32, %arg1: i32) -> (i32, i32, i32) {
    %c0_i32 = arith.constant 0 : i32
    %c0_i32_0 = arith.constant 0 : i32
    %c0_i32_1 = arith.constant 0 : i32
    return %arg0, %c0_i32, %c0_i32_0 : i32, i32, i32
  }
  func.func @transform_4(%arg0: i32, %arg1: i32) -> (i32, i32, i32) {
    %c0_i32 = arith.constant 0 : i32
    %c0_i32_0 = arith.constant 0 : i32
    %c0_i32_1 = arith.constant 0 : i32
    return %arg0, %c0_i32, %c0_i32_0 : i32, i32, i32
  }
}

module attributes {stable_mosaic.version = 11 : i64} {
  func.func @_stn_head_kernel(%arg0: i32, %arg1: memref<2x128xf32, #tpu.memory_space<vmem>>, %arg2: memref<2x128xf32, #tpu.memory_space<vmem>>, %arg3: memref<1x128xf32, #tpu.memory_space<vmem>>, %arg4: memref<1x128xf32, #tpu.memory_space<vmem>>, %arg5: memref<128x64xf32, #tpu.memory_space<vmem>>, %arg6: memref<1x64xf32, #tpu.memory_space<vmem>>, %arg7: memref<1x64xf32, #tpu.memory_space<vmem>>, %arg8: memref<1x64xf32, #tpu.memory_space<vmem>>, %arg9: memref<64x4xf32, #tpu.memory_space<vmem>>, %arg10: memref<1x4xf32, #tpu.memory_space<vmem>>, %arg11: memref<1x4xf32, #tpu.memory_space<vmem>>, %arg12: memref<2x4xf32, #tpu.memory_space<vmem>>) attributes {dimension_semantics = [#tpu.dimension_semantics<arbitrary>], iteration_bounds = array<i64: 1>, scalar_prefetch = 0 : i64, scratch_operands = 0 : i64, tpu.core_type = #tpu.core_type<tc>, window_params = [{pipeline_mode = #tpu.pipeline_mode<synchronous>, transform_indices = @transform_0, window_bounds = array<i64: 2, 128>}, {pipeline_mode = #tpu.pipeline_mode<synchronous>, transform_indices = @transform_1, window_bounds = array<i64: 2, 128>}, {pipeline_mode = #tpu.pipeline_mode<synchronous>, transform_indices = @transform_2, window_bounds = array<i64: 1, 128>}, {pipeline_mode = #tpu.pipeline_mode<synchronous>, transform_indices = @transform_3, window_bounds = array<i64: 1, 128>}, {pipeline_mode = #tpu.pipeline_mode<synchronous>, transform_indices = @transform_4, window_bounds = array<i64: 128, 64>}, {pipeline_mode = #tpu.pipeline_mode<synchronous>, transform_indices = @transform_5, window_bounds = array<i64: 1, 64>}, {pipeline_mode = #tpu.pipeline_mode<synchronous>, transform_indices = @transform_6, window_bounds = array<i64: 1, 64>}, {pipeline_mode = #tpu.pipeline_mode<synchronous>, transform_indices = @transform_7, window_bounds = array<i64: 1, 64>}, {pipeline_mode = #tpu.pipeline_mode<synchronous>, transform_indices = @transform_8, window_bounds = array<i64: 64, 4>}, {pipeline_mode = #tpu.pipeline_mode<synchronous>, transform_indices = @transform_9, window_bounds = array<i64: 1, 4>}, {pipeline_mode = #tpu.pipeline_mode<synchronous>, transform_indices = @transform_10, window_bounds = array<i64: 1, 4>}, {pipeline_mode = #tpu.pipeline_mode<synchronous>, transform_indices = @transform_11, window_bounds = array<i64: 2, 4>}]} {
    %c0 = arith.constant 0 : index
    %c0_0 = arith.constant 0 : index
    %0 = vector.load %arg3[%c0, %c0_0] : memref<1x128xf32, #tpu.memory_space<vmem>>, vector<1x128xf32>
    %cst = arith.constant 0.000000e+00 : f32
    %1 = vector.broadcast %cst : f32 to vector<1x128xf32>
    %2 = arith.cmpf oge, %0, %1 : vector<1x128xf32>
    %c0_1 = arith.constant 0 : index
    %c0_2 = arith.constant 0 : index
    %3 = vector.load %arg1[%c0_1, %c0_2] : memref<2x128xf32, #tpu.memory_space<vmem>>, vector<2x128xf32>
    %4 = vector.broadcast %0 : vector<1x128xf32> to vector<2x128xf32>
    %5 = arith.mulf %4, %3 : vector<2x128xf32>
    %c0_3 = arith.constant 0 : index
    %c0_4 = arith.constant 0 : index
    %6 = vector.load %arg2[%c0_3, %c0_4] : memref<2x128xf32, #tpu.memory_space<vmem>>, vector<2x128xf32>
    %7 = vector.broadcast %0 : vector<1x128xf32> to vector<2x128xf32>
    %8 = arith.mulf %7, %6 : vector<2x128xf32>
    %9 = vector.shape_cast %2 : vector<1x128xi1> to vector<1x128xi1>
    %10 = vector.broadcast %9 : vector<1x128xi1> to vector<2x128xi1>
    %11 = arith.select %10, %5, %8 : vector<2x128xi1>, vector<2x128xf32>
    %c0_5 = arith.constant 0 : index
    %c0_6 = arith.constant 0 : index
    %12 = vector.load %arg4[%c0_5, %c0_6] : memref<1x128xf32, #tpu.memory_space<vmem>>, vector<1x128xf32>
    %13 = vector.broadcast %12 : vector<1x128xf32> to vector<2x128xf32>
    %14 = arith.addf %11, %13 : vector<2x128xf32>
    %cst_7 = arith.constant 0.000000e+00 : f32
    %15 = vector.broadcast %cst_7 : f32 to vector<2x128xf32>
    %16 = arith.maximumf %14, %15 : vector<2x128xf32>
    %c0_8 = arith.constant 0 : index
    %c0_9 = arith.constant 0 : index
    %17 = vector.load %arg5[%c0_8, %c0_9] : memref<128x64xf32, #tpu.memory_space<vmem>>, vector<128x64xf32>
    %cst_10 = arith.constant dense<0.000000e+00> : vector<2x64xf32>
    %18 = tpu.matmul %16, %17, %cst_10 {dimension_numbers = #tpu.dot_dimension_numbers<[1], [0], [0], [1], [0, 0, 1, 1], [], []>} : vector<2x128xf32>, vector<128x64xf32>, vector<2x64xf32> -> vector<2x64xf32>
    %c0_11 = arith.constant 0 : index
    %c0_12 = arith.constant 0 : index
    %19 = vector.load %arg6[%c0_11, %c0_12] : memref<1x64xf32, #tpu.memory_space<vmem>>, vector<1x64xf32>
    %20 = vector.broadcast %19 : vector<1x64xf32> to vector<2x64xf32>
    %21 = arith.addf %18, %20 : vector<2x64xf32>
    %cst_13 = arith.constant dense<0.000000e+00> : vector<64xf32>
    %22 = vector.multi_reduction <add>, %21, %cst_13 [0] : vector<2x64xf32> to vector<64xf32>
    %23 = vector.shape_cast %22 : vector<64xf32> to vector<1x64xf32>
    %cst_14 = arith.constant 2.000000e+00 : f32
    %24 = vector.broadcast %cst_14 : f32 to vector<1x64xf32>
    %25 = arith.divf %23, %24 : vector<1x64xf32>
    %26 = arith.mulf %21, %21 : vector<2x64xf32>
    %cst_15 = arith.constant dense<0.000000e+00> : vector<64xf32>
    %27 = vector.multi_reduction <add>, %26, %cst_15 [0] : vector<2x64xf32> to vector<64xf32>
    %28 = vector.shape_cast %27 : vector<64xf32> to vector<1x64xf32>
    %cst_16 = arith.constant 2.000000e+00 : f32
    %29 = vector.broadcast %cst_16 : f32 to vector<1x64xf32>
    %30 = arith.divf %28, %29 : vector<1x64xf32>
    %31 = arith.mulf %25, %25 : vector<1x64xf32>
    %32 = arith.subf %30, %31 : vector<1x64xf32>
    %cst_17 = arith.constant 0.000000e+00 : f32
    %33 = vector.broadcast %cst_17 : f32 to vector<1x64xf32>
    %34 = arith.maximumf %32, %33 : vector<1x64xf32>
    %35 = vector.broadcast %25 : vector<1x64xf32> to vector<2x64xf32>
    %36 = arith.subf %21, %35 : vector<2x64xf32>
    %cst_18 = arith.constant 9.99999974E-6 : f32
    %37 = vector.broadcast %cst_18 : f32 to vector<1x64xf32>
    %38 = arith.addf %34, %37 : vector<1x64xf32>
    %39 = math.rsqrt %38 : vector<1x64xf32>
    %40 = vector.broadcast %39 : vector<1x64xf32> to vector<2x64xf32>
    %41 = arith.mulf %36, %40 : vector<2x64xf32>
    %c0_19 = arith.constant 0 : index
    %c0_20 = arith.constant 0 : index
    %42 = vector.load %arg7[%c0_19, %c0_20] : memref<1x64xf32, #tpu.memory_space<vmem>>, vector<1x64xf32>
    %43 = vector.broadcast %42 : vector<1x64xf32> to vector<2x64xf32>
    %44 = arith.mulf %41, %43 : vector<2x64xf32>
    %c0_21 = arith.constant 0 : index
    %c0_22 = arith.constant 0 : index
    %45 = vector.load %arg8[%c0_21, %c0_22] : memref<1x64xf32, #tpu.memory_space<vmem>>, vector<1x64xf32>
    %46 = vector.broadcast %45 : vector<1x64xf32> to vector<2x64xf32>
    %47 = arith.addf %44, %46 : vector<2x64xf32>
    %cst_23 = arith.constant 0.000000e+00 : f32
    %48 = vector.broadcast %cst_23 : f32 to vector<2x64xf32>
    %49 = arith.maximumf %47, %48 : vector<2x64xf32>
    %c0_24 = arith.constant 0 : index
    %c0_25 = arith.constant 0 : index
    %50 = vector.load %arg9[%c0_24, %c0_25] : memref<64x4xf32, #tpu.memory_space<vmem>>, vector<64x4xf32>
    %cst_26 = arith.constant dense<0.000000e+00> : vector<2x4xf32>
    %51 = tpu.matmul %49, %50, %cst_26 {dimension_numbers = #tpu.dot_dimension_numbers<[1], [0], [0], [1], [0, 0, 1, 1], [], []>} : vector<2x64xf32>, vector<64x4xf32>, vector<2x4xf32> -> vector<2x4xf32>
    %c0_27 = arith.constant 0 : index
    %c0_28 = arith.constant 0 : index
    %52 = vector.load %arg10[%c0_27, %c0_28] : memref<1x4xf32, #tpu.memory_space<vmem>>, vector<1x4xf32>
    %53 = vector.broadcast %52 : vector<1x4xf32> to vector<2x4xf32>
    %54 = arith.addf %51, %53 : vector<2x4xf32>
    %c0_29 = arith.constant 0 : index
    %c0_30 = arith.constant 0 : index
    %55 = vector.load %arg11[%c0_29, %c0_30] : memref<1x4xf32, #tpu.memory_space<vmem>>, vector<1x4xf32>
    %56 = vector.broadcast %55 : vector<1x4xf32> to vector<2x4xf32>
    %57 = arith.addf %54, %56 : vector<2x4xf32>
    %c0_31 = arith.constant 0 : index
    %c0_32 = arith.constant 0 : index
    %58 = vector.load %arg12[%c0_31, %c0_32] : memref<2x4xf32, #tpu.memory_space<vmem>>, vector<2x4xf32>
    tpu.vector_store %arg12[%c0_31, %c0_32], %57 {strides = array<i32>} : memref<2x4xf32, #tpu.memory_space<vmem>>, vector<2x4xf32>,
    return
  }
  func.func @transform_0(%arg0: i32) -> (i32, i32) {
    %c0_i32 = arith.constant 0 : i32
    %c0_i32_0 = arith.constant 0 : i32
    %c0_i32_1 = arith.constant 0 : i32
    return %c0_i32, %c0_i32_0 : i32, i32
  }
  func.func @transform_1(%arg0: i32) -> (i32, i32) {
    %c0_i32 = arith.constant 0 : i32
    %c0_i32_0 = arith.constant 0 : i32
    %c0_i32_1 = arith.constant 0 : i32
    return %c0_i32, %c0_i32_0 : i32, i32
  }
  func.func @transform_2(%arg0: i32) -> (i32, i32) {
    %c0_i32 = arith.constant 0 : i32
    %c0_i32_0 = arith.constant 0 : i32
    %c0_i32_1 = arith.constant 0 : i32
    return %c0_i32, %c0_i32_0 : i32, i32
  }
  func.func @transform_3(%arg0: i32) -> (i32, i32) {
    %c0_i32 = arith.constant 0 : i32
    %c0_i32_0 = arith.constant 0 : i32
    %c0_i32_1 = arith.constant 0 : i32
    return %c0_i32, %c0_i32_0 : i32, i32
  }
  func.func @transform_4(%arg0: i32) -> (i32, i32) {
    %c0_i32 = arith.constant 0 : i32
    %c0_i32_0 = arith.constant 0 : i32
    %c0_i32_1 = arith.constant 0 : i32
    return %c0_i32, %c0_i32_0 : i32, i32
  }
  func.func @transform_5(%arg0: i32) -> (i32, i32) {
    %c0_i32 = arith.constant 0 : i32
    %c0_i32_0 = arith.constant 0 : i32
    %c0_i32_1 = arith.constant 0 : i32
    return %c0_i32, %c0_i32_0 : i32, i32
  }
  func.func @transform_6(%arg0: i32) -> (i32, i32) {
    %c0_i32 = arith.constant 0 : i32
    %c0_i32_0 = arith.constant 0 : i32
    %c0_i32_1 = arith.constant 0 : i32
    return %c0_i32, %c0_i32_0 : i32, i32
  }
  func.func @transform_7(%arg0: i32) -> (i32, i32) {
    %c0_i32 = arith.constant 0 : i32
    %c0_i32_0 = arith.constant 0 : i32
    %c0_i32_1 = arith.constant 0 : i32
    return %c0_i32, %c0_i32_0 : i32, i32
  }
  func.func @transform_8(%arg0: i32) -> (i32, i32) {
    %c0_i32 = arith.constant 0 : i32
    %c0_i32_0 = arith.constant 0 : i32
    %c0_i32_1 = arith.constant 0 : i32
    return %c0_i32, %c0_i32_0 : i32, i32
  }
  func.func @transform_9(%arg0: i32) -> (i32, i32) {
    %c0_i32 = arith.constant 0 : i32
    %c0_i32_0 = arith.constant 0 : i32
    %c0_i32_1 = arith.constant 0 : i32
    return %c0_i32, %c0_i32_0 : i32, i32
  }
  func.func @transform_10(%arg0: i32) -> (i32, i32) {
    %c0_i32 = arith.constant 0 : i32
    %c0_i32_0 = arith.constant 0 : i32
    %c0_i32_1 = arith.constant 0 : i32
    return %c0_i32, %c0_i32_0 : i32, i32
  }
  func.func @transform_11(%arg0: i32) -> (i32, i32) {
    %c0_i32 = arith.constant 0 : i32
    %c0_i32_0 = arith.constant 0 : i32
    %c0_i32_1 = arith.constant 0 : i32
    return %c0_i32, %c0_i32_0 : i32, i32
  }
}

module attributes {stable_mosaic.version = 11 : i64} {
  func.func @_stats_pass1_kernel(%arg0: i32, %arg1: i32, %arg2: memref<1x64x2xf32, #tpu.memory_space<vmem>>, %arg3: memref<1x2x64xf32, #tpu.memory_space<vmem>>, %arg4: memref<1x64xf32, #tpu.memory_space<vmem>>, %arg5: memref<1x1x64xf32, #tpu.memory_space<vmem>>, %arg6: memref<1x1x64xf32, #tpu.memory_space<vmem>>) attributes {dimension_semantics = [#tpu.dimension_semantics<parallel>, #tpu.dimension_semantics<arbitrary>], iteration_bounds = array<i64: 2, 1>, scalar_prefetch = 0 : i64, scratch_operands = 0 : i64, tpu.core_type = #tpu.core_type<tc>, window_params = [{transform_indices = @transform_0, window_bounds = array<i64: 1, 64, 2>}, {transform_indices = @transform_1, window_bounds = array<i64: 1, 2, 64>}, {pipeline_mode = #tpu.pipeline_mode<synchronous>, transform_indices = @transform_2, window_bounds = array<i64: 1, 64>}, {transform_indices = @transform_3, window_bounds = array<i64: 1, 1, 64>}, {transform_indices = @transform_4, window_bounds = array<i64: 1, 1, 64>}]} {
    %c0 = arith.constant 0 : index
    %c0_0 = arith.constant 0 : index
    %c0_1 = arith.constant 0 : index
    %0 = vector.load %arg2[%c0, %c0_0, %c0_1] : memref<1x64x2xf32, #tpu.memory_space<vmem>>, vector<1x64x2xf32>
    %1 = vector.shape_cast %0 : vector<1x64x2xf32> to vector<64x2xf32>
    %c0_2 = arith.constant 0 : index
    %c0_3 = arith.constant 0 : index
    %c0_4 = arith.constant 0 : index
    %2 = vector.load %arg3[%c0_2, %c0_3, %c0_4] : memref<1x2x64xf32, #tpu.memory_space<vmem>>, vector<1x2x64xf32>
    %3 = vector.shape_cast %2 : vector<1x2x64xf32> to vector<2x64xf32>
    %c0_5 = arith.constant 0 : index
    %c0_6 = arith.constant 0 : index
    %4 = vector.load %arg4[%c0_5, %c0_6] : memref<1x64xf32, #tpu.memory_space<vmem>>, vector<1x64xf32>
    %5 = vector.extract_strided_slice %1 {offsets = [0, 0], sizes = [64, 1], strides = [1, 1]} : vector<64x2xf32> to vector<64x1xf32>
    %6 = vector.extract_strided_slice %3 {offsets = [0, 0], sizes = [1, 64], strides = [1, 1]} : vector<2x64xf32> to vector<1x64xf32>
    %7 = vector.broadcast %5 : vector<64x1xf32> to vector<64x64xf32>
    %8 = vector.broadcast %6 : vector<1x64xf32> to vector<64x64xf32>
    %9 = arith.mulf %7, %8 : vector<64x64xf32>
    %10 = vector.broadcast %4 : vector<1x64xf32> to vector<64x64xf32>
    %11 = arith.addf %9, %10 : vector<64x64xf32>
    %12 = vector.extract_strided_slice %1 {offsets = [0, 1], sizes = [64, 1], strides = [1, 1]} : vector<64x2xf32> to vector<64x1xf32>
    %13 = vector.extract_strided_slice %3 {offsets = [1, 0], sizes = [1, 64], strides = [1, 1]} : vector<2x64xf32> to vector<1x64xf32>
    %14 = vector.broadcast %12 : vector<64x1xf32> to vector<64x64xf32>
    %15 = vector.broadcast %13 : vector<1x64xf32> to vector<64x64xf32>
    %16 = arith.mulf %14, %15 : vector<64x64xf32>
    %17 = arith.addf %11, %16 : vector<64x64xf32>
    %cst = arith.constant dense<0.000000e+00> : vector<64xf32>
    %18 = vector.multi_reduction <add>, %17, %cst [0] : vector<64x64xf32> to vector<64xf32>
    %19 = vector.shape_cast %18 : vector<64xf32> to vector<1x64xf32>
    %20 = arith.mulf %17, %17 : vector<64x64xf32>
    %cst_7 = arith.constant dense<0.000000e+00> : vector<64xf32>
    %21 = vector.multi_reduction <add>, %20, %cst_7 [0] : vector<64x64xf32> to vector<64xf32>
    %22 = vector.shape_cast %21 : vector<64xf32> to vector<1x64xf32>
    %c0_i32 = arith.constant 0 : i32
    %23 = arith.cmpi eq, %arg1, %c0_i32 : i32
    %24 = arith.extui %23 : i1 to i32
    %c0_i32_8 = arith.constant 0 : i32
    %25 = arith.cmpi ne, %24, %c0_i32_8 : i32
    scf.if %25 {
      %cst_21 = arith.constant 0.000000e+00 : f32
      %34 = vector.broadcast %cst_21 : f32 to vector<1x1x64xf32>
      %c0_22 = arith.constant 0 : index
      %c0_23 = arith.constant 0 : index
      %c0_24 = arith.constant 0 : index
      %35 = vector.load %arg5[%c0_22, %c0_23, %c0_24] : memref<1x1x64xf32, #tpu.memory_space<vmem>>, vector<1x1x64xf32>
      tpu.vector_store %arg5[%c0_22, %c0_23, %c0_24], %34 {strides = array<i32>} : memref<1x1x64xf32, #tpu.memory_space<vmem>>, vector<1x1x64xf32>,
      %cst_25 = arith.constant 0.000000e+00 : f32
      %36 = vector.broadcast %cst_25 : f32 to vector<1x1x64xf32>
      %c0_26 = arith.constant 0 : index
      %c0_27 = arith.constant 0 : index
      %c0_28 = arith.constant 0 : index
      %37 = vector.load %arg6[%c0_26, %c0_27, %c0_28] : memref<1x1x64xf32, #tpu.memory_space<vmem>>, vector<1x1x64xf32>
      tpu.vector_store %arg6[%c0_26, %c0_27, %c0_28], %36 {strides = array<i32>} : memref<1x1x64xf32, #tpu.memory_space<vmem>>, vector<1x1x64xf32>,
    } else {
    }
    %c0_9 = arith.constant 0 : index
    %c0_10 = arith.constant 0 : index
    %c0_11 = arith.constant 0 : index
    %26 = vector.load %arg5[%c0_9, %c0_10, %c0_11] : memref<1x1x64xf32, #tpu.memory_space<vmem>>, vector<1x1x64xf32>
    %27 = vector.shape_cast %19 : vector<1x64xf32> to vector<1x1x64xf32>
    %28 = arith.addf %26, %27 : vector<1x1x64xf32>
    %c0_12 = arith.constant 0 : index
    %c0_13 = arith.constant 0 : index
    %c0_14 = arith.constant 0 : index
    %29 = vector.load %arg5[%c0_12, %c0_13, %c0_14] : memref<1x1x64xf32, #tpu.memory_space<vmem>>, vector<1x1x64xf32>
    tpu.vector_store %arg5[%c0_12, %c0_13, %c0_14], %28 {strides = array<i32>} : memref<1x1x64xf32, #tpu.memory_space<vmem>>, vector<1x1x64xf32>,
    %c0_15 = arith.constant 0 : index
    %c0_16 = arith.constant 0 : index
    %c0_17 = arith.constant 0 : index
    %30 = vector.load %arg6[%c0_15, %c0_16, %c0_17] : memref<1x1x64xf32, #tpu.memory_space<vmem>>, vector<1x1x64xf32>
    %31 = vector.shape_cast %22 : vector<1x64xf32> to vector<1x1x64xf32>
    %32 = arith.addf %30, %31 : vector<1x1x64xf32>
    %c0_18 = arith.constant 0 : index
    %c0_19 = arith.constant 0 : index
    %c0_20 = arith.constant 0 : index
    %33 = vector.load %arg6[%c0_18, %c0_19, %c0_20] : memref<1x1x64xf32, #tpu.memory_space<vmem>>, vector<1x1x64xf32>
    tpu.vector_store %arg6[%c0_18, %c0_19, %c0_20], %32 {strides = array<i32>} : memref<1x1x64xf32, #tpu.memory_space<vmem>>, vector<1x1x64xf32>,
    return
  }
  func.func @transform_0(%arg0: i32, %arg1: i32) -> (i32, i32, i32) {
    %c0_i32 = arith.constant 0 : i32
    %c0_i32_0 = arith.constant 0 : i32
    return %arg0, %arg1, %c0_i32 : i32, i32, i32
  }
  func.func @transform_1(%arg0: i32, %arg1: i32) -> (i32, i32, i32) {
    %c0_i32 = arith.constant 0 : i32
    %c0_i32_0 = arith.constant 0 : i32
    %c0_i32_1 = arith.constant 0 : i32
    return %arg0, %c0_i32, %c0_i32_0 : i32, i32, i32
  }
  func.func @transform_2(%arg0: i32, %arg1: i32) -> (i32, i32) {
    %c0_i32 = arith.constant 0 : i32
    %c0_i32_0 = arith.constant 0 : i32
    %c0_i32_1 = arith.constant 0 : i32
    return %c0_i32, %c0_i32_0 : i32, i32
  }
  func.func @transform_3(%arg0: i32, %arg1: i32) -> (i32, i32, i32) {
    %c0_i32 = arith.constant 0 : i32
    %c0_i32_0 = arith.constant 0 : i32
    %c0_i32_1 = arith.constant 0 : i32
    return %arg0, %c0_i32, %c0_i32_0 : i32, i32, i32
  }
  func.func @transform_4(%arg0: i32, %arg1: i32) -> (i32, i32, i32) {
    %c0_i32 = arith.constant 0 : i32
    %c0_i32_0 = arith.constant 0 : i32
    %c0_i32_1 = arith.constant 0 : i32
    return %arg0, %c0_i32, %c0_i32_0 : i32, i32, i32
  }
}

module attributes {stable_mosaic.version = 11 : i64} {
  func.func @_fused_pair_pass2_kernel(%arg0: i32, %arg1: i32, %arg2: memref<1x64x2xf32, #tpu.memory_space<vmem>>, %arg3: memref<1x2x64xf32, #tpu.memory_space<vmem>>, %arg4: memref<1x64xf32, #tpu.memory_space<vmem>>, %arg5: memref<1x64xf32, #tpu.memory_space<vmem>>, %arg6: memref<1x64xf32, #tpu.memory_space<vmem>>, %arg7: memref<64x128xf32, #tpu.memory_space<vmem>>, %arg8: memref<1x128xf32, #tpu.memory_space<vmem>>, %arg9: memref<1x1x128xf32, #tpu.memory_space<vmem>>, %arg10: memref<1x1x128xf32, #tpu.memory_space<vmem>>, %arg11: memref<1x1x128xf32, #tpu.memory_space<vmem>>, %arg12: memref<1x1x128xf32, #tpu.memory_space<vmem>>) attributes {dimension_semantics = [#tpu.dimension_semantics<parallel>, #tpu.dimension_semantics<arbitrary>], iteration_bounds = array<i64: 2, 1>, scalar_prefetch = 0 : i64, scratch_operands = 0 : i64, tpu.core_type = #tpu.core_type<tc>, window_params = [{transform_indices = @transform_0, window_bounds = array<i64: 1, 64, 2>}, {transform_indices = @transform_1, window_bounds = array<i64: 1, 2, 64>}, {pipeline_mode = #tpu.pipeline_mode<synchronous>, transform_indices = @transform_2, window_bounds = array<i64: 1, 64>}, {pipeline_mode = #tpu.pipeline_mode<synchronous>, transform_indices = @transform_3, window_bounds = array<i64: 1, 64>}, {pipeline_mode = #tpu.pipeline_mode<synchronous>, transform_indices = @transform_4, window_bounds = array<i64: 1, 64>}, {pipeline_mode = #tpu.pipeline_mode<synchronous>, transform_indices = @transform_5, window_bounds = array<i64: 64, 128>}, {pipeline_mode = #tpu.pipeline_mode<synchronous>, transform_indices = @transform_6, window_bounds = array<i64: 1, 128>}, {transform_indices = @transform_7, window_bounds = array<i64: 1, 1, 128>}, {transform_indices = @transform_8, window_bounds = array<i64: 1, 1, 128>}, {transform_indices = @transform_9, window_bounds = array<i64: 1, 1, 128>}, {transform_indices = @transform_10, window_bounds = array<i64: 1, 1, 128>}]} {
    %c0 = arith.constant 0 : index
    %c0_0 = arith.constant 0 : index
    %c0_1 = arith.constant 0 : index
    %0 = vector.load %arg2[%c0, %c0_0, %c0_1] : memref<1x64x2xf32, #tpu.memory_space<vmem>>, vector<1x64x2xf32>
    %1 = vector.shape_cast %0 : vector<1x64x2xf32> to vector<64x2xf32>
    %c0_2 = arith.constant 0 : index
    %c0_3 = arith.constant 0 : index
    %c0_4 = arith.constant 0 : index
    %2 = vector.load %arg3[%c0_2, %c0_3, %c0_4] : memref<1x2x64xf32, #tpu.memory_space<vmem>>, vector<1x2x64xf32>
    %3 = vector.shape_cast %2 : vector<1x2x64xf32> to vector<2x64xf32>
    %c0_5 = arith.constant 0 : index
    %c0_6 = arith.constant 0 : index
    %4 = vector.load %arg4[%c0_5, %c0_6] : memref<1x64xf32, #tpu.memory_space<vmem>>, vector<1x64xf32>
    %5 = vector.extract_strided_slice %1 {offsets = [0, 0], sizes = [64, 1], strides = [1, 1]} : vector<64x2xf32> to vector<64x1xf32>
    %6 = vector.extract_strided_slice %3 {offsets = [0, 0], sizes = [1, 64], strides = [1, 1]} : vector<2x64xf32> to vector<1x64xf32>
    %7 = vector.broadcast %5 : vector<64x1xf32> to vector<64x64xf32>
    %8 = vector.broadcast %6 : vector<1x64xf32> to vector<64x64xf32>
    %9 = arith.mulf %7, %8 : vector<64x64xf32>
    %10 = vector.broadcast %4 : vector<1x64xf32> to vector<64x64xf32>
    %11 = arith.addf %9, %10 : vector<64x64xf32>
    %12 = vector.extract_strided_slice %1 {offsets = [0, 1], sizes = [64, 1], strides = [1, 1]} : vector<64x2xf32> to vector<64x1xf32>
    %13 = vector.extract_strided_slice %3 {offsets = [1, 0], sizes = [1, 64], strides = [1, 1]} : vector<2x64xf32> to vector<1x64xf32>
    %14 = vector.broadcast %12 : vector<64x1xf32> to vector<64x64xf32>
    %15 = vector.broadcast %13 : vector<1x64xf32> to vector<64x64xf32>
    %16 = arith.mulf %14, %15 : vector<64x64xf32>
    %17 = arith.addf %11, %16 : vector<64x64xf32>
    %c0_7 = arith.constant 0 : index
    %c0_8 = arith.constant 0 : index
    %18 = vector.load %arg5[%c0_7, %c0_8] : memref<1x64xf32, #tpu.memory_space<vmem>>, vector<1x64xf32>
    %19 = vector.broadcast %18 : vector<1x64xf32> to vector<64x64xf32>
    %20 = arith.mulf %17, %19 : vector<64x64xf32>
    %c0_9 = arith.constant 0 : index
    %c0_10 = arith.constant 0 : index
    %21 = vector.load %arg6[%c0_9, %c0_10] : memref<1x64xf32, #tpu.memory_space<vmem>>, vector<1x64xf32>
    %22 = vector.broadcast %21 : vector<1x64xf32> to vector<64x64xf32>
    %23 = arith.addf %20, %22 : vector<64x64xf32>
    %cst = arith.constant 0.000000e+00 : f32
    %24 = vector.broadcast %cst : f32 to vector<64x64xf32>
    %25 = arith.maximumf %23, %24 : vector<64x64xf32>
    %c0_11 = arith.constant 0 : index
    %c0_12 = arith.constant 0 : index
    %26 = vector.load %arg7[%c0_11, %c0_12] : memref<64x128xf32, #tpu.memory_space<vmem>>, vector<64x128xf32>
    %cst_13 = arith.constant dense<0.000000e+00> : vector<64x128xf32>
    %27 = tpu.matmul %25, %26, %cst_13 {dimension_numbers = #tpu.dot_dimension_numbers<[1], [0], [0], [1], [0, 0, 1, 1], [], []>} : vector<64x64xf32>, vector<64x128xf32>, vector<64x128xf32> -> vector<64x128xf32>
    %c0_14 = arith.constant 0 : index
    %c0_15 = arith.constant 0 : index
    %28 = vector.load %arg8[%c0_14, %c0_15] : memref<1x128xf32, #tpu.memory_space<vmem>>, vector<1x128xf32>
    %29 = vector.broadcast %28 : vector<1x128xf32> to vector<64x128xf32>
    %30 = arith.addf %27, %29 : vector<64x128xf32>
    %cst_16 = arith.constant dense<0.000000e+00> : vector<128xf32>
    %31 = vector.multi_reduction <add>, %30, %cst_16 [0] : vector<64x128xf32> to vector<128xf32>
    %32 = vector.shape_cast %31 : vector<128xf32> to vector<1x128xf32>
    %33 = arith.mulf %30, %30 : vector<64x128xf32>
    %cst_17 = arith.constant dense<0.000000e+00> : vector<128xf32>
    %34 = vector.multi_reduction <add>, %33, %cst_17 [0] : vector<64x128xf32> to vector<128xf32>
    %35 = vector.shape_cast %34 : vector<128xf32> to vector<1x128xf32>
    %cst_18 = arith.constant dense<0xFF800000> : vector<128xf32>
    %36 = vector.multi_reduction <maximumf>, %30, %cst_18 [0] : vector<64x128xf32> to vector<128xf32>
    %37 = vector.shape_cast %36 : vector<128xf32> to vector<1x128xf32>
    %cst_19 = arith.constant dense<0x7F800000> : vector<128xf32>
    %38 = vector.multi_reduction <minimumf>, %30, %cst_19 [0] : vector<64x128xf32> to vector<128xf32>
    %39 = vector.shape_cast %38 : vector<128xf32> to vector<1x128xf32>
    %c0_i32 = arith.constant 0 : i32
    %40 = arith.cmpi eq, %arg1, %c0_i32 : i32
    %41 = arith.extui %40 : i1 to i32
    %c0_i32_20 = arith.constant 0 : i32
    %42 = arith.cmpi ne, %41, %c0_i32_20 : i32
    scf.if %42 {
      %cst_45 = arith.constant 0.000000e+00 : f32
      %59 = vector.broadcast %cst_45 : f32 to vector<1x1x128xf32>
      %c0_46 = arith.constant 0 : index
      %c0_47 = arith.constant 0 : index
      %c0_48 = arith.constant 0 : index
      %60 = vector.load %arg9[%c0_46, %c0_47, %c0_48] : memref<1x1x128xf32, #tpu.memory_space<vmem>>, vector<1x1x128xf32>
      tpu.vector_store %arg9[%c0_46, %c0_47, %c0_48], %59 {strides = array<i32>} : memref<1x1x128xf32, #tpu.memory_space<vmem>>, vector<1x1x128xf32>,
      %cst_49 = arith.constant 0.000000e+00 : f32
      %61 = vector.broadcast %cst_49 : f32 to vector<1x1x128xf32>
      %c0_50 = arith.constant 0 : index
      %c0_51 = arith.constant 0 : index
      %c0_52 = arith.constant 0 : index
      %62 = vector.load %arg10[%c0_50, %c0_51, %c0_52] : memref<1x1x128xf32, #tpu.memory_space<vmem>>, vector<1x1x128xf32>
      tpu.vector_store %arg10[%c0_50, %c0_51, %c0_52], %61 {strides = array<i32>} : memref<1x1x128xf32, #tpu.memory_space<vmem>>, vector<1x1x128xf32>,
      %cst_53 = arith.constant 0xFF800000 : f32
      %63 = vector.broadcast %cst_53 : f32 to vector<1x1x128xf32>
      %c0_54 = arith.constant 0 : index
      %c0_55 = arith.constant 0 : index
      %c0_56 = arith.constant 0 : index
      %64 = vector.load %arg11[%c0_54, %c0_55, %c0_56] : memref<1x1x128xf32, #tpu.memory_space<vmem>>, vector<1x1x128xf32>
      tpu.vector_store %arg11[%c0_54, %c0_55, %c0_56], %63 {strides = array<i32>} : memref<1x1x128xf32, #tpu.memory_space<vmem>>, vector<1x1x128xf32>,
      %cst_57 = arith.constant 0x7F800000 : f32
      %65 = vector.broadcast %cst_57 : f32 to vector<1x1x128xf32>
      %c0_58 = arith.constant 0 : index
      %c0_59 = arith.constant 0 : index
      %c0_60 = arith.constant 0 : index
      %66 = vector.load %arg12[%c0_58, %c0_59, %c0_60] : memref<1x1x128xf32, #tpu.memory_space<vmem>>, vector<1x1x128xf32>
      tpu.vector_store %arg12[%c0_58, %c0_59, %c0_60], %65 {strides = array<i32>} : memref<1x1x128xf32, #tpu.memory_space<vmem>>, vector<1x1x128xf32>,
    } else {
    }
    %c0_21 = arith.constant 0 : index
    %c0_22 = arith.constant 0 : index
    %c0_23 = arith.constant 0 : index
    %43 = vector.load %arg9[%c0_21, %c0_22, %c0_23] : memref<1x1x128xf32, #tpu.memory_space<vmem>>, vector<1x1x128xf32>
    %44 = vector.shape_cast %32 : vector<1x128xf32> to vector<1x1x128xf32>
    %45 = arith.addf %43, %44 : vector<1x1x128xf32>
    %c0_24 = arith.constant 0 : index
    %c0_25 = arith.constant 0 : index
    %c0_26 = arith.constant 0 : index
    %46 = vector.load %arg9[%c0_24, %c0_25, %c0_26] : memref<1x1x128xf32, #tpu.memory_space<vmem>>, vector<1x1x128xf32>
    tpu.vector_store %arg9[%c0_24, %c0_25, %c0_26], %45 {strides = array<i32>} : memref<1x1x128xf32, #tpu.memory_space<vmem>>, vector<1x1x128xf32>,
    %c0_27 = arith.constant 0 : index
    %c0_28 = arith.constant 0 : index
    %c0_29 = arith.constant 0 : index
    %47 = vector.load %arg10[%c0_27, %c0_28, %c0_29] : memref<1x1x128xf32, #tpu.memory_space<vmem>>, vector<1x1x128xf32>
    %48 = vector.shape_cast %35 : vector<1x128xf32> to vector<1x1x128xf32>
    %49 = arith.addf %47, %48 : vector<1x1x128xf32>
    %c0_30 = arith.constant 0 : index
    %c0_31 = arith.constant 0 : index
    %c0_32 = arith.constant 0 : index
    %50 = vector.load %arg10[%c0_30, %c0_31, %c0_32] : memref<1x1x128xf32, #tpu.memory_space<vmem>>, vector<1x1x128xf32>
    tpu.vector_store %arg10[%c0_30, %c0_31, %c0_32], %49 {strides = array<i32>} : memref<1x1x128xf32, #tpu.memory_space<vmem>>, vector<1x1x128xf32>,
    %c0_33 = arith.constant 0 : index
    %c0_34 = arith.constant 0 : index
    %c0_35 = arith.constant 0 : index
    %51 = vector.load %arg11[%c0_33, %c0_34, %c0_35] : memref<1x1x128xf32, #tpu.memory_space<vmem>>, vector<1x1x128xf32>
    %52 = vector.shape_cast %37 : vector<1x128xf32> to vector<1x1x128xf32>
    %53 = arith.maximumf %51, %52 : vector<1x1x128xf32>
    %c0_36 = arith.constant 0 : index
    %c0_37 = arith.constant 0 : index
    %c0_38 = arith.constant 0 : index
    %54 = vector.load %arg11[%c0_36, %c0_37, %c0_38] : memref<1x1x128xf32, #tpu.memory_space<vmem>>, vector<1x1x128xf32>
    tpu.vector_store %arg11[%c0_36, %c0_37, %c0_38], %53 {strides = array<i32>} : memref<1x1x128xf32, #tpu.memory_space<vmem>>, vector<1x1x128xf32>,
    %c0_39 = arith.constant 0 : index
    %c0_40 = arith.constant 0 : index
    %c0_41 = arith.constant 0 : index
    %55 = vector.load %arg12[%c0_39, %c0_40, %c0_41] : memref<1x1x128xf32, #tpu.memory_space<vmem>>, vector<1x1x128xf32>
    %56 = vector.shape_cast %39 : vector<1x128xf32> to vector<1x1x128xf32>
    %57 = arith.minimumf %55, %56 : vector<1x1x128xf32>
    %c0_42 = arith.constant 0 : index
    %c0_43 = arith.constant 0 : index
    %c0_44 = arith.constant 0 : index
    %58 = vector.load %arg12[%c0_42, %c0_43, %c0_44] : memref<1x1x128xf32, #tpu.memory_space<vmem>>, vector<1x1x128xf32>
    tpu.vector_store %arg12[%c0_42, %c0_43, %c0_44], %57 {strides = array<i32>} : memref<1x1x128xf32, #tpu.memory_space<vmem>>, vector<1x1x128xf32>,
    return
  }
  func.func @transform_0(%arg0: i32, %arg1: i32) -> (i32, i32, i32) {
    %c0_i32 = arith.constant 0 : i32
    %c0_i32_0 = arith.constant 0 : i32
    return %arg0, %arg1, %c0_i32 : i32, i32, i32
  }
  func.func @transform_1(%arg0: i32, %arg1: i32) -> (i32, i32, i32) {
    %c0_i32 = arith.constant 0 : i32
    %c0_i32_0 = arith.constant 0 : i32
    %c0_i32_1 = arith.constant 0 : i32
    return %arg0, %c0_i32, %c0_i32_0 : i32, i32, i32
  }
  func.func @transform_2(%arg0: i32, %arg1: i32) -> (i32, i32) {
    %c0_i32 = arith.constant 0 : i32
    %c0_i32_0 = arith.constant 0 : i32
    %c0_i32_1 = arith.constant 0 : i32
    return %c0_i32, %c0_i32_0 : i32, i32
  }
  func.func @transform_3(%arg0: i32, %arg1: i32) -> (i32, i32) {
    %c0_i32 = arith.constant 0 : i32
    %c0_i32_0 = arith.constant 0 : i32
    %c0_i32_1 = arith.constant 0 : i32
    return %c0_i32, %c0_i32_0 : i32, i32
  }
  func.func @transform_4(%arg0: i32, %arg1: i32) -> (i32, i32) {
    %c0_i32 = arith.constant 0 : i32
    %c0_i32_0 = arith.constant 0 : i32
    %c0_i32_1 = arith.constant 0 : i32
    return %c0_i32, %c0_i32_0 : i32, i32
  }
  func.func @transform_5(%arg0: i32, %arg1: i32) -> (i32, i32) {
    %c0_i32 = arith.constant 0 : i32
    %c0_i32_0 = arith.constant 0 : i32
    %c0_i32_1 = arith.constant 0 : i32
    return %c0_i32, %c0_i32_0 : i32, i32
  }
  func.func @transform_6(%arg0: i32, %arg1: i32) -> (i32, i32) {
    %c0_i32 = arith.constant 0 : i32
    %c0_i32_0 = arith.constant 0 : i32
    %c0_i32_1 = arith.constant 0 : i32
    return %c0_i32, %c0_i32_0 : i32, i32
  }
  func.func @transform_7(%arg0: i32, %arg1: i32) -> (i32, i32, i32) {
    %c0_i32 = arith.constant 0 : i32
    %c0_i32_0 = arith.constant 0 : i32
    %c0_i32_1 = arith.constant 0 : i32
    return %arg0, %c0_i32, %c0_i32_0 : i32, i32, i32
  }
  func.func @transform_8(%arg0: i32, %arg1: i32) -> (i32, i32, i32) {
    %c0_i32 = arith.constant 0 : i32
    %c0_i32_0 = arith.constant 0 : i32
    %c0_i32_1 = arith.constant 0 : i32
    return %arg0, %c0_i32, %c0_i32_0 : i32, i32, i32
  }
  func.func @transform_9(%arg0: i32, %arg1: i32) -> (i32, i32, i32) {
    %c0_i32 = arith.constant 0 : i32
    %c0_i32_0 = arith.constant 0 : i32
    %c0_i32_1 = arith.constant 0 : i32
    return %arg0, %c0_i32, %c0_i32_0 : i32, i32, i32
  }
  func.func @transform_10(%arg0: i32, %arg1: i32) -> (i32, i32, i32) {
    %c0_i32 = arith.constant 0 : i32
    %c0_i32_0 = arith.constant 0 : i32
    %c0_i32_1 = arith.constant 0 : i32
    return %arg0, %c0_i32, %c0_i32_0 : i32, i32, i32
  }
}

</mosaic_0001>

<llo_original>
// kernel: shallow_pointnet_feat.5
$region0: #{shallow_pointnet_feat.5}
  #allocation0 [shape = 'u32[]', space=smem, size = 0x4, offset = 0x4, fixed_abs, tag = 'smem constant byte address 0x4 - core index']
  #allocation1 [shape = 'u32[72,128]{1,0:T(1,128)}', space=vmem, size = 0x9000, scoped, tag = 'internal scratch']
  %s0 = inlined_call_operand.vmem [shape: f32[2,64,2], index: 0, kind: input, shape index: {}]
  %s1 = inlined_call_operand.vmem [shape: f32[1,2,128], index: 1, kind: input, shape index: {}]
  %s2 = inlined_call_operand.vmem [shape: f32[1,128], index: 2, kind: input, shape index: {}]
  %s3 = inlined_call_operand.vmem [shape: f32[2,1,128], index: 3, kind: output, shape index: {0}]
  %s4 = inlined_call_operand.vmem [shape: f32[2,1,128], index: 4, kind: output, shape index: {1}]
  %5 = xla_tuple %s3, %s4
  %s6 = sld [smem:[#allocation0]]
  $region57: #{shallow_pointnet_feat.5} parent=0
    _
  %s8 = ssub.s32 1, %s6
  %s9 = scalar_select 0, %s8, %s6
  loop: start=0, step=1, limit=4
  $region2: #{shallow_pointnet_feat.5} parent=0 // loop_pre_header
    _
  $region3: #{shallow_pointnet_feat.5} parent=0 // loop_header
    %s11 = sphi 0, %s15
    %p12 = scmp.ge.s32.totalorder %s11, 4
    %s18 = sphi 0, %s30
    %s19 = sphi 0, %s26
    %s20 = sphi 0, %s18
    %s21 = sphi 0, %s19
    %s22 = sphi 0, %s20
    %s23 = sphi 0, %s21
    %s35 = sphi 0, %s37
    %s38 = sphi 0, %s35
    %s39 = sphi 0, %s38
    %s55 = sphi 0, %s39
    %s59 = sphi 0, %s59
    %s61 = sphi 0, %s59
    %s62 = sphi 0, %s61
    %s76 = sphi 0, %s62
    %s80 = sphi 0, %s80
    %s82 = sphi 0, %s80
    %s83 = sphi 0, %s82
    %s97 = sphi 0, %s83
    %s103 = sphi 0, %s105
    %s106 = sphi 0, %s103
    %s107 = sphi 0, %s106
    %s123 = sphi 0, %s107
    %s129 = sphi 0, %s131
    %s132 = sphi 0, %s129
    %s133 = sphi 0, %s132
    %s149 = sphi 0, %s133
  $region4: #{shallow_pointnet_feat.5} parent=0 // loop_header_branch
    %14 = sbr.rel (%p12) target = $region8
  $region5: #{shallow_pointnet_feat.5} parent=0 // loop_body
    %s16 = ssub.s32 %s11, 1
    %s17 = ssub.s32 %s11, 2
    %s24 = sadd.s32 1, %s19
    %p25 = scmp.ge.s32.totalorder %s24, 1
    %s26 = scalar_select %p25, 0, %s24
    %s27 = sadd.s32 1, %s18
    %s28 = scalar_select %p25, %s27, %s18
    %p29 = scmp.ge.s32.totalorder %s28, 2
    %s30 = scalar_select %p29, 0, %s28
    %s31 = ssub.s32 %s18, %s30
    %s32 = ssub.s32 %s19, %s26
    %s33 = sor.u32 %s31, %s32
    %p34 = scmp.eq.s32.totalorder %s33, 0
    %s36 = sadd.s32 %s35, 1
    %s37 = scalar_select %p34, %s35, %s36
    %p40 = pneg %p34
    %p41 = scmp.eq.s32.totalorder %s11, 1
    %p42 = por %p40, %p41
    %p43 = scmp.ne.s32.totalorder %s35, %s38
    %p44 = scmp.eq.s32.totalorder %s11, 0
    %p45 = por %p43, %p44
    %p46 = scmp.ne.s32.totalorder %s35, %s38
    %p47 = scmp.eq.s32.totalorder %s16, 1
    %p48 = por %p46, %p47
    %p49 = scmp.ne.s32.totalorder %s38, %s39
    %p50 = scmp.eq.s32.totalorder %s16, 0
    %p51 = por %p49, %p50
    %p52 = scmp.ne.s32.totalorder %s38, %s39
    %p53 = scmp.eq.s32.totalorder %s17, 1
    %p54 = por %p52, %p53
    %p56 = scmp.ne.s32.totalorder %s39, %s55
    %p57 = scmp.eq.s32.totalorder %s17, 0
    %p58 = por %p56, %p57
    %s60 = sadd.s32 %s59, 1
    %p63 = scmp.eq.s32.totalorder %s11, 1
    %p64 = scmp.ne.s32.totalorder %s59, %s61
    %p65 = scmp.eq.s32.totalorder %s11, 0
    %p66 = por %p64, %p65
    %p67 = scmp.ne.s32.totalorder %s59, %s61
    %p68 = scmp.eq.s32.totalorder %s16, 1
    %p69 = por %p67, %p68
    %p70 = scmp.ne.s32.totalorder %s61, %s62
    %p71 = scmp.eq.s32.totalorder %s16, 0
    %p72 = por %p70, %p71
    %p73 = scmp.ne.s32.totalorder %s61, %s62
    %p74 = scmp.eq.s32.totalorder %s17, 1
    %p75 = por %p73, %p74
    %p77 = scmp.ne.s32.totalorder %s62, %s76
    %p78 = scmp.eq.s32.totalorder %s17, 0
    %p79 = por %p77, %p78
    %s81 = sadd.s32 %s80, 1
    %p84 = scmp.eq.s32.totalorder %s11, 1
    %p85 = scmp.ne.s32.totalorder %s80, %s82
    %p86 = scmp.eq.s32.totalorder %s11, 0
    %p87 = por %p85, %p86
    %p88 = scmp.ne.s32.totalorder %s80, %s82
    %p89 = scmp.eq.s32.totalorder %s16, 1
    %p90 = por %p88, %p89
    %p91 = scmp.ne.s32.totalorder %s82, %s83
    %p92 = scmp.eq.s32.totalorder %s16, 0
    %p93 = por %p91, %p92
    %p94 = scmp.ne.s32.totalorder %s82, %s83
    %p95 = scmp.eq.s32.totalorder %s17, 1
    %p96 = por %p94, %p95
    %p98 = scmp.ne.s32.totalorder %s83, %s97
    %p99 = scmp.eq.s32.totalorder %s17, 0
    %p100 = por %p98, %p99
    %s101 = ssub.s32 %s18, %s30
    %p102 = scmp.eq.s32.totalorder %s101, 0
    %s104 = sadd.s32 %s103, 1
    %s105 = scalar_select %p102, %s103, %s104
    %p108 = pneg %p102
    %p109 = scmp.eq.s32.totalorder %s11, 1
    %p110 = por %p108, %p109
    %p111 = scmp.ne.s32.totalorder %s103, %s106
    %p112 = scmp.eq.s32.totalorder %s11, 0
    %p113 = por %p111, %p112
    %p114 = scmp.ne.s32.totalorder %s103, %s106
    %p115 = scmp.eq.s32.totalorder %s16, 1
    %p116 = por %p114, %p115
    %p117 = scmp.ne.s32.totalorder %s106, %s107
    %p118 = scmp.eq.s32.totalorder %s16, 0
    %p119 = por %p117, %p118
    %p120 = scmp.ne.s32.totalorder %s106, %s107
    %p121 = scmp.eq.s32.totalorder %s17, 1
    %p122 = por %p120, %p121
    %p124 = scmp.ne.s32.totalorder %s107, %s123
    %p125 = scmp.eq.s32.totalorder %s17, 0
    %p126 = por %p124, %p125
    %s127 = ssub.s32 %s18, %s30
    %p128 = scmp.eq.s32.totalorder %s127, 0
    %s130 = sadd.s32 %s129, 1
    %s131 = scalar_select %p128, %s129, %s130
    %p134 = pneg %p128
    %p135 = scmp.eq.s32.totalorder %s11, 1
    %p136 = por %p134, %p135
    %p137 = scmp.ne.s32.totalorder %s129, %s132
    %p138 = scmp.eq.s32.totalorder %s11, 0
    %p139 = por %p137, %p138
    %p140 = scmp.ne.s32.totalorder %s129, %s132
    %p141 = scmp.eq.s32.totalorder %s16, 1
    %p142 = por %p140, %p141
    %p143 = scmp.ne.s32.totalorder %s132, %s133
    %p144 = scmp.eq.s32.totalorder %s16, 0
    %p145 = por %p143, %p144
    %p146 = scmp.ne.s32.totalorder %s132, %s133
    %p147 = scmp.eq.s32.totalorder %s17, 1
    %p148 = por %p146, %p147
    %p150 = scmp.ne.s32.totalorder %s133, %s149
    %p151 = scmp.eq.s32.totalorder %s17, 0
    %p152 = por %p150, %p151
    %p153 = scmp.le.s32.totalorder 1, %s11
    %p154 = scmp.lt.s32.totalorder %s11, 3
    %p155 = pnand %p153, %p154
    %p156 = pneg %p155
    // Predicated region
    $region9: #{shallow_pointnet_feat.5} parent=5 // pred_check
      _
    $region10: #{shallow_pointnet_feat.5} parent=5 // pred_check_branch
      %158 = sbr.rel (%p155) target = $region12
    $region11: #{shallow_pointnet_feat.5} parent=5 // pred_region
      %s159 = ssub.s32 %s11, 1
      // Predicated region
      $region13: #{shallow_pointnet_feat.5} parent=11 // pred_check
        %p160 = pneg %p72
      $region14: #{shallow_pointnet_feat.5} parent=11 // pred_check_branch
        %162 = sbr.rel (%p160) target = $region16
      $region15: #{shallow_pointnet_feat.5} parent=11 // pred_region
        _
      $region16: #{shallow_pointnet_feat.5} parent=11 // pred_fallthru
        _
      // Predicated region
      $region17: #{shallow_pointnet_feat.5} parent=11 // pred_check
        %p163 = pneg %p93
      $region18: #{shallow_pointnet_feat.5} parent=11 // pred_check_branch
        %165 = sbr.rel (%p163) target = $region20
      $region19: #{shallow_pointnet_feat.5} parent=11 // pred_region
        _
      $region20: #{shallow_pointnet_feat.5} parent=11 // pred_fallthru
        _
    $region12: #{shallow_pointnet_feat.5} parent=5 // pred_fallthru
      _
    %p166 = scmp.lt.s32.totalorder %s11, 2
    // Predicated region
    $region21: #{shallow_pointnet_feat.5} parent=5 // pred_check
      %p167 = pneg %p166
    $region22: #{shallow_pointnet_feat.5} parent=5 // pred_check_branch
      %169 = sbr.rel (%p167) target = $region24
    $region23: #{shallow_pointnet_feat.5} parent=5 // pred_region
      // Predicated region
      $region25: #{shallow_pointnet_feat.5} parent=23 // pred_check
        %p170 = pneg %p45
      $region26: #{shallow_pointnet_feat.5} parent=23 // pred_check_branch
        %172 = sbr.rel (%p170) target = $region28
      $region27: #{shallow_pointnet_feat.5} parent=23 // pred_region
        %s173 = smul.u32 8, %s19
        %p174 = scmp.lt.s32.totalorder %s18, 1
        %s175 = scalar_select %p174, %s18, 1
        %p176 = scmp.lt.s32.totalorder %s173, 7
        %s177 = scalar_select %p176, %s173, 7
        %s178 = smul.addr %s175, 8
        %s179 = sadd.s32 %s177, %s178
        %s180 = smul.addr %s179, 8
        %s181 = scalar_lea.vmem %s0, %s180
        %s182 = smul.u32 8, %s19
      $region28: #{shallow_pointnet_feat.5} parent=23 // pred_fallthru
        _
    $region24: #{shallow_pointnet_feat.5} parent=5 // pred_fallthru
      _
    %p183 = scmp.le.s32.totalorder 1, %s11
    %p184 = scmp.lt.s32.totalorder %s11, 3
    %p185 = pnand %p183, %p184
    %p186 = pneg %p185
    // Predicated region
    $region29: #{shallow_pointnet_feat.5} parent=5 // pred_check
      _
    $region30: #{shallow_pointnet_feat.5} parent=5 // pred_check_branch
      %188 = sbr.rel (%p185) target = $region32
    $region31: #{shallow_pointnet_feat.5} parent=5 // pred_region
      %s189 = ssub.s32 %s11, 1
      %s190 = smul.u32 8, %s21
      %p191 = scmp.lt.s32.totalorder %s20, 1
      %s192 = scalar_select %p191, %s20, 1
      %p193 = scmp.lt.s32.totalorder %s190, 7
      %s194 = scalar_select %p193, %s190, 7
      %s195 = smul.addr %s192, 8
      %s196 = sadd.s32 %s194, %s195
      %s197 = smul.addr %s196, 8
      %s198 = scalar_lea.vmem %s0, %s197
      %p199 = pneg %p51
      %p200 = pneg %p48
      %p201 = pneg %p72
      %p202 = pneg %p69
      %p203 = pneg %p93
      %p204 = pneg %p90
      %p205 = pneg %p119
      %p206 = pneg %p116
      %p207 = scmp.lt.s32.totalorder %s20, 1
      %s208 = scalar_select %p207, %s20, 1
      %s209 = scalar_lea.vmem %s3, %s208
      %p210 = pneg %p145
      %p211 = pneg %p142
      %p212 = scmp.lt.s32.totalorder %s20, 1
      %s213 = scalar_select %p212, %s20, 1
      %s214 = scalar_lea.vmem %s4, %s213
      %s215 = smul.u32 8, %s21
      %p216 = scmp.lt.s32.totalorder %s20, 1
      %s217 = scalar_select %p216, %s20, 1
      %p218 = scmp.lt.s32.totalorder %s215, 7
      %s219 = scalar_select %p218, %s215, 7
      %s220 = smul.addr %s217, 8
      %s221 = sadd.s32 %s219, %s220
      %s222 = smul.addr %s221, 8
      %s223 = scalar_lea.vmem %s0, %s222
      %s224 = smul.u32 8, %s21
      %p225 = scmp.lt.s32.totalorder %s20, 1
      %s226 = scalar_select %p225, %s20, 1
      %s227 = scalar_lea.vmem %s3, %s226
      %p228 = scmp.lt.s32.totalorder %s20, 1
      %s229 = scalar_select %p228, %s20, 1
      %s230 = scalar_lea.vmem %s4, %s229
      %v231 = vld [vmem:[%s223] sm:$0xff]
      %v232 = vld [vmem:[%s223 + $0x8] sm:$0xff]
      %v233 = vld [vmem:[%s223 + $0x10] sm:$0xff]
      %v234 = vld [vmem:[%s223 + $0x18] sm:$0xff]
      %v235 = vld [vmem:[%s223 + $0x20] sm:$0xff]
      %v236 = vld [vmem:[%s223 + $0x28] sm:$0xff]
      %v237 = vld [vmem:[%s223 + $0x30] sm:$0xff]
      %v238 = vld [vmem:[%s223 + $0x38] sm:$0xff]
      %v239 = vld [vmem:[%s1] sm:$0x3]
      %v240 = vld [vmem:[%s2] sm:$0x1]
      %242 = vset.pattern.permute.xlu0 0
      %243 = vperm.xlu0 %242, %v231
      %v244 = vpop.permute.xlu0 %243
      %247 = vset.pattern.permute.xlu0 0
      %248 = vperm.xlu0 %247, %v232
      %v249 = vpop.permute.xlu0 %248
      %252 = vset.pattern.permute.xlu0 0
      %253 = vperm.xlu0 %252, %v233
      %v254 = vpop.permute.xlu0 %253
      %257 = vset.pattern.permute.xlu0 0
      %258 = vperm.xlu0 %257, %v234
      %v259 = vpop.permute.xlu0 %258
      %262 = vset.pattern.permute.xlu0 0
      %263 = vperm.xlu0 %262, %v235
      %v264 = vpop.permute.xlu0 %263
      %267 = vset.pattern.permute.xlu0 0
      %268 = vperm.xlu0 %267, %v236
      %v269 = vpop.permute.xlu0 %268
      %272 = vset.pattern.permute.xlu0 0
      %273 = vperm.xlu0 %272, %v237
      %v274 = vpop.permute.xlu0 %273
      %277 = vset.pattern.permute.xlu0 0
      %278 = vperm.xlu0 %277, %v238
      %v279 = vpop.permute.xlu0 %278
      %v281 = vperm.slane %v239, 0
      %v282 = vmul.f32 %v244, %v281
      %v283 = vmul.f32 %v249, %v281
      %v284 = vmul.f32 %v254, %v281
      %v285 = vmul.f32 %v259, %v281
      %v286 = vmul.f32 %v264, %v281
      %v287 = vmul.f32 %v269, %v281
      %v288 = vmul.f32 %v274, %v281
      %v289 = vmul.f32 %v279, %v281
      %v291 = vperm.slane %v240, 0
      %v293 = vadd.f32 %v282, %v291
      %v294 = vadd.f32 %v283, %v291
      %v295 = vadd.f32 %v284, %v291
      %v296 = vadd.f32 %v285, %v291
      %v297 = vadd.f32 %v286, %v291
      %v298 = vadd.f32 %v287, %v291
      %v299 = vadd.f32 %v288, %v291
      %v300 = vadd.f32 %v289, %v291
      %301 = vset.pattern.permute.xlu0 1
      %302 = vperm.xlu0 %301, %v231
      %v303 = vpop.permute.xlu0 %302
      %305 = vset.pattern.permute.xlu0 1
      %306 = vperm.xlu0 %305, %v232
      %v307 = vpop.permute.xlu0 %306
      %309 = vset.pattern.permute.xlu0 1
      %310 = vperm.xlu0 %309, %v233
      %v311 = vpop.permute.xlu0 %310
      %313 = vset.pattern.permute.xlu0 1
      %314 = vperm.xlu0 %313, %v234
      %v315 = vpop.permute.xlu0 %314
      %317 = vset.pattern.permute.xlu0 1
      %318 = vperm.xlu0 %317, %v235
      %v319 = vpop.permute.xlu0 %318
      %321 = vset.pattern.permute.xlu0 1
      %322 = vperm.xlu0 %321, %v236
      %v323 = vpop.permute.xlu0 %322
      %325 = vset.pattern.permute.xlu0 1
      %326 = vperm.xlu0 %325, %v237
      %v327 = vpop.permute.xlu0 %326
      %329 = vset.pattern.permute.xlu0 1
      %330 = vperm.xlu0 %329, %v238
      %v331 = vpop.permute.xlu0 %330
      %v333 = vperm.slane %v239, 1
      %v334 = vmul.f32 %v303, %v333
      %v335 = vmul.f32 %v307, %v333
      %v336 = vmul.f32 %v311, %v333
      %v337 = vmul.f32 %v315, %v333
      %v338 = vmul.f32 %v319, %v333
      %v339 = vmul.f32 %v323, %v333
      %v340 = vmul.f32 %v327, %v333
      %v341 = vmul.f32 %v331, %v333
      %v342 = vadd.f32 %v293, %v334
      %v343 = vadd.f32 %v294, %v335
      %v344 = vadd.f32 %v295, %v336
      %v345 = vadd.f32 %v296, %v337
      %v346 = vadd.f32 %v297, %v338
      %v347 = vadd.f32 %v298, %v339
      %v348 = vadd.f32 %v299, %v340
      %v349 = vadd.f32 %v300, %v341
      %v350 = vadd.f32 %v342, %v343
      %v351 = vadd.f32 %v350, %v344
      %v352 = vadd.f32 %v351, %v345
      %v353 = vadd.f32 %v352, %v346
      %v354 = vadd.f32 %v353, %v347
      %v355 = vadd.f32 %v354, %v348
      %v356 = vadd.f32 %v355, %v349
      %v357 = vrot.slane %v356, 4
      %v358 = vadd.f32 %v356, %v357
      %v359 = vrot.slane %v358, 2
      %v360 = vadd.f32 %v358, %v359
      %v361 = vrot.slane %v360, 1
      %v362 = vadd.f32 %v360, %v361
      %v363 = vmul.f32 %v342, %v342
      %v364 = vmul.f32 %v343, %v343
      %v365 = vmul.f32 %v344, %v344
      %v366 = vmul.f32 %v345, %v345
      %v367 = vmul.f32 %v346, %v346
      %v368 = vmul.f32 %v347, %v347
      %v369 = vmul.f32 %v348, %v348
      %v370 = vmul.f32 %v349, %v349
      %v371 = vadd.f32 %v363, %v364
      %v372 = vadd.f32 %v371, %v365
      %v373 = vadd.f32 %v372, %v366
      %v374 = vadd.f32 %v373, %v367
      %v375 = vadd.f32 %v374, %v368
      %v376 = vadd.f32 %v375, %v369
      %v377 = vadd.f32 %v376, %v370
      %v378 = vrot.slane %v377, 4
      %v379 = vadd.f32 %v377, %v378
      %v380 = vrot.slane %v379, 2
      %v381 = vadd.f32 %v379, %v380
      %v382 = vrot.slane %v381, 1
      %v383 = vadd.f32 %v381, %v382
      %p384 = scmp.eq.s32.totalorder %s21, 0
      // Predicated region
      $region33: #{shallow_pointnet_feat.5} parent=31 // pred_check
        %p385 = pneg %p384
      $region34: #{shallow_pointnet_feat.5} parent=31 // pred_check_branch
        %387 = sbr.rel (%p385) target = $region36
      $region35: #{shallow_pointnet_feat.5} parent=31 // pred_region
        %388 = vst [vmem:[%s227] sm:$0x1] 0.0
        %389 = vst [vmem:[%s230] sm:$0x1] 0.0
      $region36: #{shallow_pointnet_feat.5} parent=31 // pred_fallthru
        _
      %v390 = vld [vmem:[%s227] sm:$0x1]
      %v391 = vadd.f32 %v390, %v362
      %392 = vst [vmem:[%s227] sm:$0x1] %v391
      %v393 = vld [vmem:[%s230] sm:$0x1]
      %v394 = vadd.f32 %v393, %v383
      %395 = vst [vmem:[%s230] sm:$0x1] %v394
      %p396 = scmp.lt.s32.totalorder %s20, 1
      %s397 = scalar_select %p396, %s20, 1
      %s398 = scalar_lea.vmem %s3, %s397
      %p399 = scmp.lt.s32.totalorder %s20, 1
      %s400 = scalar_select %p399, %s20, 1
      %s401 = scalar_lea.vmem %s4, %s400
      // Predicated region
      $region37: #{shallow_pointnet_feat.5} parent=31 // pred_check
        %p402 = pneg %p116
      $region38: #{shallow_pointnet_feat.5} parent=31 // pred_check_branch
        %404 = sbr.rel (%p402) target = $region40
      $region39: #{shallow_pointnet_feat.5} parent=31 // pred_region
        _
      $region40: #{shallow_pointnet_feat.5} parent=31 // pred_fallthru
        _
      // Predicated region
      $region41: #{shallow_pointnet_feat.5} parent=31 // pred_check
        %p405 = pneg %p142
      $region42: #{shallow_pointnet_feat.5} parent=31 // pred_check_branch
        %407 = sbr.rel (%p405) target = $region44
      $region43: #{shallow_pointnet_feat.5} parent=31 // pred_region
        _
      $region44: #{shallow_pointnet_feat.5} parent=31 // pred_fallthru
        _
    $region32: #{shallow_pointnet_feat.5} parent=5 // pred_fallthru
      _
    %p408 = scmp.le.s32.totalorder 2, %s11
    // Predicated region
    $region45: #{shallow_pointnet_feat.5} parent=5 // pred_check
      %p409 = pneg %p408
    $region46: #{shallow_pointnet_feat.5} parent=5 // pred_check_branch
      %411 = sbr.rel (%p409) target = $region48
    $region47: #{shallow_pointnet_feat.5} parent=5 // pred_region
      %s412 = ssub.s32 %s11, 2
      // Predicated region
      $region49: #{shallow_pointnet_feat.5} parent=47 // pred_check
        %p413 = pneg %p122
      $region50: #{shallow_pointnet_feat.5} parent=47 // pred_check_branch
        %415 = sbr.rel (%p413) target = $region52
      $region51: #{shallow_pointnet_feat.5} parent=47 // pred_region
        %p416 = scmp.lt.s32.totalorder %s22, 1
        %s417 = scalar_select %p416, %s22, 1
        %s418 = scalar_lea.vmem %s3, %s417
      $region52: #{shallow_pointnet_feat.5} parent=47 // pred_fallthru
        _
      // Predicated region
      $region53: #{shallow_pointnet_feat.5} parent=47 // pred_check
        %p419 = pneg %p148
      $region54: #{shallow_pointnet_feat.5} parent=47 // pred_check_branch
        %421 = sbr.rel (%p419) target = $region56
      $region55: #{shallow_pointnet_feat.5} parent=47 // pred_region
        %p422 = scmp.lt.s32.totalorder %s22, 1
        %s423 = scalar_select %p422, %s22, 1
        %s424 = scalar_lea.vmem %s4, %s423
      $region56: #{shallow_pointnet_feat.5} parent=47 // pred_fallthru
        _
    $region48: #{shallow_pointnet_feat.5} parent=5 // pred_fallthru
      _
  $region6: #{shallow_pointnet_feat.5} parent=0 // loop_footer
    %s15 = sadd.s32 1, %s11
  $region7: #{shallow_pointnet_feat.5} parent=0 // loop_footer_branch
    %10 = sbr.rel target = $region3
  $region8: #{shallow_pointnet_feat.5} parent=0 // loop_exit
    _

// kernel: shallow_pointnet_feat.6
$region0: #{shallow_pointnet_feat.6}
  #allocation0 [shape = 'u32[]', space=smem, size = 0x4, offset = 0x4, fixed_abs, tag = 'smem constant byte address 0x4 - core index']
  #allocation1 [shape = 'u32[72,128]{1,0:T(1,128)}', space=vmem, size = 0x9000, scoped, tag = 'internal scratch']
  %s0 = inlined_call_operand.vmem [shape: f32[2,64,2], index: 0, kind: input, shape index: {}]
  %s1 = inlined_call_operand.vmem [shape: f32[1,2,128], index: 1, kind: input, shape index: {}]
  %s2 = inlined_call_operand.vmem [shape: f32[1,128], index: 2, kind: input, shape index: {}]
  %s3 = inlined_call_operand.vmem [shape: f32[1,128], index: 3, kind: input, shape index: {}]
  %s4 = inlined_call_operand.vmem [shape: f32[1,128], index: 4, kind: input, shape index: {}]
  %s5 = inlined_call_operand.vmem [shape: f32[128,128], index: 5, kind: input, shape index: {}]
  %s6 = inlined_call_operand.vmem [shape: f32[1,128], index: 6, kind: input, shape index: {}]
  %s7 = inlined_call_operand.vmem [shape: f32[2,1,128], index: 7, kind: output, shape index: {0}]
  %s8 = inlined_call_operand.vmem [shape: f32[2,1,128], index: 8, kind: output, shape index: {1}]
  %s9 = inlined_call_operand.vmem [shape: f32[2,1,128], index: 9, kind: output, shape index: {2}]
  %s10 = inlined_call_operand.vmem [shape: f32[2,1,128], index: 10, kind: output, shape index: {3}]
  %11 = xla_tuple %s7, %s8, %s9, %s10
  %s12 = sld [smem:[#allocation0]]
  $region89: #{shallow_pointnet_feat.6} parent=0
    _
  %s14 = ssub.s32 1, %s12
  %s15 = scalar_select 0, %s14, %s12
  loop: start=0, step=1, limit=4
  $region2: #{shallow_pointnet_feat.6} parent=0 // loop_pre_header
    _
  $region3: #{shallow_pointnet_feat.6} parent=0 // loop_header
    %s17 = sphi 0, %s21
    %p18 = scmp.ge.s32.totalorder %s17, 4
    %s24 = sphi 0, %s36
    %s25 = sphi 0, %s32
    %s26 = sphi 0, %s24
    %s27 = sphi 0, %s25
    %s28 = sphi 0, %s26
    %s29 = sphi 0, %s27
    %s41 = sphi 0, %s43
    %s44 = sphi 0, %s41
    %s45 = sphi 0, %s44
    %s61 = sphi 0, %s45
    %s65 = sphi 0, %s65
    %s67 = sphi 0, %s65
    %s68 = sphi 0, %s67
    %s82 = sphi 0, %s68
    %s86 = sphi 0, %s86
    %s88 = sphi 0, %s86
    %s89 = sphi 0, %s88
    %s103 = sphi 0, %s89
    %s107 = sphi 0, %s107
    %s109 = sphi 0, %s107
    %s110 = sphi 0, %s109
    %s124 = sphi 0, %s110
    %s128 = sphi 0, %s128
    %s130 = sphi 0, %s128
    %s131 = sphi 0, %s130
    %s145 = sphi 0, %s131
    %s149 = sphi 0, %s149
    %s151 = sphi 0, %s149
    %s152 = sphi 0, %s151
    %s166 = sphi 0, %s152
    %s170 = sphi 0, %s170
    %s172 = sphi 0, %s170
    %s173 = sphi 0, %s172
    %s187 = sphi 0, %s173
    %s193 = sphi 0, %s195
    %s196 = sphi 0, %s193
    %s197 = sphi 0, %s196
    %s213 = sphi 0, %s197
    %s219 = sphi 0, %s221
    %s222 = sphi 0, %s219
    %s223 = sphi 0, %s222
    %s239 = sphi 0, %s223
    %s245 = sphi 0, %s247
    %s248 = sphi 0, %s245
    %s249 = sphi 0, %s248
    %s265 = sphi 0, %s249
    %s271 = sphi 0, %s273
    %s274 = sphi 0, %s271
    %s275 = sphi 0, %s274
    %s291 = sphi 0, %s275
  $region4: #{shallow_pointnet_feat.6} parent=0 // loop_header_branch
    %20 = sbr.rel (%p18) target = $region8
  $region5: #{shallow_pointnet_feat.6} parent=0 // loop_body
    %s22 = ssub.s32 %s17, 1
    %s23 = ssub.s32 %s17, 2
    %s30 = sadd.s32 1, %s25
    %p31 = scmp.ge.s32.totalorder %s30, 1
    %s32 = scalar_select %p31, 0, %s30
    %s33 = sadd.s32 1, %s24
    %s34 = scalar_select %p31, %s33, %s24
    %p35 = scmp.ge.s32.totalorder %s34, 2
    %s36 = scalar_select %p35, 0, %s34
    %s37 = ssub.s32 %s24, %s36
    %s38 = ssub.s32 %s25, %s32
    %s39 = sor.u32 %s37, %s38
    %p40 = scmp.eq.s32.totalorder %s39, 0
    %s42 = sadd.s32 %s41, 1
    %s43 = scalar_select %p40, %s41, %s42
    %p46 = pneg %p40
    %p47 = scmp.eq.s32.totalorder %s17, 1
    %p48 = por %p46, %p47
    %p49 = scmp.ne.s32.totalorder %s41, %s44
    %p50 = scmp.eq.s32.totalorder %s17, 0
    %p51 = por %p49, %p50
    %p52 = scmp.ne.s32.totalorder %s41, %s44
    %p53 = scmp.eq.s32.totalorder %s22, 1
    %p54 = por %p52, %p53
    %p55 = scmp.ne.s32.totalorder %s44, %s45
    %p56 = scmp.eq.s32.totalorder %s22, 0
    %p57 = por %p55, %p56
    %p58 = scmp.ne.s32.totalorder %s44, %s45
    %p59 = scmp.eq.s32.totalorder %s23, 1
    %p60 = por %p58, %p59
    %p62 = scmp.ne.s32.totalorder %s45, %s61
    %p63 = scmp.eq.s32.totalorder %s23, 0
    %p64 = por %p62, %p63
    %s66 = sadd.s32 %s65, 1
    %p69 = scmp.eq.s32.totalorder %s17, 1
    %p70 = scmp.ne.s32.totalorder %s65, %s67
    %p71 = scmp.eq.s32.totalorder %s17, 0
    %p72 = por %p70, %p71
    %p73 = scmp.ne.s32.totalorder %s65, %s67
    %p74 = scmp.eq.s32.totalorder %s22, 1
    %p75 = por %p73, %p74
    %p76 = scmp.ne.s32.totalorder %s67, %s68
    %p77 = scmp.eq.s32.totalorder %s22, 0
    %p78 = por %p76, %p77
    %p79 = scmp.ne.s32.totalorder %s67, %s68
    %p80 = scmp.eq.s32.totalorder %s23, 1
    %p81 = por %p79, %p80
    %p83 = scmp.ne.s32.totalorder %s68, %s82
    %p84 = scmp.eq.s32.totalorder %s23, 0
    %p85 = por %p83, %p84
    %s87 = sadd.s32 %s86, 1
    %p90 = scmp.eq.s32.totalorder %s17, 1
    %p91 = scmp.ne.s32.totalorder %s86, %s88
    %p92 = scmp.eq.s32.totalorder %s17, 0
    %p93 = por %p91, %p92
    %p94 = scmp.ne.s32.totalorder %s86, %s88
    %p95 = scmp.eq.s32.totalorder %s22, 1
    %p96 = por %p94, %p95
    %p97 = scmp.ne.s32.totalorder %s88, %s89
    %p98 = scmp.eq.s32.totalorder %s22, 0
    %p99 = por %p97, %p98
    %p100 = scmp.ne.s32.totalorder %s88, %s89
    %p101 = scmp.eq.s32.totalorder %s23, 1
    %p102 = por %p100, %p101
    %p104 = scmp.ne.s32.totalorder %s89, %s103
    %p105 = scmp.eq.s32.totalorder %s23, 0
    %p106 = por %p104, %p105
    %s108 = sadd.s32 %s107, 1
    %p111 = scmp.eq.s32.totalorder %s17, 1
    %p112 = scmp.ne.s32.totalorder %s107, %s109
    %p113 = scmp.eq.s32.totalorder %s17, 0
    %p114 = por %p112, %p113
    %p115 = scmp.ne.s32.totalorder %s107, %s109
    %p116 = scmp.eq.s32.totalorder %s22, 1
    %p117 = por %p115, %p116
    %p118 = scmp.ne.s32.totalorder %s109, %s110
    %p119 = scmp.eq.s32.totalorder %s22, 0
    %p120 = por %p118, %p119
    %p121 = scmp.ne.s32.totalorder %s109, %s110
    %p122 = scmp.eq.s32.totalorder %s23, 1
    %p123 = por %p121, %p122
    %p125 = scmp.ne.s32.totalorder %s110, %s124
    %p126 = scmp.eq.s32.totalorder %s23, 0
    %p127 = por %p125, %p126
    %s129 = sadd.s32 %s128, 1
    %p132 = scmp.eq.s32.totalorder %s17, 1
    %p133 = scmp.ne.s32.totalorder %s128, %s130
    %p134 = scmp.eq.s32.totalorder %s17, 0
    %p135 = por %p133, %p134
    %p136 = scmp.ne.s32.totalorder %s128, %s130
    %p137 = scmp.eq.s32.totalorder %s22, 1
    %p138 = por %p136, %p137
    %p139 = scmp.ne.s32.totalorder %s130, %s131
    %p140 = scmp.eq.s32.totalorder %s22, 0
    %p141 = por %p139, %p140
    %p142 = scmp.ne.s32.totalorder %s130, %s131
    %p143 = scmp.eq.s32.totalorder %s23, 1
    %p144 = por %p142, %p143
    %p146 = scmp.ne.s32.totalorder %s131, %s145
    %p147 = scmp.eq.s32.totalorder %s23, 0
    %p148 = por %p146, %p147
    %s150 = sadd.s32 %s149, 1
    %p153 = scmp.eq.s32.totalorder %s17, 1
    %p154 = scmp.ne.s32.totalorder %s149, %s151
    %p155 = scmp.eq.s32.totalorder %s17, 0
    %p156 = por %p154, %p155
    %p157 = scmp.ne.s32.totalorder %s149, %s151
    %p158 = scmp.eq.s32.totalorder %s22, 1
    %p159 = por %p157, %p158
    %p160 = scmp.ne.s32.totalorder %s151, %s152
    %p161 = scmp.eq.s32.totalorder %s22, 0
    %p162 = por %p160, %p161
    %p163 = scmp.ne.s32.totalorder %s151, %s152
    %p164 = scmp.eq.s32.totalorder %s23, 1
    %p165 = por %p163, %p164
    %p167 = scmp.ne.s32.totalorder %s152, %s166
    %p168 = scmp.eq.s32.totalorder %s23, 0
    %p169 = por %p167, %p168
    %s171 = sadd.s32 %s170, 1
    %p174 = scmp.eq.s32.totalorder %s17, 1
    %p175 = scmp.ne.s32.totalorder %s170, %s172
    %p176 = scmp.eq.s32.totalorder %s17, 0
    %p177 = por %p175, %p176
    %p178 = scmp.ne.s32.totalorder %s170, %s172
    %p179 = scmp.eq.s32.totalorder %s22, 1
    %p180 = por %p178, %p179
    %p181 = scmp.ne.s32.totalorder %s172, %s173
    %p182 = scmp.eq.s32.totalorder %s22, 0
    %p183 = por %p181, %p182
    %p184 = scmp.ne.s32.totalorder %s172, %s173
    %p185 = scmp.eq.s32.totalorder %s23, 1
    %p186 = por %p184, %p185
    %p188 = scmp.ne.s32.totalorder %s173, %s187
    %p189 = scmp.eq.s32.totalorder %s23, 0
    %p190 = por %p188, %p189
    %s191 = ssub.s32 %s24, %s36
    %p192 = scmp.eq.s32.totalorder %s191, 0
    %s194 = sadd.s32 %s193, 1
    %s195 = scalar_select %p192, %s193, %s194
    %p198 = pneg %p192
    %p199 = scmp.eq.s32.totalorder %s17, 1
    %p200 = por %p198, %p199
    %p201 = scmp.ne.s32.totalorder %s193, %s196
    %p202 = scmp.eq.s32.totalorder %s17, 0
    %p203 = por %p201, %p202
    %p204 = scmp.ne.s32.totalorder %s193, %s196
    %p205 = scmp.eq.s32.totalorder %s22, 1
    %p206 = por %p204, %p205
    %p207 = scmp.ne.s32.totalorder %s196, %s197
    %p208 = scmp.eq.s32.totalorder %s22, 0
    %p209 = por %p207, %p208
    %p210 = scmp.ne.s32.totalorder %s196, %s197
    %p211 = scmp.eq.s32.totalorder %s23, 1
    %p212 = por %p210, %p211
    %p214 = scmp.ne.s32.totalorder %s197, %s213
    %p215 = scmp.eq.s32.totalorder %s23, 0
    %p216 = por %p214, %p215
    %s217 = ssub.s32 %s24, %s36
    %p218 = scmp.eq.s32.totalorder %s217, 0
    %s220 = sadd.s32 %s219, 1
    %s221 = scalar_select %p218, %s219, %s220
    %p224 = pneg %p218
    %p225 = scmp.eq.s32.totalorder %s17, 1
    %p226 = por %p224, %p225
    %p227 = scmp.ne.s32.totalorder %s219, %s222
    %p228 = scmp.eq.s32.totalorder %s17, 0
    %p229 = por %p227, %p228
    %p230 = scmp.ne.s32.totalorder %s219, %s222
    %p231 = scmp.eq.s32.totalorder %s22, 1
    %p232 = por %p230, %p231
    %p233 = scmp.ne.s32.totalorder %s222, %s223
    %p234 = scmp.eq.s32.totalorder %s22, 0
    %p235 = por %p233, %p234
    %p236 = scmp.ne.s32.totalorder %s222, %s223
    %p237 = scmp.eq.s32.totalorder %s23, 1
    %p238 = por %p236, %p237
    %p240 = scmp.ne.s32.totalorder %s223, %s239
    %p241 = scmp.eq.s32.totalorder %s23, 0
    %p242 = por %p240, %p241
    %s243 = ssub.s32 %s24, %s36
    %p244 = scmp.eq.s32.totalorder %s243, 0
    %s246 = sadd.s32 %s245, 1
    %s247 = scalar_select %p244, %s245, %s246
    %p250 = pneg %p244
    %p251 = scmp.eq.s32.totalorder %s17, 1
    %p252 = por %p250, %p251
    %p253 = scmp.ne.s32.totalorder %s245, %s248
    %p254 = scmp.eq.s32.totalorder %s17, 0
    %p255 = por %p253, %p254
    %p256 = scmp.ne.s32.totalorder %s245, %s248
    %p257 = scmp.eq.s32.totalorder %s22, 1
    %p258 = por %p256, %p257
    %p259 = scmp.ne.s32.totalorder %s248, %s249
    %p260 = scmp.eq.s32.totalorder %s22, 0
    %p261 = por %p259, %p260
    %p262 = scmp.ne.s32.totalorder %s248, %s249
    %p263 = scmp.eq.s32.totalorder %s23, 1
    %p264 = por %p262, %p263
    %p266 = scmp.ne.s32.totalorder %s249, %s265
    %p267 = scmp.eq.s32.totalorder %s23, 0
    %p268 = por %p266, %p267
    %s269 = ssub.s32 %s24, %s36
    %p270 = scmp.eq.s32.totalorder %s269, 0
    %s272 = sadd.s32 %s271, 1
    %s273 = scalar_select %p270, %s271, %s272
    %p276 = pneg %p270
    %p277 = scmp.eq.s32.totalorder %s17, 1
    %p278 = por %p276, %p277
    %p279 = scmp.ne.s32.totalorder %s271, %s274
    %p280 = scmp.eq.s32.totalorder %s17, 0
    %p281 = por %p279, %p280
    %p282 = scmp.ne.s32.totalorder %s271, %s274
    %p283 = scmp.eq.s32.totalorder %s22, 1
    %p284 = por %p282, %p283
    %p285 = scmp.ne.s32.totalorder %s274, %s275
    %p286 = scmp.eq.s32.totalorder %s22, 0
    %p287 = por %p285, %p286
    %p288 = scmp.ne.s32.totalorder %s274, %s275
    %p289 = scmp.eq.s32.totalorder %s23, 1
    %p290 = por %p288, %p289
    %p292 = scmp.ne.s32.totalorder %s275, %s291
    %p293 = scmp.eq.s32.totalorder %s23, 0
    %p294 = por %p292, %p293
    %p295 = scmp.le.s32.totalorder 1, %s17
    %p296 = scmp.lt.s32.totalorder %s17, 3
    %p297 = pnand %p295, %p296
    %p298 = pneg %p297
    // Predicated region
    $region9: #{shallow_pointnet_feat.6} parent=5 // pred_check
      _
    $region10: #{shallow_pointnet_feat.6} parent=5 // pred_check_branch
      %300 = sbr.rel (%p297) target = $region12
    $region11: #{shallow_pointnet_feat.6} parent=5 // pred_region
      %s301 = ssub.s32 %s17, 1
      // Predicated region
      $region13: #{shallow_pointnet_feat.6} parent=11 // pred_check
        %p302 = pneg %p78
      $region14: #{shallow_pointnet_feat.6} parent=11 // pred_check_branch
        %304 = sbr.rel (%p302) target = $region16
      $region15: #{shallow_pointnet_feat.6} parent=11 // pred_region
        _
      $region16: #{shallow_pointnet_feat.6} parent=11 // pred_fallthru
        _
      // Predicated region
      $region17: #{shallow_pointnet_feat.6} parent=11 // pred_check
        %p305 = pneg %p99
      $region18: #{shallow_pointnet_feat.6} parent=11 // pred_check_branch
        %307 = sbr.rel (%p305) target = $region20
      $region19: #{shallow_pointnet_feat.6} parent=11 // pred_region
        _
      $region20: #{shallow_pointnet_feat.6} parent=11 // pred_fallthru
        _
      // Predicated region
      $region21: #{shallow_pointnet_feat.6} parent=11 // pred_check
        %p308 = pneg %p120
      $region22: #{shallow_pointnet_feat.6} parent=11 // pred_check_branch
        %310 = sbr.rel (%p308) target = $region24
      $region23: #{shallow_pointnet_feat.6} parent=11 // pred_region
        _
      $region24: #{shallow_pointnet_feat.6} parent=11 // pred_fallthru
        _
      // Predicated region
      $region25: #{shallow_pointnet_feat.6} parent=11 // pred_check
        %p311 = pneg %p141
      $region26: #{shallow_pointnet_feat.6} parent=11 // pred_check_branch
        %313 = sbr.rel (%p311) target = $region28
      $region27: #{shallow_pointnet_feat.6} parent=11 // pred_region
        _
      $region28: #{shallow_pointnet_feat.6} parent=11 // pred_fallthru
        _
      // Predicated region
      $region29: #{shallow_pointnet_feat.6} parent=11 // pred_check
        %p314 = pneg %p162
      $region30: #{shallow_pointnet_feat.6} parent=11 // pred_check_branch
        %316 = sbr.rel (%p314) target = $region32
      $region31: #{shallow_pointnet_feat.6} parent=11 // pred_region
        _
      $region32: #{shallow_pointnet_feat.6} parent=11 // pred_fallthru
        _
      // Predicated region
      $region33: #{shallow_pointnet_feat.6} parent=11 // pred_check
        %p317 = pneg %p183
      $region34: #{shallow_pointnet_feat.6} parent=11 // pred_check_branch
        %319 = sbr.rel (%p317) target = $region36
      $region35: #{shallow_pointnet_feat.6} parent=11 // pred_region
        _
      $region36: #{shallow_pointnet_feat.6} parent=11 // pred_fallthru
        _
    $region12: #{shallow_pointnet_feat.6} parent=5 // pred_fallthru
      _
    %p320 = scmp.lt.s32.totalorder %s17, 2
    // Predicated region
    $region37: #{shallow_pointnet_feat.6} parent=5 // pred_check
      %p321 = pneg %p320
    $region38: #{shallow_pointnet_feat.6} parent=5 // pred_check_branch
      %323 = sbr.rel (%p321) target = $region40
    $region39: #{shallow_pointnet_feat.6} parent=5 // pred_region
      // Predicated region
      $region41: #{shallow_pointnet_feat.6} parent=39 // pred_check
        %p324 = pneg %p51
      $region42: #{shallow_pointnet_feat.6} parent=39 // pred_check_branch
        %326 = sbr.rel (%p324) target = $region44
      $region43: #{shallow_pointnet_feat.6} parent=39 // pred_region
        %s327 = smul.u32 8, %s25
        %p328 = scmp.lt.s32.totalorder %s24, 1
        %s329 = scalar_select %p328, %s24, 1
        %p330 = scmp.lt.s32.totalorder %s327, 7
        %s331 = scalar_select %p330, %s327, 7
        %s332 = smul.addr %s329, 8
        %s333 = sadd.s32 %s331, %s332
        %s334 = smul.addr %s333, 8
        %s335 = scalar_lea.vmem %s0, %s334
        %s336 = smul.u32 8, %s25
      $region44: #{shallow_pointnet_feat.6} parent=39 // pred_fallthru
        _
    $region40: #{shallow_pointnet_feat.6} parent=5 // pred_fallthru
      _
    %p337 = scmp.le.s32.totalorder 1, %s17
    %p338 = scmp.lt.s32.totalorder %s17, 3
    %p339 = pnand %p337, %p338
    %p340 = pneg %p339
    // Predicated region
    $region45: #{shallow_pointnet_feat.6} parent=5 // pred_check
      _
    $region46: #{shallow_pointnet_feat.6} parent=5 // pred_check_branch
      %342 = sbr.rel (%p339) target = $region48
    $region47: #{shallow_pointnet_feat.6} parent=5 // pred_region
      %s343 = ssub.s32 %s17, 1
      %s344 = smul.u32 8, %s27
      %p345 = scmp.lt.s32.totalorder %s26, 1
      %s346 = scalar_select %p345, %s26, 1
      %p347 = scmp.lt.s32.totalorder %s344, 7
      %s348 = scalar_select %p347, %s344, 7
      %s349 = smul.addr %s346, 8
      %s350 = sadd.s32 %s348, %s349
      %s351 = smul.addr %s350, 8
      %s352 = scalar_lea.vmem %s0, %s351
      %p353 = pneg %p57
      %p354 = pneg %p54
      %p355 = pneg %p78
      %p356 = pneg %p75
      %p357 = pneg %p99
      %p358 = pneg %p96
      %p359 = pneg %p120
      %p360 = pneg %p117
      %p361 = pneg %p141
      %p362 = pneg %p138
      %p363 = pneg %p162
      %p364 = pneg %p159
      %p365 = pneg %p183
      %p366 = pneg %p180
      %p367 = pneg %p209
      %p368 = pneg %p206
      %p369 = scmp.lt.s32.totalorder %s26, 1
      %s370 = scalar_select %p369, %s26, 1
      %s371 = scalar_lea.vmem %s7, %s370
      %p372 = pneg %p235
      %p373 = pneg %p232
      %p374 = scmp.lt.s32.totalorder %s26, 1
      %s375 = scalar_select %p374, %s26, 1
      %s376 = scalar_lea.vmem %s8, %s375
      %p377 = pneg %p261
      %p378 = pneg %p258
      %p379 = scmp.lt.s32.totalorder %s26, 1
      %s380 = scalar_select %p379, %s26, 1
      %s381 = scalar_lea.vmem %s9, %s380
      %p382 = pneg %p287
      %p383 = pneg %p284
      %p384 = scmp.lt.s32.totalorder %s26, 1
      %s385 = scalar_select %p384, %s26, 1
      %s386 = scalar_lea.vmem %s10, %s385
      %s387 = smul.u32 8, %s27
      %p388 = scmp.lt.s32.totalorder %s26, 1
      %s389 = scalar_select %p388, %s26, 1
      %p390 = scmp.lt.s32.totalorder %s387, 7
      %s391 = scalar_select %p390, %s387, 7
      %s392 = smul.addr %s389, 8
      %s393 = sadd.s32 %s391, %s392
      %s394 = smul.addr %s393, 8
      %s395 = scalar_lea.vmem %s0, %s394
      %s396 = smul.u32 8, %s27
      %p397 = scmp.lt.s32.totalorder %s26, 1
      %s398 = scalar_select %p397, %s26, 1
      %s399 = scalar_lea.vmem %s7, %s398
      %p400 = scmp.lt.s32.totalorder %s26, 1
      %s401 = scalar_select %p400, %s26, 1
      %s402 = scalar_lea.vmem %s8, %s401
      %p403 = scmp.lt.s32.totalorder %s26, 1
      %s404 = scalar_select %p403, %s26, 1
      %s405 = scalar_lea.vmem %s9, %s404
      %p406 = scmp.lt.s32.totalorder %s26, 1
      %s407 = scalar_select %p406, %s26, 1
      %s408 = scalar_lea.vmem %s10, %s407
      %v409 = vld [vmem:[%s395] sm:$0xff]
      %v410 = vld [vmem:[%s395 + $0x8] sm:$0xff]
      %v411 = vld [vmem:[%s395 + $0x10] sm:$0xff]
      %v412 = vld [vmem:[%s395 + $0x18] sm:$0xff]
      %v413 = vld [vmem:[%s395 + $0x20] sm:$0xff]
      %v414 = vld [vmem:[%s395 + $0x28] sm:$0xff]
      %v415 = vld [vmem:[%s395 + $0x30] sm:$0xff]
      %v416 = vld [vmem:[%s395 + $0x38] sm:$0xff]
      %v417 = vld [vmem:[%s1] sm:$0x3]
      %v418 = vld [vmem:[%s2] sm:$0x1]
      %420 = vset.pattern.permute.xlu0 0
      %421 = vperm.xlu0 %420, %v409
      %v422 = vpop.permute.xlu0 %421
      %425 = vset.pattern.permute.xlu0 0
      %426 = vperm.xlu0 %425, %v410
      %v427 = vpop.permute.xlu0 %426
      %430 = vset.pattern.permute.xlu0 0
      %431 = vperm.xlu0 %430, %v411
      %v432 = vpop.permute.xlu0 %431
      %435 = vset.pattern.permute.xlu0 0
      %436 = vperm.xlu0 %435, %v412
      %v437 = vpop.permute.xlu0 %436
      %440 = vset.pattern.permute.xlu0 0
      %441 = vperm.xlu0 %440, %v413
      %v442 = vpop.permute.xlu0 %441
      %445 = vset.pattern.permute.xlu0 0
      %446 = vperm.xlu0 %445, %v414
      %v447 = vpop.permute.xlu0 %446
      %450 = vset.pattern.permute.xlu0 0
      %451 = vperm.xlu0 %450, %v415
      %v452 = vpop.permute.xlu0 %451
      %455 = vset.pattern.permute.xlu0 0
      %456 = vperm.xlu0 %455, %v416
      %v457 = vpop.permute.xlu0 %456
      %v459 = vperm.slane %v417, 0
      %v460 = vmul.f32 %v422, %v459
      %v461 = vmul.f32 %v427, %v459
      %v462 = vmul.f32 %v432, %v459
      %v463 = vmul.f32 %v437, %v459
      %v464 = vmul.f32 %v442, %v459
      %v465 = vmul.f32 %v447, %v459
      %v466 = vmul.f32 %v452, %v459
      %v467 = vmul.f32 %v457, %v459
      %v469 = vperm.slane %v418, 0
      %v471 = vadd.f32 %v460, %v469
      %v472 = vadd.f32 %v461, %v469
      %v473 = vadd.f32 %v462, %v469
      %v474 = vadd.f32 %v463, %v469
      %v475 = vadd.f32 %v464, %v469
      %v476 = vadd.f32 %v465, %v469
      %v477 = vadd.f32 %v466, %v469
      %v478 = vadd.f32 %v467, %v469
      %479 = vset.pattern.permute.xlu0 1
      %480 = vperm.xlu0 %479, %v409
      %v481 = vpop.permute.xlu0 %480
      %483 = vset.pattern.permute.xlu0 1
      %484 = vperm.xlu0 %483, %v410
      %v485 = vpop.permute.xlu0 %484
      %487 = vset.pattern.permute.xlu0 1
      %488 = vperm.xlu0 %487, %v411
      %v489 = vpop.permute.xlu0 %488
      %491 = vset.pattern.permute.xlu0 1
      %492 = vperm.xlu0 %491, %v412
      %v493 = vpop.permute.xlu0 %492
      %495 = vset.pattern.permute.xlu0 1
      %496 = vperm.xlu0 %495, %v413
      %v497 = vpop.permute.xlu0 %496
      %499 = vset.pattern.permute.xlu0 1
      %500 = vperm.xlu0 %499, %v414
      %v501 = vpop.permute.xlu0 %500
      %503 = vset.pattern.permute.xlu0 1
      %504 = vperm.xlu0 %503, %v415
      %v505 = vpop.permute.xlu0 %504
      %507 = vset.pattern.permute.xlu0 1
      %508 = vperm.xlu0 %507, %v416
      %v509 = vpop.permute.xlu0 %508
      %v511 = vperm.slane %v417, 1
      %v512 = vmul.f32 %v481, %v511
      %v513 = vmul.f32 %v485, %v511
      %v514 = vmul.f32 %v489, %v511
      %v515 = vmul.f32 %v493, %v511
      %v516 = vmul.f32 %v497, %v511
      %v517 = vmul.f32 %v501, %v511
      %v518 = vmul.f32 %v505, %v511
      %v519 = vmul.f32 %v509, %v511
      %v520 = vadd.f32 %v471, %v512
      %v521 = vadd.f32 %v472, %v513
      %v522 = vadd.f32 %v473, %v514
      %v523 = vadd.f32 %v474, %v515
      %v524 = vadd.f32 %v475, %v516
      %v525 = vadd.f32 %v476, %v517
      %v526 = vadd.f32 %v477, %v518
      %v527 = vadd.f32 %v478, %v519
      %v528 = vld [vmem:[%s3] sm:$0x1]
      %v530 = vperm.slane %v528, 0
      %v532 = vmul.f32 %v520, %v530
      %v533 = vmul.f32 %v521, %v530
      %v534 = vmul.f32 %v522, %v530
      %v535 = vmul.f32 %v523, %v530
      %v536 = vmul.f32 %v524, %v530
      %v537 = vmul.f32 %v525, %v530
      %v538 = vmul.f32 %v526, %v530
      %v539 = vmul.f32 %v527, %v530
      %v540 = vld [vmem:[%s4] sm:$0x1]
      %v542 = vperm.slane %v540, 0
      %v544 = vadd.f32 %v532, %v542
      %v545 = vadd.f32 %v533, %v542
      %v546 = vadd.f32 %v534, %v542
      %v547 = vadd.f32 %v535, %v542
      %v548 = vadd.f32 %v536, %v542
      %v549 = vadd.f32 %v537, %v542
      %v550 = vadd.f32 %v538, %v542
      %v551 = vadd.f32 %v539, %v542
      %v552 = vmax.f32 %v544, 0.0
      %v553 = vmax.f32 %v545, 0.0
      %v554 = vmax.f32 %v546, 0.0
      %v555 = vmax.f32 %v547, 0.0
      %v556 = vmax.f32 %v548, 0.0
      %v557 = vmax.f32 %v549, 0.0
      %v558 = vmax.f32 %v550, 0.0
      %v559 = vmax.f32 %v551, 0.0
      %v560 = vld [vmem:[%s5] sm:$0xff]
      %v561 = vld [vmem:[%s5 + $0x8] sm:$0xff]
      %v562 = vld [vmem:[%s5 + $0x10] sm:$0xff]
      %v563 = vld [vmem:[%s5 + $0x18] sm:$0xff]
      %v564 = vld [vmem:[%s5 + $0x20] sm:$0xff]
      %v565 = vld [vmem:[%s5 + $0x28] sm:$0xff]
      %v566 = vld [vmem:[%s5 + $0x30] sm:$0xff]
      %v567 = vld [vmem:[%s5 + $0x38] sm:$0xff]
      %v568 = vld [vmem:[%s5 + $0x40] sm:$0xff]
      %v569 = vld [vmem:[%s5 + $0x48] sm:$0xff]
      %v570 = vld [vmem:[%s5 + $0x50] sm:$0xff]
      %v571 = vld [vmem:[%s5 + $0x58] sm:$0xff]
      %v572 = vld [vmem:[%s5 + $0x60] sm:$0xff]
      %v573 = vld [vmem:[%s5 + $0x68] sm:$0xff]
      %v574 = vld [vmem:[%s5 + $0x70] sm:$0xff]
      %v575 = vld [vmem:[%s5 + $0x78] sm:$0xff]
      %v576 = vld [vmem:[%s6] sm:$0x1]
      %v578 = vperm.slane %v576, 0
      %580 = vmatpush.msra.mxu0 %v575
      %581 = vmatpush.msra.mxu0 %v574
      %582 = vmatpush.msra.mxu0 %v573
      %583 = vmatpush.msra.mxu0 %v572
      %584 = vmatpush.msra.mxu0 %v571
      %585 = vmatpush.msra.mxu0 %v570
      %586 = vmatpush.msra.mxu0 %v569
      %587 = vmatpush.msra.mxu0 %v568
      %588 = vmatpush.msra.mxu0 %v567
      %589 = vmatpush.msra.mxu0 %v566
      %590 = vmatpush.msra.mxu0 %v565
      %591 = vmatpush.msra.mxu0 %v564
      %592 = vmatpush.msra.mxu0 %v563
      %593 = vmatpush.msra.mxu0 %v562
      %594 = vmatpush.msra.mxu0 %v561
      %595 = vmatpush.msra.mxu0 %v560
      %596 = vmatmul.f32.gmra.mxu0 %v552
      %v597 = vpop.f32.mrf.mxu0
      %v598 = vadd.f32 %v578, %v597
      %599 = vmatmul.f32.gmra.mxu0 %v553
      %v600 = vpop.f32.mrf.mxu0
      %v601 = vadd.f32 %v578, %v600
      %602 = vmatmul.f32.gmra.mxu0 %v554
      %v603 = vpop.f32.mrf.mxu0
      %v604 = vadd.f32 %v578, %v603
      %605 = vmatmul.f32.gmra.mxu0 %v555
      %v606 = vpop.f32.mrf.mxu0
      %v607 = vadd.f32 %v578, %v606
      %608 = vmatmul.f32.gmra.mxu0 %v556
      %v609 = vpop.f32.mrf.mxu0
      %v610 = vadd.f32 %v578, %v609
      %611 = vmatmul.f32.gmra.mxu0 %v557
      %v612 = vpop.f32.mrf.mxu0
      %v613 = vadd.f32 %v578, %v612
      %614 = vmatmul.f32.gmra.mxu0 %v558
      %v615 = vpop.f32.mrf.mxu0
      %v616 = vadd.f32 %v578, %v615
      %617 = vmatmul.f32.gmra.mxu0 %v559
      %v618 = vpop.f32.mrf.mxu0
      %v619 = vadd.f32 %v578, %v618
      %620 = vdwg.mxu0
      %v621 = vadd.f32 %v598, %v601
      %v622 = vadd.f32 %v621, %v604
      %v623 = vadd.f32 %v622, %v607
      %v624 = vadd.f32 %v623, %v610
      %v625 = vadd.f32 %v624, %v613
      %v626 = vadd.f32 %v625, %v616
      %v627 = vadd.f32 %v626, %v619
      %v628 = vrot.slane %v627, 4
      %v629 = vadd.f32 %v627, %v628
      %v630 = vrot.slane %v629, 2
      %v631 = vadd.f32 %v629, %v630
      %v632 = vrot.slane %v631, 1
      %v633 = vadd.f32 %v631, %v632
      %v634 = vmul.f32 %v598, %v598
      %v635 = vmul.f32 %v601, %v601
      %v636 = vmul.f32 %v604, %v604
      %v637 = vmul.f32 %v607, %v607
      %v638 = vmul.f32 %v610, %v610
      %v639 = vmul.f32 %v613, %v613
      %v640 = vmul.f32 %v616, %v616
      %v641 = vmul.f32 %v619, %v619
      %v642 = vadd.f32 %v634, %v635
      %v643 = vadd.f32 %v642, %v636
      %v644 = vadd.f32 %v643, %v637
      %v645 = vadd.f32 %v644, %v638
      %v646 = vadd.f32 %v645, %v639
      %v647 = vadd.f32 %v646, %v640
      %v648 = vadd.f32 %v647, %v641
      %v649 = vrot.slane %v648, 4
      %v650 = vadd.f32 %v648, %v649
      %v651 = vrot.slane %v650, 2
      %v652 = vadd.f32 %v650, %v651
      %v653 = vrot.slane %v652, 1
      %v654 = vadd.f32 %v652, %v653
      %v655 = vmax.f32 %v598, %v610
      %v656 = vmax.f32 %v601, %v613
      %v657 = vmax.f32 %v604, %v616
      %v658 = vmax.f32 %v607, %v619
      %v659 = vmax.f32 %v655, %v656
      %v660 = vmax.f32 %v657, %v658
      %v661 = vmax.f32 %v659, %v660
      %v662 = vrot.slane %v661, 4
      %v663 = vmax.f32 %v661, %v662
      %v664 = vrot.slane %v663, 2
      %v665 = vmax.f32 %v663, %v664
      %v666 = vrot.slane %v665, 1
      %v667 = vmax.f32 %v665, %v666
      %v668 = vmin.f32 %v598, %v610
      %v669 = vmin.f32 %v601, %v613
      %v670 = vmin.f32 %v604, %v616
      %v671 = vmin.f32 %v607, %v619
      %v672 = vmin.f32 %v668, %v669
      %v673 = vmin.f32 %v670, %v671
      %v674 = vmin.f32 %v672, %v673
      %v675 = vrot.slane %v674, 4
      %v676 = vmin.f32 %v674, %v675
      %v677 = vrot.slane %v676, 2
      %v678 = vmin.f32 %v676, %v677
      %v679 = vrot.slane %v678, 1
      %v680 = vmin.f32 %v678, %v679
      %p681 = scmp.eq.s32.totalorder %s27, 0
      // Predicated region
      $region49: #{shallow_pointnet_feat.6} parent=47 // pred_check
        %p682 = pneg %p681
      $region50: #{shallow_pointnet_feat.6} parent=47 // pred_check_branch
        %684 = sbr.rel (%p682) target = $region52
      $region51: #{shallow_pointnet_feat.6} parent=47 // pred_region
        %685 = vst [vmem:[%s399] sm:$0x1] 0.0
        %686 = vst [vmem:[%s402] sm:$0x1] 0.0
        %687 = vst [vmem:[%s405] sm:$0x1] -inf
        %688 = vst [vmem:[%s408] sm:$0x1] inf
      $region52: #{shallow_pointnet_feat.6} parent=47 // pred_fallthru
        _
      %v689 = vld [vmem:[%s399] sm:$0x1]
      %v690 = vadd.f32 %v689, %v633
      %691 = vst [vmem:[%s399] sm:$0x1] %v690
      %v692 = vld [vmem:[%s402] sm:$0x1]
      %v693 = vadd.f32 %v692, %v654
      %694 = vst [vmem:[%s402] sm:$0x1] %v693
      %v695 = vld [vmem:[%s405] sm:$0x1]
      %v696 = vmax.f32 %v695, %v667
      %697 = vst [vmem:[%s405] sm:$0x1] %v696
      %v698 = vld [vmem:[%s408] sm:$0x1]
      %v699 = vmin.f32 %v698, %v680
      %700 = vst [vmem:[%s408] sm:$0x1] %v699
      %p701 = scmp.lt.s32.totalorder %s26, 1
      %s702 = scalar_select %p701, %s26, 1
      %s703 = scalar_lea.vmem %s7, %s702
      %p704 = scmp.lt.s32.totalorder %s26, 1
      %s705 = scalar_select %p704, %s26, 1
      %s706 = scalar_lea.vmem %s8, %s705
      %p707 = scmp.lt.s32.totalorder %s26, 1
      %s708 = scalar_select %p707, %s26, 1
      %s709 = scalar_lea.vmem %s9, %s708
      %p710 = scmp.lt.s32.totalorder %s26, 1
      %s711 = scalar_select %p710, %s26, 1
      %s712 = scalar_lea.vmem %s10, %s711
      // Predicated region
      $region53: #{shallow_pointnet_feat.6} parent=47 // pred_check
        %p713 = pneg %p206
      $region54: #{shallow_pointnet_feat.6} parent=47 // pred_check_branch
        %715 = sbr.rel (%p713) target = $region56
      $region55: #{shallow_pointnet_feat.6} parent=47 // pred_region
        _
      $region56: #{shallow_pointnet_feat.6} parent=47 // pred_fallthru
        _
      // Predicated region
      $region57: #{shallow_pointnet_feat.6} parent=47 // pred_check
        %p716 = pneg %p232
      $region58: #{shallow_pointnet_feat.6} parent=47 // pred_check_branch
        %718 = sbr.rel (%p716) target = $region60
      $region59: #{shallow_pointnet_feat.6} parent=47 // pred_region
        _
      $region60: #{shallow_pointnet_feat.6} parent=47 // pred_fallthru
        _
      // Predicated region
      $region61: #{shallow_pointnet_feat.6} parent=47 // pred_check
        %p719 = pneg %p258
      $region62: #{shallow_pointnet_feat.6} parent=47 // pred_check_branch
        %721 = sbr.rel (%p719) target = $region64
      $region63: #{shallow_pointnet_feat.6} parent=47 // pred_region
        _
      $region64: #{shallow_pointnet_feat.6} parent=47 // pred_fallthru
        _
      // Predicated region
      $region65: #{shallow_pointnet_feat.6} parent=47 // pred_check
        %p722 = pneg %p284
      $region66: #{shallow_pointnet_feat.6} parent=47 // pred_check_branch
        %724 = sbr.rel (%p722) target = $region68
      $region67: #{shallow_pointnet_feat.6} parent=47 // pred_region
        _
      $region68: #{shallow_pointnet_feat.6} parent=47 // pred_fallthru
        _
    $region48: #{shallow_pointnet_feat.6} parent=5 // pred_fallthru
      _
    %p725 = scmp.le.s32.totalorder 2, %s17
    // Predicated region
    $region69: #{shallow_pointnet_feat.6} parent=5 // pred_check
      %p726 = pneg %p725
    $region70: #{shallow_pointnet_feat.6} parent=5 // pred_check_branch
      %728 = sbr.rel (%p726) target = $region72
    $region71: #{shallow_pointnet_feat.6} parent=5 // pred_region
      %s729 = ssub.s32 %s17, 2
      // Predicated region
      $region73: #{shallow_pointnet_feat.6} parent=71 // pred_check
        %p730 = pneg %p212
      $region74: #{shallow_pointnet_feat.6} parent=71 // pred_check_branch
        %732 = sbr.rel (%p730) target = $region76
      $region75: #{shallow_pointnet_feat.6} parent=71 // pred_region
        %p733 = scmp.lt.s32.totalorder %s28, 1
        %s734 = scalar_select %p733, %s28, 1
        %s735 = scalar_lea.vmem %s7, %s734
      $region76: #{shallow_pointnet_feat.6} parent=71 // pred_fallthru
        _
      // Predicated region
      $region77: #{shallow_pointnet_feat.6} parent=71 // pred_check
        %p736 = pneg %p238
      $region78: #{shallow_pointnet_feat.6} parent=71 // pred_check_branch
        %738 = sbr.rel (%p736) target = $region80
      $region79: #{shallow_pointnet_feat.6} parent=71 // pred_region
        %p739 = scmp.lt.s32.totalorder %s28, 1
        %s740 = scalar_select %p739, %s28, 1
        %s741 = scalar_lea.vmem %s8, %s740
      $region80: #{shallow_pointnet_feat.6} parent=71 // pred_fallthru
        _
      // Predicated region
      $region81: #{shallow_pointnet_feat.6} parent=71 // pred_check
        %p742 = pneg %p264
      $region82: #{shallow_pointnet_feat.6} parent=71 // pred_check_branch
        %744 = sbr.rel (%p742) target = $region84
      $region83: #{shallow_pointnet_feat.6} parent=71 // pred_region
        %p745 = scmp.lt.s32.totalorder %s28, 1
        %s746 = scalar_select %p745, %s28, 1
        %s747 = scalar_lea.vmem %s9, %s746
      $region84: #{shallow_pointnet_feat.6} parent=71 // pred_fallthru
        _
      // Predicated region
      $region85: #{shallow_pointnet_feat.6} parent=71 // pred_check
        %p748 = pneg %p290
      $region86: #{shallow_pointnet_feat.6} parent=71 // pred_check_branch
        %750 = sbr.rel (%p748) target = $region88
      $region87: #{shallow_pointnet_feat.6} parent=71 // pred_region
        %p751 = scmp.lt.s32.totalorder %s28, 1
        %s752 = scalar_select %p751, %s28, 1
        %s753 = scalar_lea.vmem %s10, %s752
      $region88: #{shallow_pointnet_feat.6} parent=71 // pred_fallthru
        _
    $region72: #{shallow_pointnet_feat.6} parent=5 // pred_fallthru
      _
  $region6: #{shallow_pointnet_feat.6} parent=0 // loop_footer
    %s21 = sadd.s32 1, %s17
  $region7: #{shallow_pointnet_feat.6} parent=0 // loop_footer_branch
    %16 = sbr.rel target = $region3
  $region8: #{shallow_pointnet_feat.6} parent=0 // loop_exit
    _

// kernel: shallow_pointnet_feat.8
$region0: #{shallow_pointnet_feat.8}
  #allocation0 [shape = 'u32[]', space=smem, size = 0x4, offset = 0x4, fixed_abs, tag = 'smem constant byte address 0x4 - core index']
  #allocation1 [shape = 'u32[72,128]{1,0:T(1,128)}', space=vmem, size = 0x9000, scoped, tag = 'internal scratch']
  %s0 = inlined_call_operand.vmem [shape: f32[2,64,2], index: 0, kind: input, shape index: {}]
  %s1 = inlined_call_operand.vmem [shape: f32[2,2,64], index: 1, kind: input, shape index: {}]
  %s2 = inlined_call_operand.vmem [shape: f32[1,64], index: 2, kind: input, shape index: {}]
  %s3 = inlined_call_operand.vmem [shape: f32[2,1,64], index: 3, kind: output, shape index: {0}]
  %s4 = inlined_call_operand.vmem [shape: f32[2,1,64], index: 4, kind: output, shape index: {1}]
  %5 = xla_tuple %s3, %s4
  %s6 = sld [smem:[#allocation0]]
  $region57: #{shallow_pointnet_feat.8} parent=0
    _
  %s8 = ssub.s32 1, %s6
  %s9 = scalar_select 0, %s8, %s6
  loop: start=0, step=1, limit=4
  $region2: #{shallow_pointnet_feat.8} parent=0 // loop_pre_header
    _
  $region3: #{shallow_pointnet_feat.8} parent=0 // loop_header
    %s11 = sphi 0, %s15
    %p12 = scmp.ge.s32.totalorder %s11, 4
    %s18 = sphi 0, %s30
    %s19 = sphi 0, %s26
    %s20 = sphi 0, %s18
    %s21 = sphi 0, %s19
    %s22 = sphi 0, %s20
    %s23 = sphi 0, %s21
    %s35 = sphi 0, %s37
    %s38 = sphi 0, %s35
    %s39 = sphi 0, %s38
    %s55 = sphi 0, %s39
    %s61 = sphi 0, %s63
    %s64 = sphi 0, %s61
    %s65 = sphi 0, %s64
    %s81 = sphi 0, %s65
    %s85 = sphi 0, %s85
    %s87 = sphi 0, %s85
    %s88 = sphi 0, %s87
    %s102 = sphi 0, %s88
    %s108 = sphi 0, %s110
    %s111 = sphi 0, %s108
    %s112 = sphi 0, %s111
    %s128 = sphi 0, %s112
    %s134 = sphi 0, %s136
    %s137 = sphi 0, %s134
    %s138 = sphi 0, %s137
    %s154 = sphi 0, %s138
  $region4: #{shallow_pointnet_feat.8} parent=0 // loop_header_branch
    %14 = sbr.rel (%p12) target = $region8
  $region5: #{shallow_pointnet_feat.8} parent=0 // loop_body
    %s16 = ssub.s32 %s11, 1
    %s17 = ssub.s32 %s11, 2
    %s24 = sadd.s32 1, %s19
    %p25 = scmp.ge.s32.totalorder %s24, 1
    %s26 = scalar_select %p25, 0, %s24
    %s27 = sadd.s32 1, %s18
    %s28 = scalar_select %p25, %s27, %s18
    %p29 = scmp.ge.s32.totalorder %s28, 2
    %s30 = scalar_select %p29, 0, %s28
    %s31 = ssub.s32 %s18, %s30
    %s32 = ssub.s32 %s19, %s26
    %s33 = sor.u32 %s31, %s32
    %p34 = scmp.eq.s32.totalorder %s33, 0
    %s36 = sadd.s32 %s35, 1
    %s37 = scalar_select %p34, %s35, %s36
    %p40 = pneg %p34
    %p41 = scmp.eq.s32.totalorder %s11, 1
    %p42 = por %p40, %p41
    %p43 = scmp.ne.s32.totalorder %s35, %s38
    %p44 = scmp.eq.s32.totalorder %s11, 0
    %p45 = por %p43, %p44
    %p46 = scmp.ne.s32.totalorder %s35, %s38
    %p47 = scmp.eq.s32.totalorder %s16, 1
    %p48 = por %p46, %p47
    %p49 = scmp.ne.s32.totalorder %s38, %s39
    %p50 = scmp.eq.s32.totalorder %s16, 0
    %p51 = por %p49, %p50
    %p52 = scmp.ne.s32.totalorder %s38, %s39
    %p53 = scmp.eq.s32.totalorder %s17, 1
    %p54 = por %p52, %p53
    %p56 = scmp.ne.s32.totalorder %s39, %s55
    %p57 = scmp.eq.s32.totalorder %s17, 0
    %p58 = por %p56, %p57
    %s59 = ssub.s32 %s18, %s30
    %p60 = scmp.eq.s32.totalorder %s59, 0
    %s62 = sadd.s32 %s61, 1
    %s63 = scalar_select %p60, %s61, %s62
    %p66 = pneg %p60
    %p67 = scmp.eq.s32.totalorder %s11, 1
    %p68 = por %p66, %p67
    %p69 = scmp.ne.s32.totalorder %s61, %s64
    %p70 = scmp.eq.s32.totalorder %s11, 0
    %p71 = por %p69, %p70
    %p72 = scmp.ne.s32.totalorder %s61, %s64
    %p73 = scmp.eq.s32.totalorder %s16, 1
    %p74 = por %p72, %p73
    %p75 = scmp.ne.s32.totalorder %s64, %s65
    %p76 = scmp.eq.s32.totalorder %s16, 0
    %p77 = por %p75, %p76
    %p78 = scmp.ne.s32.totalorder %s64, %s65
    %p79 = scmp.eq.s32.totalorder %s17, 1
    %p80 = por %p78, %p79
    %p82 = scmp.ne.s32.totalorder %s65, %s81
    %p83 = scmp.eq.s32.totalorder %s17, 0
    %p84 = por %p82, %p83
    %s86 = sadd.s32 %s85, 1
    %p89 = scmp.eq.s32.totalorder %s11, 1
    %p90 = scmp.ne.s32.totalorder %s85, %s87
    %p91 = scmp.eq.s32.totalorder %s11, 0
    %p92 = por %p90, %p91
    %p93 = scmp.ne.s32.totalorder %s85, %s87
    %p94 = scmp.eq.s32.totalorder %s16, 1
    %p95 = por %p93, %p94
    %p96 = scmp.ne.s32.totalorder %s87, %s88
    %p97 = scmp.eq.s32.totalorder %s16, 0
    %p98 = por %p96, %p97
    %p99 = scmp.ne.s32.totalorder %s87, %s88
    %p100 = scmp.eq.s32.totalorder %s17, 1
    %p101 = por %p99, %p100
    %p103 = scmp.ne.s32.totalorder %s88, %s102
    %p104 = scmp.eq.s32.totalorder %s17, 0
    %p105 = por %p103, %p104
    %s106 = ssub.s32 %s18, %s30
    %p107 = scmp.eq.s32.totalorder %s106, 0
    %s109 = sadd.s32 %s108, 1
    %s110 = scalar_select %p107, %s108, %s109
    %p113 = pneg %p107
    %p114 = scmp.eq.s32.totalorder %s11, 1
    %p115 = por %p113, %p114
    %p116 = scmp.ne.s32.totalorder %s108, %s111
    %p117 = scmp.eq.s32.totalorder %s11, 0
    %p118 = por %p116, %p117
    %p119 = scmp.ne.s32.totalorder %s108, %s111
    %p120 = scmp.eq.s32.totalorder %s16, 1
    %p121 = por %p119, %p120
    %p122 = scmp.ne.s32.totalorder %s111, %s112
    %p123 = scmp.eq.s32.totalorder %s16, 0
    %p124 = por %p122, %p123
    %p125 = scmp.ne.s32.totalorder %s111, %s112
    %p126 = scmp.eq.s32.totalorder %s17, 1
    %p127 = por %p125, %p126
    %p129 = scmp.ne.s32.totalorder %s112, %s128
    %p130 = scmp.eq.s32.totalorder %s17, 0
    %p131 = por %p129, %p130
    %s132 = ssub.s32 %s18, %s30
    %p133 = scmp.eq.s32.totalorder %s132, 0
    %s135 = sadd.s32 %s134, 1
    %s136 = scalar_select %p133, %s134, %s135
    %p139 = pneg %p133
    %p140 = scmp.eq.s32.totalorder %s11, 1
    %p141 = por %p139, %p140
    %p142 = scmp.ne.s32.totalorder %s134, %s137
    %p143 = scmp.eq.s32.totalorder %s11, 0
    %p144 = por %p142, %p143
    %p145 = scmp.ne.s32.totalorder %s134, %s137
    %p146 = scmp.eq.s32.totalorder %s16, 1
    %p147 = por %p145, %p146
    %p148 = scmp.ne.s32.totalorder %s137, %s138
    %p149 = scmp.eq.s32.totalorder %s16, 0
    %p150 = por %p148, %p149
    %p151 = scmp.ne.s32.totalorder %s137, %s138
    %p152 = scmp.eq.s32.totalorder %s17, 1
    %p153 = por %p151, %p152
    %p155 = scmp.ne.s32.totalorder %s138, %s154
    %p156 = scmp.eq.s32.totalorder %s17, 0
    %p157 = por %p155, %p156
    %p158 = scmp.le.s32.totalorder 1, %s11
    %p159 = scmp.lt.s32.totalorder %s11, 3
    %p160 = pnand %p158, %p159
    %p161 = pneg %p160
    // Predicated region
    $region9: #{shallow_pointnet_feat.8} parent=5 // pred_check
      _
    $region10: #{shallow_pointnet_feat.8} parent=5 // pred_check_branch
      %163 = sbr.rel (%p160) target = $region12
    $region11: #{shallow_pointnet_feat.8} parent=5 // pred_region
      %s164 = ssub.s32 %s11, 1
      // Predicated region
      $region13: #{shallow_pointnet_feat.8} parent=11 // pred_check
        %p165 = pneg %p98
      $region14: #{shallow_pointnet_feat.8} parent=11 // pred_check_branch
        %167 = sbr.rel (%p165) target = $region16
      $region15: #{shallow_pointnet_feat.8} parent=11 // pred_region
        _
      $region16: #{shallow_pointnet_feat.8} parent=11 // pred_fallthru
        _
    $region12: #{shallow_pointnet_feat.8} parent=5 // pred_fallthru
      _
    %p168 = scmp.lt.s32.totalorder %s11, 2
    // Predicated region
    $region17: #{shallow_pointnet_feat.8} parent=5 // pred_check
      %p169 = pneg %p168
    $region18: #{shallow_pointnet_feat.8} parent=5 // pred_check_branch
      %171 = sbr.rel (%p169) target = $region20
    $region19: #{shallow_pointnet_feat.8} parent=5 // pred_region
      // Predicated region
      $region21: #{shallow_pointnet_feat.8} parent=19 // pred_check
        %p172 = pneg %p45
      $region22: #{shallow_pointnet_feat.8} parent=19 // pred_check_branch
        %174 = sbr.rel (%p172) target = $region24
      $region23: #{shallow_pointnet_feat.8} parent=19 // pred_region
        %s175 = smul.u32 8, %s19
        %p176 = scmp.lt.s32.totalorder %s18, 1
        %s177 = scalar_select %p176, %s18, 1
        %p178 = scmp.lt.s32.totalorder %s175, 7
        %s179 = scalar_select %p178, %s175, 7
        %s180 = smul.addr %s177, 8
        %s181 = sadd.s32 %s179, %s180
        %s182 = smul.addr %s181, 8
        %s183 = scalar_lea.vmem %s0, %s182
        %s184 = smul.u32 8, %s19
      $region24: #{shallow_pointnet_feat.8} parent=19 // pred_fallthru
        _
      // Predicated region
      $region25: #{shallow_pointnet_feat.8} parent=19 // pred_check
        %p185 = pneg %p71
      $region26: #{shallow_pointnet_feat.8} parent=19 // pred_check_branch
        %187 = sbr.rel (%p185) target = $region28
      $region27: #{shallow_pointnet_feat.8} parent=19 // pred_region
        %p188 = scmp.lt.s32.totalorder %s18, 1
        %s189 = scalar_select %p188, %s18, 1
        %s190 = smul.addr %s189, 2
        %s191 = scalar_lea.vmem %s1, %s190
      $region28: #{shallow_pointnet_feat.8} parent=19 // pred_fallthru
        _
    $region20: #{shallow_pointnet_feat.8} parent=5 // pred_fallthru
      _
    %p192 = scmp.le.s32.totalorder 1, %s11
    %p193 = scmp.lt.s32.totalorder %s11, 3
    %p194 = pnand %p192, %p193
    %p195 = pneg %p194
    // Predicated region
    $region29: #{shallow_pointnet_feat.8} parent=5 // pred_check
      _
    $region30: #{shallow_pointnet_feat.8} parent=5 // pred_check_branch
      %197 = sbr.rel (%p194) target = $region32
    $region31: #{shallow_pointnet_feat.8} parent=5 // pred_region
      %s198 = ssub.s32 %s11, 1
      %s199 = smul.u32 8, %s21
      %p200 = scmp.lt.s32.totalorder %s20, 1
      %s201 = scalar_select %p200, %s20, 1
      %p202 = scmp.lt.s32.totalorder %s199, 7
      %s203 = scalar_select %p202, %s199, 7
      %s204 = smul.addr %s201, 8
      %s205 = sadd.s32 %s203, %s204
      %s206 = smul.addr %s205, 8
      %s207 = scalar_lea.vmem %s0, %s206
      %p208 = pneg %p51
      %p209 = pneg %p48
      %p210 = scmp.lt.s32.totalorder %s20, 1
      %s211 = scalar_select %p210, %s20, 1
      %s212 = smul.addr %s211, 2
      %s213 = scalar_lea.vmem %s1, %s212
      %p214 = pneg %p77
      %p215 = pneg %p74
      %p216 = pneg %p98
      %p217 = pneg %p95
      %p218 = pneg %p124
      %p219 = pneg %p121
      %p220 = scmp.lt.s32.totalorder %s20, 1
      %s221 = scalar_select %p220, %s20, 1
      %s222 = scalar_lea.vmem %s3, %s221
      %p223 = pneg %p150
      %p224 = pneg %p147
      %p225 = scmp.lt.s32.totalorder %s20, 1
      %s226 = scalar_select %p225, %s20, 1
      %s227 = scalar_lea.vmem %s4, %s226
      %s228 = smul.u32 8, %s21
      %p229 = scmp.lt.s32.totalorder %s20, 1
      %s230 = scalar_select %p229, %s20, 1
      %p231 = scmp.lt.s32.totalorder %s228, 7
      %s232 = scalar_select %p231, %s228, 7
      %s233 = smul.addr %s230, 8
      %s234 = sadd.s32 %s232, %s233
      %s235 = smul.addr %s234, 8
      %s236 = scalar_lea.vmem %s0, %s235
      %s237 = smul.u32 8, %s21
      %p238 = scmp.lt.s32.totalorder %s20, 1
      %s239 = scalar_select %p238, %s20, 1
      %s240 = smul.addr %s239, 2
      %s241 = scalar_lea.vmem %s1, %s240
      %p242 = scmp.lt.s32.totalorder %s20, 1
      %s243 = scalar_select %p242, %s20, 1
      %s244 = scalar_lea.vmem %s3, %s243
      %p245 = scmp.lt.s32.totalorder %s20, 1
      %s246 = scalar_select %p245, %s20, 1
      %s247 = scalar_lea.vmem %s4, %s246
      %v248 = vld [vmem:[%s236] sm:$0xff]
      %v249 = vld [vmem:[%s236 + $0x8] sm:$0xff]
      %v250 = vld [vmem:[%s236 + $0x10] sm:$0xff]
      %v251 = vld [vmem:[%s236 + $0x18] sm:$0xff]
      %v252 = vld [vmem:[%s236 + $0x20] sm:$0xff]
      %v253 = vld [vmem:[%s236 + $0x28] sm:$0xff]
      %v254 = vld [vmem:[%s236 + $0x30] sm:$0xff]
      %v255 = vld [vmem:[%s236 + $0x38] sm:$0xff]
      %v256 = vld [vmem:[%s241] sm:$0x3]
      %v257 = vld [vmem:[%s2] sm:$0x1]
      %259 = vset.pattern.permute.xlu0 0
      %260 = vperm.xlu0 %259, %v248
      %v261 = vpop.permute.xlu0 %260
      %264 = vset.pattern.permute.xlu0 0
      %265 = vperm.xlu0 %264, %v249
      %v266 = vpop.permute.xlu0 %265
      %269 = vset.pattern.permute.xlu0 0
      %270 = vperm.xlu0 %269, %v250
      %v271 = vpop.permute.xlu0 %270
      %274 = vset.pattern.permute.xlu0 0
      %275 = vperm.xlu0 %274, %v251
      %v276 = vpop.permute.xlu0 %275
      %279 = vset.pattern.permute.xlu0 0
      %280 = vperm.xlu0 %279, %v252
      %v281 = vpop.permute.xlu0 %280
      %284 = vset.pattern.permute.xlu0 0
      %285 = vperm.xlu0 %284, %v253
      %v286 = vpop.permute.xlu0 %285
      %289 = vset.pattern.permute.xlu0 0
      %290 = vperm.xlu0 %289, %v254
      %v291 = vpop.permute.xlu0 %290
      %294 = vset.pattern.permute.xlu0 0
      %295 = vperm.xlu0 %294, %v255
      %v296 = vpop.permute.xlu0 %295
      %v298 = vperm.slane %v256, 0
      %v299 = vmul.f32 %v261, %v298
      %v300 = vmul.f32 %v266, %v298
      %v301 = vmul.f32 %v271, %v298
      %v302 = vmul.f32 %v276, %v298
      %v303 = vmul.f32 %v281, %v298
      %v304 = vmul.f32 %v286, %v298
      %v305 = vmul.f32 %v291, %v298
      %v306 = vmul.f32 %v296, %v298
      %v308 = vperm.slane %v257, 0
      %v310 = vadd.f32 %v299, %v308
      %v311 = vadd.f32 %v300, %v308
      %v312 = vadd.f32 %v301, %v308
      %v313 = vadd.f32 %v302, %v308
      %v314 = vadd.f32 %v303, %v308
      %v315 = vadd.f32 %v304, %v308
      %v316 = vadd.f32 %v305, %v308
      %v317 = vadd.f32 %v306, %v308
      %318 = vset.pattern.permute.xlu0 1
      %319 = vperm.xlu0 %318, %v248
      %v320 = vpop.permute.xlu0 %319
      %322 = vset.pattern.permute.xlu0 1
      %323 = vperm.xlu0 %322, %v249
      %v324 = vpop.permute.xlu0 %323
      %326 = vset.pattern.permute.xlu0 1
      %327 = vperm.xlu0 %326, %v250
      %v328 = vpop.permute.xlu0 %327
      %330 = vset.pattern.permute.xlu0 1
      %331 = vperm.xlu0 %330, %v251
      %v332 = vpop.permute.xlu0 %331
      %334 = vset.pattern.permute.xlu0 1
      %335 = vperm.xlu0 %334, %v252
      %v336 = vpop.permute.xlu0 %335
      %338 = vset.pattern.permute.xlu0 1
      %339 = vperm.xlu0 %338, %v253
      %v340 = vpop.permute.xlu0 %339
      %342 = vset.pattern.permute.xlu0 1
      %343 = vperm.xlu0 %342, %v254
      %v344 = vpop.permute.xlu0 %343
      %346 = vset.pattern.permute.xlu0 1
      %347 = vperm.xlu0 %346, %v255
      %v348 = vpop.permute.xlu0 %347
      %v350 = vperm.slane %v256, 1
      %v351 = vmul.f32 %v320, %v350
      %v352 = vmul.f32 %v324, %v350
      %v353 = vmul.f32 %v328, %v350
      %v354 = vmul.f32 %v332, %v350
      %v355 = vmul.f32 %v336, %v350
      %v356 = vmul.f32 %v340, %v350
      %v357 = vmul.f32 %v344, %v350
      %v358 = vmul.f32 %v348, %v350
      %v359 = vadd.f32 %v310, %v351
      %v360 = vadd.f32 %v311, %v352
      %v361 = vadd.f32 %v312, %v353
      %v362 = vadd.f32 %v313, %v354
      %v363 = vadd.f32 %v314, %v355
      %v364 = vadd.f32 %v315, %v356
      %v365 = vadd.f32 %v316, %v357
      %v366 = vadd.f32 %v317, %v358
      %vm367 = vcmask 523264
      %v368 = vsel %vm367, %v359, 0.0
      %v369 = vsel %vm367, %v360, 0.0
      %v370 = vadd.f32 %v368, %v369
      %v371 = vsel %vm367, %v361, 0.0
      %v372 = vadd.f32 %v370, %v371
      %v373 = vsel %vm367, %v362, 0.0
      %v374 = vadd.f32 %v372, %v373
      %v375 = vsel %vm367, %v363, 0.0
      %v376 = vadd.f32 %v374, %v375
      %v377 = vsel %vm367, %v364, 0.0
      %v378 = vadd.f32 %v376, %v377
      %v379 = vsel %vm367, %v365, 0.0
      %v380 = vadd.f32 %v378, %v379
      %v381 = vsel %vm367, %v366, 0.0
      %v382 = vadd.f32 %v380, %v381
      %v383 = vrot.slane %v382, 4
      %v384 = vadd.f32 %v382, %v383
      %v385 = vrot.slane %v384, 2
      %v386 = vadd.f32 %v384, %v385
      %v387 = vrot.slane %v386, 1
      %v388 = vadd.f32 %v386, %v387
      %v389 = vmul.f32 %v359, %v359
      %v390 = vmul.f32 %v360, %v360
      %v391 = vmul.f32 %v361, %v361
      %v392 = vmul.f32 %v362, %v362
      %v393 = vmul.f32 %v363, %v363
      %v394 = vmul.f32 %v364, %v364
      %v395 = vmul.f32 %v365, %v365
      %v396 = vmul.f32 %v366, %v366
      %v397 = vsel %vm367, %v389, 0.0
      %v398 = vsel %vm367, %v390, 0.0
      %v399 = vadd.f32 %v397, %v398
      %v400 = vsel %vm367, %v391, 0.0
      %v401 = vadd.f32 %v399, %v400
      %v402 = vsel %vm367, %v392, 0.0
      %v403 = vadd.f32 %v401, %v402
      %v404 = vsel %vm367, %v393, 0.0
      %v405 = vadd.f32 %v403, %v404
      %v406 = vsel %vm367, %v394, 0.0
      %v407 = vadd.f32 %v405, %v406
      %v408 = vsel %vm367, %v395, 0.0
      %v409 = vadd.f32 %v407, %v408
      %v410 = vsel %vm367, %v396, 0.0
      %v411 = vadd.f32 %v409, %v410
      %v412 = vrot.slane %v411, 4
      %v413 = vadd.f32 %v411, %v412
      %v414 = vrot.slane %v413, 2
      %v415 = vadd.f32 %v413, %v414
      %v416 = vrot.slane %v415, 1
      %v417 = vadd.f32 %v415, %v416
      %p418 = scmp.eq.s32.totalorder %s21, 0
      // Predicated region
      $region33: #{shallow_pointnet_feat.8} parent=31 // pred_check
        %p419 = pneg %p418
      $region34: #{shallow_pointnet_feat.8} parent=31 // pred_check_branch
        %421 = sbr.rel (%p419) target = $region36
      $region35: #{shallow_pointnet_feat.8} parent=31 // pred_region
        %vm422 = vcmask 516096
        %423 = vst.msk [vmem:[%s244] sm:$0x1] %vm422, 0.0
        %424 = vst.msk [vmem:[%s247] sm:$0x1] %vm422, 0.0
      $region36: #{shallow_pointnet_feat.8} parent=31 // pred_fallthru
        _
      %v425 = vld [vmem:[%s244] sm:$0x1]
      %v426 = vadd.f32 %v425, %v388
      %vm427 = vcmask 516096
      %428 = vst.msk [vmem:[%s244] sm:$0x1] %vm427, %v426
      %v429 = vld [vmem:[%s247] sm:$0x1]
      %v430 = vadd.f32 %v429, %v417
      %431 = vst.msk [vmem:[%s247] sm:$0x1] %vm427, %v430
      %p432 = scmp.lt.s32.totalorder %s20, 1
      %s433 = scalar_select %p432, %s20, 1
      %s434 = scalar_lea.vmem %s3, %s433
      %p435 = scmp.lt.s32.totalorder %s20, 1
      %s436 = scalar_select %p435, %s20, 1
      %s437 = scalar_lea.vmem %s4, %s436
      // Predicated region
      $region37: #{shallow_pointnet_feat.8} parent=31 // pred_check
        %p438 = pneg %p121
      $region38: #{shallow_pointnet_feat.8} parent=31 // pred_check_branch
        %440 = sbr.rel (%p438) target = $region40
      $region39: #{shallow_pointnet_feat.8} parent=31 // pred_region
        _
      $region40: #{shallow_pointnet_feat.8} parent=31 // pred_fallthru
        _
      // Predicated region
      $region41: #{shallow_pointnet_feat.8} parent=31 // pred_check
        %p441 = pneg %p147
      $region42: #{shallow_pointnet_feat.8} parent=31 // pred_check_branch
        %443 = sbr.rel (%p441) target = $region44
      $region43: #{shallow_pointnet_feat.8} parent=31 // pred_region
        _
      $region44: #{shallow_pointnet_feat.8} parent=31 // pred_fallthru
        _
    $region32: #{shallow_pointnet_feat.8} parent=5 // pred_fallthru
      _
    %p444 = scmp.le.s32.totalorder 2, %s11
    // Predicated region
    $region45: #{shallow_pointnet_feat.8} parent=5 // pred_check
      %p445 = pneg %p444
    $region46: #{shallow_pointnet_feat.8} parent=5 // pred_check_branch
      %447 = sbr.rel (%p445) target = $region48
    $region47: #{shallow_pointnet_feat.8} parent=5 // pred_region
      %s448 = ssub.s32 %s11, 2
      // Predicated region
      $region49: #{shallow_pointnet_feat.8} parent=47 // pred_check
        %p449 = pneg %p127
      $region50: #{shallow_pointnet_feat.8} parent=47 // pred_check_branch
        %451 = sbr.rel (%p449) target = $region52
      $region51: #{shallow_pointnet_feat.8} parent=47 // pred_region
        %p452 = scmp.lt.s32.totalorder %s22, 1
        %s453 = scalar_select %p452, %s22, 1
        %s454 = scalar_lea.vmem %s3, %s453
      $region52: #{shallow_pointnet_feat.8} parent=47 // pred_fallthru
        _
      // Predicated region
      $region53: #{shallow_pointnet_feat.8} parent=47 // pred_check
        %p455 = pneg %p153
      $region54: #{shallow_pointnet_feat.8} parent=47 // pred_check_branch
        %457 = sbr.rel (%p455) target = $region56
      $region55: #{shallow_pointnet_feat.8} parent=47 // pred_region
        %p458 = scmp.lt.s32.totalorder %s22, 1
        %s459 = scalar_select %p458, %s22, 1
        %s460 = scalar_lea.vmem %s4, %s459
      $region56: #{shallow_pointnet_feat.8} parent=47 // pred_fallthru
        _
    $region48: #{shallow_pointnet_feat.8} parent=5 // pred_fallthru
      _
  $region6: #{shallow_pointnet_feat.8} parent=0 // loop_footer
    %s15 = sadd.s32 1, %s11
  $region7: #{shallow_pointnet_feat.8} parent=0 // loop_footer_branch
    %10 = sbr.rel target = $region3
  $region8: #{shallow_pointnet_feat.8} parent=0 // loop_exit
    _

// kernel: shallow_pointnet_feat.7
$region0: #{shallow_pointnet_feat.7}
  #allocation0 [shape = 'u32[]', space=smem, size = 0x4, offset = 0x4, fixed_abs, tag = 'smem constant byte address 0x4 - core index']
  #allocation1 [shape = 'u32[72,128]{1,0:T(1,128)}', space=vmem, size = 0x9000, scoped, tag = 'internal scratch']
  %s0 = inlined_call_operand.vmem [shape: f32[2,128], index: 0, kind: input, shape index: {}]
  %s1 = inlined_call_operand.vmem [shape: f32[2,128], index: 1, kind: input, shape index: {}]
  %s2 = inlined_call_operand.vmem [shape: f32[1,128], index: 2, kind: input, shape index: {}]
  %s3 = inlined_call_operand.vmem [shape: f32[1,128], index: 3, kind: input, shape index: {}]
  %s4 = inlined_call_operand.vmem [shape: f32[128,64], index: 4, kind: input, shape index: {}]
  %s5 = inlined_call_operand.vmem [shape: f32[1,64], index: 5, kind: input, shape index: {}]
  %s6 = inlined_call_operand.vmem [shape: f32[1,64], index: 6, kind: input, shape index: {}]
  %s7 = inlined_call_operand.vmem [shape: f32[1,64], index: 7, kind: input, shape index: {}]
  %s8 = inlined_call_operand.vmem [shape: f32[64,4], index: 8, kind: input, shape index: {}]
  %s9 = inlined_call_operand.vmem [shape: f32[1,4], index: 9, kind: input, shape index: {}]
  %s10 = inlined_call_operand.vmem [shape: f32[1,4], index: 10, kind: input, shape index: {}]
  %s11 = inlined_call_operand.vmem [shape: f32[2,4], index: 11, kind: output, shape index: {}]
  %s12 = sld [smem:[#allocation0]]
  $region54: #{shallow_pointnet_feat.7} parent=0
    _
  %s14 = ssub.s32 1, %s12
  %s15 = scalar_select 0, %s14, %s12
  // Predicated region
  $region2: #{shallow_pointnet_feat.7} parent=0 // pred_check
    _
  $region3: #{shallow_pointnet_feat.7} parent=0 // pred_check_branch
    %17 = sbr.rel (0) target = $region5
  $region4: #{shallow_pointnet_feat.7} parent=0 // pred_region
    _
  $region5: #{shallow_pointnet_feat.7} parent=0 // pred_fallthru
    _
  // Predicated region
  $region6: #{shallow_pointnet_feat.7} parent=0 // pred_check
    _
  $region7: #{shallow_pointnet_feat.7} parent=0 // pred_check_branch
    %19 = sbr.rel (0) target = $region9
  $region8: #{shallow_pointnet_feat.7} parent=0 // pred_region
    _
  $region9: #{shallow_pointnet_feat.7} parent=0 // pred_fallthru
    _
  // Predicated region
  $region10: #{shallow_pointnet_feat.7} parent=0 // pred_check
    _
  $region11: #{shallow_pointnet_feat.7} parent=0 // pred_check_branch
    %21 = sbr.rel (0) target = $region13
  $region12: #{shallow_pointnet_feat.7} parent=0 // pred_region
    _
  $region13: #{shallow_pointnet_feat.7} parent=0 // pred_fallthru
    _
  // Predicated region
  $region14: #{shallow_pointnet_feat.7} parent=0 // pred_check
    _
  $region15: #{shallow_pointnet_feat.7} parent=0 // pred_check_branch
    %23 = sbr.rel (0) target = $region17
  $region16: #{shallow_pointnet_feat.7} parent=0 // pred_region
    _
  $region17: #{shallow_pointnet_feat.7} parent=0 // pred_fallthru
    _
  // Predicated region
  $region18: #{shallow_pointnet_feat.7} parent=0 // pred_check
    _
  $region19: #{shallow_pointnet_feat.7} parent=0 // pred_check_branch
    %25 = sbr.rel (0) target = $region21
  $region20: #{shallow_pointnet_feat.7} parent=0 // pred_region
    _
  $region21: #{shallow_pointnet_feat.7} parent=0 // pred_fallthru
    _
  // Predicated region
  $region22: #{shallow_pointnet_feat.7} parent=0 // pred_check
    _
  $region23: #{shallow_pointnet_feat.7} parent=0 // pred_check_branch
    %27 = sbr.rel (0) target = $region25
  $region24: #{shallow_pointnet_feat.7} parent=0 // pred_region
    _
  $region25: #{shallow_pointnet_feat.7} parent=0 // pred_fallthru
    _
  // Predicated region
  $region26: #{shallow_pointnet_feat.7} parent=0 // pred_check
    _
  $region27: #{shallow_pointnet_feat.7} parent=0 // pred_check_branch
    %29 = sbr.rel (0) target = $region29
  $region28: #{shallow_pointnet_feat.7} parent=0 // pred_region
    _
  $region29: #{shallow_pointnet_feat.7} parent=0 // pred_fallthru
    _
  // Predicated region
  $region30: #{shallow_pointnet_feat.7} parent=0 // pred_check
    _
  $region31: #{shallow_pointnet_feat.7} parent=0 // pred_check_branch
    %31 = sbr.rel (0) target = $region33
  $region32: #{shallow_pointnet_feat.7} parent=0 // pred_region
    _
  $region33: #{shallow_pointnet_feat.7} parent=0 // pred_fallthru
    _
  // Predicated region
  $region34: #{shallow_pointnet_feat.7} parent=0 // pred_check
    _
  $region35: #{shallow_pointnet_feat.7} parent=0 // pred_check_branch
    %33 = sbr.rel (0) target = $region37
  $region36: #{shallow_pointnet_feat.7} parent=0 // pred_region
    _
  $region37: #{shallow_pointnet_feat.7} parent=0 // pred_fallthru
    _
  // Predicated region
  $region38: #{shallow_pointnet_feat.7} parent=0 // pred_check
    _
  $region39: #{shallow_pointnet_feat.7} parent=0 // pred_check_branch
    %35 = sbr.rel (0) target = $region41
  $region40: #{shallow_pointnet_feat.7} parent=0 // pred_region
    _
  $region41: #{shallow_pointnet_feat.7} parent=0 // pred_fallthru
    _
  // Predicated region
  $region42: #{shallow_pointnet_feat.7} parent=0 // pred_check
    _
  $region43: #{shallow_pointnet_feat.7} parent=0 // pred_check_branch
    %37 = sbr.rel (0) target = $region45
  $region44: #{shallow_pointnet_feat.7} parent=0 // pred_region
    _
  $region45: #{shallow_pointnet_feat.7} parent=0 // pred_fallthru
    _
  %v38 = vld [vmem:[%s2] sm:$0x1]
  %vm39 = vcmp.ge.f32.partialorder %v38, 0.0
  %v40 = vld [vmem:[%s0] sm:$0x3]
  %v42 = vperm.slane %v38, 0
  %v44 = vmul.f32 %v42, %v40
  %v45 = vld [vmem:[%s1] sm:$0x3]
  %v46 = vmul.f32 %v42, %v45
  %v47 = vsel %vm39, 1, 0
  %v48 = vperm.slane %v47, 0
  %vm49 = vcmp.eq.s32.totalorder %v48, 1
  %v50 = vsel %vm49, %v44, %v46
  %v51 = vld [vmem:[%s3] sm:$0x1]
  %v53 = vperm.slane %v51, 0
  %v55 = vadd.f32 %v50, %v53
  %v56 = vmax.f32 %v55, 0.0
  %v57 = vld [vmem:[%s4] sm:$0xff]
  %v58 = vld [vmem:[%s4 + $0x8] sm:$0xff]
  %v59 = vld [vmem:[%s4 + $0x10] sm:$0xff]
  %v60 = vld [vmem:[%s4 + $0x18] sm:$0xff]
  %v61 = vld [vmem:[%s4 + $0x20] sm:$0xff]
  %v62 = vld [vmem:[%s4 + $0x28] sm:$0xff]
  %v63 = vld [vmem:[%s4 + $0x30] sm:$0xff]
  %v64 = vld [vmem:[%s4 + $0x38] sm:$0xff]
  %v65 = vld [vmem:[%s4 + $0x40] sm:$0xff]
  %v66 = vld [vmem:[%s4 + $0x48] sm:$0xff]
  %v67 = vld [vmem:[%s4 + $0x50] sm:$0xff]
  %v68 = vld [vmem:[%s4 + $0x58] sm:$0xff]
  %v69 = vld [vmem:[%s4 + $0x60] sm:$0xff]
  %v70 = vld [vmem:[%s4 + $0x68] sm:$0xff]
  %v71 = vld [vmem:[%s4 + $0x70] sm:$0xff]
  %v72 = vld [vmem:[%s4 + $0x78] sm:$0xff]
  %v73 = vld [vmem:[%s5] sm:$0x1]
  %v75 = vperm.slane %v73, 0
  %77 = vmatpush.msra.mxu0 %v72
  %78 = vmatpush.msra.mxu0 %v71
  %79 = vmatpush.msra.mxu0 %v70
  %80 = vmatpush.msra.mxu0 %v69
  %81 = vmatpush.msra.mxu0 %v68
  %82 = vmatpush.msra.mxu0 %v67
  %83 = vmatpush.msra.mxu0 %v66
  %84 = vmatpush.msra.mxu0 %v65
  %85 = vmatpush.msra.mxu0 %v64
  %86 = vmatpush.msra.mxu0 %v63
  %87 = vmatpush.msra.mxu0 %v62
  %88 = vmatpush.msra.mxu0 %v61
  %89 = vmatpush.msra.mxu0 %v60
  %90 = vmatpush.msra.mxu0 %v59
  %91 = vmatpush.msra.mxu0 %v58
  %92 = vmatpush.msra.mxu0 %v57
  %93 = vmatmul.f32.gmra.mxu0 %v56
  %v94 = vpop.f32.mrf.mxu0
  %v95 = vadd.f32 %v75, %v94
  %96 = vdwg.mxu0
  %vm97 = vcmask 517120
  %v98 = vsel %vm97, %v95, 0.0
  %v99 = vrot.slane %v98, 4
  %v100 = vadd.f32 %v98, %v99
  %v101 = vrot.slane %v100, 2
  %v102 = vadd.f32 %v100, %v101
  %v103 = vrot.slane %v102, 1
  %v104 = vadd.f32 %v102, %v103
  %v105 = vrcp.pop 2.0
  %v106 = vmul.f32 2.0, %v105
  %v107 = vsub.f32 1.0, %v106
  %v108 = vmul.f32 %v105, %v107
  %v109 = vadd.f32 %v105, %v108
  %vm110 = vweird.f32 %v105
  %v111 = vsel %vm110, %v105, %v109
  %v112 = vmul.f32 %v104, %v111
  %v113 = vmul.f32 %v95, %v95
  %v114 = vsel %vm97, %v113, 0.0
  %v115 = vrot.slane %v114, 4
  %v116 = vadd.f32 %v114, %v115
  %v117 = vrot.slane %v116, 2
  %v118 = vadd.f32 %v116, %v117
  %v119 = vrot.slane %v118, 1
  %v120 = vadd.f32 %v118, %v119
  %v121 = vmul.f32 %v120, %v111
  %v122 = vmul.f32 %v112, %v112
  %v123 = vsub.f32 %v121, %v122
  %v124 = vmax.f32 %v123, 0.0
  %v125 = vsub.f32 %v95, %v112
  %v126 = vadd.f32 %v124, 1e-05
  %v127 = vrsqrt.pop %v126
  %v128 = vmul.f32 %v127, %v126
  %v129 = vmul.f32 %v128, %v127
  %v130 = vmul.f32 0.5, %v129
  %v131 = vsub.f32 1.5, %v130
  %v132 = vmul.f32 %v127, %v131
  %vm133 = vweird.f32 %v126
  %vm134 = vweird.f32 %v127
  %vm135 = vmor %vm133, %vm134
  %v136 = vsel %vm135, %v127, %v132
  %v137 = vmul.f32 %v125, %v136
  %v138 = vld [vmem:[%s6] sm:$0x1]
  %v140 = vperm.slane %v138, 0
  %v142 = vmul.f32 %v137, %v140
  %v143 = vld [vmem:[%s7] sm:$0x1]
  %v145 = vperm.slane %v143, 0
  %v147 = vadd.f32 %v142, %v145
  %v148 = vmax.f32 %v147, 0.0
  %v149 = vld [vmem:[%s8] sm:$0xff]
  %v150 = vld [vmem:[%s8 + $0x8] sm:$0xff]
  %v151 = vld [vmem:[%s8 + $0x10] sm:$0xff]
  %v152 = vld [vmem:[%s8 + $0x18] sm:$0xff]
  %v153 = vld [vmem:[%s8 + $0x20] sm:$0xff]
  %v154 = vld [vmem:[%s8 + $0x28] sm:$0xff]
  %v155 = vld [vmem:[%s8 + $0x30] sm:$0xff]
  %v156 = vld [vmem:[%s8 + $0x38] sm:$0xff]
  %v157 = vld [vmem:[%s9] sm:$0x1]
  %v159 = vperm.slane %v157, 0
  %vm161 = vcmask 523264
  %v163 = vsel %vm161, %v148, 0
  %165 = vmatpush.msra.mxu0 0.0
  %166 = vmatpush.msra.mxu0 0.0
  %167 = vmatpush.msra.mxu0 0.0
  %168 = vmatpush.msra.mxu0 0.0
  %169 = vmatpush.msra.mxu0 0.0
  %170 = vmatpush.msra.mxu0 0.0
  %171 = vmatpush.msra.mxu0 0.0
  %172 = vmatpush.msra.mxu0 0.0
  %173 = vmatpush.msra.mxu0 %v156
  %174 = vmatpush.msra.mxu0 %v155
  %175 = vmatpush.msra.mxu0 %v154
  %176 = vmatpush.msra.mxu0 %v153
  %177 = vmatpush.msra.mxu0 %v152
  %178 = vmatpush.msra.mxu0 %v151
  %179 = vmatpush.msra.mxu0 %v150
  %180 = vmatpush.msra.mxu0 %v149
  %181 = vmatmul.f32.gmra.mxu0 %v163
  %v182 = vpop.f32.mrf.mxu0
  %v183 = vadd.f32 %v159, %v182
  %184 = vdwg.mxu0
  %v185 = vld [vmem:[%s10] sm:$0x1]
  %v187 = vperm.slane %v185, 0
  %v189 = vadd.f32 %v183, %v187
  %vm190 = vcmask 25600
  %191 = vst.msk [vmem:[%s11] sm:$0x3] %vm190, %v189
  // Predicated region
  $region46: #{shallow_pointnet_feat.7} parent=0 // pred_check
    _
  $region47: #{shallow_pointnet_feat.7} parent=0 // pred_check_branch
    %193 = sbr.rel (0) target = $region49
  $region48: #{shallow_pointnet_feat.7} parent=0 // pred_region
    _
  $region49: #{shallow_pointnet_feat.7} parent=0 // pred_fallthru
    _
  // Predicated region
  $region50: #{shallow_pointnet_feat.7} parent=0 // pred_check
    _
  $region51: #{shallow_pointnet_feat.7} parent=0 // pred_check_branch
    %195 = sbr.rel (0) target = $region53
  $region52: #{shallow_pointnet_feat.7} parent=0 // pred_region
    _
  $region53: #{shallow_pointnet_feat.7} parent=0 // pred_fallthru
    _

// kernel: shallow_pointnet_feat.9
$region0: #{shallow_pointnet_feat.9}
  #allocation0 [shape = 'u32[]', space=smem, size = 0x4, offset = 0x4, fixed_abs, tag = 'smem constant byte address 0x4 - core index']
  #allocation1 [shape = 'u32[72,128]{1,0:T(1,128)}', space=vmem, size = 0x9000, scoped, tag = 'internal scratch']
  %s0 = inlined_call_operand.vmem [shape: f32[2,64,2], index: 0, kind: input, shape index: {}]
  %s1 = inlined_call_operand.vmem [shape: f32[2,2,64], index: 1, kind: input, shape index: {}]
  %s2 = inlined_call_operand.vmem [shape: f32[1,64], index: 2, kind: input, shape index: {}]
  %s3 = inlined_call_operand.vmem [shape: f32[1,64], index: 3, kind: input, shape index: {}]
  %s4 = inlined_call_operand.vmem [shape: f32[1,64], index: 4, kind: input, shape index: {}]
  %s5 = inlined_call_operand.vmem [shape: f32[64,128], index: 5, kind: input, shape index: {}]
  %s6 = inlined_call_operand.vmem [shape: f32[1,128], index: 6, kind: input, shape index: {}]
  %s7 = inlined_call_operand.vmem [shape: f32[2,1,128], index: 7, kind: output, shape index: {0}]
  %s8 = inlined_call_operand.vmem [shape: f32[2,1,128], index: 8, kind: output, shape index: {1}]
  %s9 = inlined_call_operand.vmem [shape: f32[2,1,128], index: 9, kind: output, shape index: {2}]
  %s10 = inlined_call_operand.vmem [shape: f32[2,1,128], index: 10, kind: output, shape index: {3}]
  %11 = xla_tuple %s7, %s8, %s9, %s10
  %s12 = sld [smem:[#allocation0]]
  $region89: #{shallow_pointnet_feat.9} parent=0
    _
  %s14 = ssub.s32 1, %s12
  %s15 = scalar_select 0, %s14, %s12
  loop: start=0, step=1, limit=4
  $region2: #{shallow_pointnet_feat.9} parent=0 // loop_pre_header
    _
  $region3: #{shallow_pointnet_feat.9} parent=0 // loop_header
    %s17 = sphi 0, %s21
    %p18 = scmp.ge.s32.totalorder %s17, 4
    %s24 = sphi 0, %s36
    %s25 = sphi 0, %s32
    %s26 = sphi 0, %s24
    %s27 = sphi 0, %s25
    %s28 = sphi 0, %s26
    %s29 = sphi 0, %s27
    %s41 = sphi 0, %s43
    %s44 = sphi 0, %s41
    %s45 = sphi 0, %s44
    %s61 = sphi 0, %s45
    %s67 = sphi 0, %s69
    %s70 = sphi 0, %s67
    %s71 = sphi 0, %s70
    %s87 = sphi 0, %s71
    %s91 = sphi 0, %s91
    %s93 = sphi 0, %s91
    %s94 = sphi 0, %s93
    %s108 = sphi 0, %s94
    %s112 = sphi 0, %s112
    %s114 = sphi 0, %s112
    %s115 = sphi 0, %s114
    %s129 = sphi 0, %s115
    %s133 = sphi 0, %s133
    %s135 = sphi 0, %s133
    %s136 = sphi 0, %s135
    %s150 = sphi 0, %s136
    %s154 = sphi 0, %s154
    %s156 = sphi 0, %s154
    %s157 = sphi 0, %s156
    %s171 = sphi 0, %s157
    %s175 = sphi 0, %s175
    %s177 = sphi 0, %s175
    %s178 = sphi 0, %s177
    %s192 = sphi 0, %s178
    %s198 = sphi 0, %s200
    %s201 = sphi 0, %s198
    %s202 = sphi 0, %s201
    %s218 = sphi 0, %s202
    %s224 = sphi 0, %s226
    %s227 = sphi 0, %s224
    %s228 = sphi 0, %s227
    %s244 = sphi 0, %s228
    %s250 = sphi 0, %s252
    %s253 = sphi 0, %s250
    %s254 = sphi 0, %s253
    %s270 = sphi 0, %s254
    %s276 = sphi 0, %s278
    %s279 = sphi 0, %s276
    %s280 = sphi 0, %s279
    %s296 = sphi 0, %s280
  $region4: #{shallow_pointnet_feat.9} parent=0 // loop_header_branch
    %20 = sbr.rel (%p18) target = $region8
  $region5: #{shallow_pointnet_feat.9} parent=0 // loop_body
    %s22 = ssub.s32 %s17, 1
    %s23 = ssub.s32 %s17, 2
    %s30 = sadd.s32 1, %s25
    %p31 = scmp.ge.s32.totalorder %s30, 1
    %s32 = scalar_select %p31, 0, %s30
    %s33 = sadd.s32 1, %s24
    %s34 = scalar_select %p31, %s33, %s24
    %p35 = scmp.ge.s32.totalorder %s34, 2
    %s36 = scalar_select %p35, 0, %s34
    %s37 = ssub.s32 %s24, %s36
    %s38 = ssub.s32 %s25, %s32
    %s39 = sor.u32 %s37, %s38
    %p40 = scmp.eq.s32.totalorder %s39, 0
    %s42 = sadd.s32 %s41, 1
    %s43 = scalar_select %p40, %s41, %s42
    %p46 = pneg %p40
    %p47 = scmp.eq.s32.totalorder %s17, 1
    %p48 = por %p46, %p47
    %p49 = scmp.ne.s32.totalorder %s41, %s44
    %p50 = scmp.eq.s32.totalorder %s17, 0
    %p51 = por %p49, %p50
    %p52 = scmp.ne.s32.totalorder %s41, %s44
    %p53 = scmp.eq.s32.totalorder %s22, 1
    %p54 = por %p52, %p53
    %p55 = scmp.ne.s32.totalorder %s44, %s45
    %p56 = scmp.eq.s32.totalorder %s22, 0
    %p57 = por %p55, %p56
    %p58 = scmp.ne.s32.totalorder %s44, %s45
    %p59 = scmp.eq.s32.totalorder %s23, 1
    %p60 = por %p58, %p59
    %p62 = scmp.ne.s32.totalorder %s45, %s61
    %p63 = scmp.eq.s32.totalorder %s23, 0
    %p64 = por %p62, %p63
    %s65 = ssub.s32 %s24, %s36
    %p66 = scmp.eq.s32.totalorder %s65, 0
    %s68 = sadd.s32 %s67, 1
    %s69 = scalar_select %p66, %s67, %s68
    %p72 = pneg %p66
    %p73 = scmp.eq.s32.totalorder %s17, 1
    %p74 = por %p72, %p73
    %p75 = scmp.ne.s32.totalorder %s67, %s70
    %p76 = scmp.eq.s32.totalorder %s17, 0
    %p77 = por %p75, %p76
    %p78 = scmp.ne.s32.totalorder %s67, %s70
    %p79 = scmp.eq.s32.totalorder %s22, 1
    %p80 = por %p78, %p79
    %p81 = scmp.ne.s32.totalorder %s70, %s71
    %p82 = scmp.eq.s32.totalorder %s22, 0
    %p83 = por %p81, %p82
    %p84 = scmp.ne.s32.totalorder %s70, %s71
    %p85 = scmp.eq.s32.totalorder %s23, 1
    %p86 = por %p84, %p85
    %p88 = scmp.ne.s32.totalorder %s71, %s87
    %p89 = scmp.eq.s32.totalorder %s23, 0
    %p90 = por %p88, %p89
    %s92 = sadd.s32 %s91, 1
    %p95 = scmp.eq.s32.totalorder %s17, 1
    %p96 = scmp.ne.s32.totalorder %s91, %s93
    %p97 = scmp.eq.s32.totalorder %s17, 0
    %p98 = por %p96, %p97
    %p99 = scmp.ne.s32.totalorder %s91, %s93
    %p100 = scmp.eq.s32.totalorder %s22, 1
    %p101 = por %p99, %p100
    %p102 = scmp.ne.s32.totalorder %s93, %s94
    %p103 = scmp.eq.s32.totalorder %s22, 0
    %p104 = por %p102, %p103
    %p105 = scmp.ne.s32.totalorder %s93, %s94
    %p106 = scmp.eq.s32.totalorder %s23, 1
    %p107 = por %p105, %p106
    %p109 = scmp.ne.s32.totalorder %s94, %s108
    %p110 = scmp.eq.s32.totalorder %s23, 0
    %p111 = por %p109, %p110
    %s113 = sadd.s32 %s112, 1
    %p116 = scmp.eq.s32.totalorder %s17, 1
    %p117 = scmp.ne.s32.totalorder %s112, %s114
    %p118 = scmp.eq.s32.totalorder %s17, 0
    %p119 = por %p117, %p118
    %p120 = scmp.ne.s32.totalorder %s112, %s114
    %p121 = scmp.eq.s32.totalorder %s22, 1
    %p122 = por %p120, %p121
    %p123 = scmp.ne.s32.totalorder %s114, %s115
    %p124 = scmp.eq.s32.totalorder %s22, 0
    %p125 = por %p123, %p124
    %p126 = scmp.ne.s32.totalorder %s114, %s115
    %p127 = scmp.eq.s32.totalorder %s23, 1
    %p128 = por %p126, %p127
    %p130 = scmp.ne.s32.totalorder %s115, %s129
    %p131 = scmp.eq.s32.totalorder %s23, 0
    %p132 = por %p130, %p131
    %s134 = sadd.s32 %s133, 1
    %p137 = scmp.eq.s32.totalorder %s17, 1
    %p138 = scmp.ne.s32.totalorder %s133, %s135
    %p139 = scmp.eq.s32.totalorder %s17, 0
    %p140 = por %p138, %p139
    %p141 = scmp.ne.s32.totalorder %s133, %s135
    %p142 = scmp.eq.s32.totalorder %s22, 1
    %p143 = por %p141, %p142
    %p144 = scmp.ne.s32.totalorder %s135, %s136
    %p145 = scmp.eq.s32.totalorder %s22, 0
    %p146 = por %p144, %p145
    %p147 = scmp.ne.s32.totalorder %s135, %s136
    %p148 = scmp.eq.s32.totalorder %s23, 1
    %p149 = por %p147, %p148
    %p151 = scmp.ne.s32.totalorder %s136, %s150
    %p152 = scmp.eq.s32.totalorder %s23, 0
    %p153 = por %p151, %p152
    %s155 = sadd.s32 %s154, 1
    %p158 = scmp.eq.s32.totalorder %s17, 1
    %p159 = scmp.ne.s32.totalorder %s154, %s156
    %p160 = scmp.eq.s32.totalorder %s17, 0
    %p161 = por %p159, %p160
    %p162 = scmp.ne.s32.totalorder %s154, %s156
    %p163 = scmp.eq.s32.totalorder %s22, 1
    %p164 = por %p162, %p163
    %p165 = scmp.ne.s32.totalorder %s156, %s157
    %p166 = scmp.eq.s32.totalorder %s22, 0
    %p167 = por %p165, %p166
    %p168 = scmp.ne.s32.totalorder %s156, %s157
    %p169 = scmp.eq.s32.totalorder %s23, 1
    %p170 = por %p168, %p169
    %p172 = scmp.ne.s32.totalorder %s157, %s171
    %p173 = scmp.eq.s32.totalorder %s23, 0
    %p174 = por %p172, %p173
    %s176 = sadd.s32 %s175, 1
    %p179 = scmp.eq.s32.totalorder %s17, 1
    %p180 = scmp.ne.s32.totalorder %s175, %s177
    %p181 = scmp.eq.s32.totalorder %s17, 0
    %p182 = por %p180, %p181
    %p183 = scmp.ne.s32.totalorder %s175, %s177
    %p184 = scmp.eq.s32.totalorder %s22, 1
    %p185 = por %p183, %p184
    %p186 = scmp.ne.s32.totalorder %s177, %s178
    %p187 = scmp.eq.s32.totalorder %s22, 0
    %p188 = por %p186, %p187
    %p189 = scmp.ne.s32.totalorder %s177, %s178
    %p190 = scmp.eq.s32.totalorder %s23, 1
    %p191 = por %p189, %p190
    %p193 = scmp.ne.s32.totalorder %s178, %s192
    %p194 = scmp.eq.s32.totalorder %s23, 0
    %p195 = por %p193, %p194
    %s196 = ssub.s32 %s24, %s36
    %p197 = scmp.eq.s32.totalorder %s196, 0
    %s199 = sadd.s32 %s198, 1
    %s200 = scalar_select %p197, %s198, %s199
    %p203 = pneg %p197
    %p204 = scmp.eq.s32.totalorder %s17, 1
    %p205 = por %p203, %p204
    %p206 = scmp.ne.s32.totalorder %s198, %s201
    %p207 = scmp.eq.s32.totalorder %s17, 0
    %p208 = por %p206, %p207
    %p209 = scmp.ne.s32.totalorder %s198, %s201
    %p210 = scmp.eq.s32.totalorder %s22, 1
    %p211 = por %p209, %p210
    %p212 = scmp.ne.s32.totalorder %s201, %s202
    %p213 = scmp.eq.s32.totalorder %s22, 0
    %p214 = por %p212, %p213
    %p215 = scmp.ne.s32.totalorder %s201, %s202
    %p216 = scmp.eq.s32.totalorder %s23, 1
    %p217 = por %p215, %p216
    %p219 = scmp.ne.s32.totalorder %s202, %s218
    %p220 = scmp.eq.s32.totalorder %s23, 0
    %p221 = por %p219, %p220
    %s222 = ssub.s32 %s24, %s36
    %p223 = scmp.eq.s32.totalorder %s222, 0
    %s225 = sadd.s32 %s224, 1
    %s226 = scalar_select %p223, %s224, %s225
    %p229 = pneg %p223
    %p230 = scmp.eq.s32.totalorder %s17, 1
    %p231 = por %p229, %p230
    %p232 = scmp.ne.s32.totalorder %s224, %s227
    %p233 = scmp.eq.s32.totalorder %s17, 0
    %p234 = por %p232, %p233
    %p235 = scmp.ne.s32.totalorder %s224, %s227
    %p236 = scmp.eq.s32.totalorder %s22, 1
    %p237 = por %p235, %p236
    %p238 = scmp.ne.s32.totalorder %s227, %s228
    %p239 = scmp.eq.s32.totalorder %s22, 0
    %p240 = por %p238, %p239
    %p241 = scmp.ne.s32.totalorder %s227, %s228
    %p242 = scmp.eq.s32.totalorder %s23, 1
    %p243 = por %p241, %p242
    %p245 = scmp.ne.s32.totalorder %s228, %s244
    %p246 = scmp.eq.s32.totalorder %s23, 0
    %p247 = por %p245, %p246
    %s248 = ssub.s32 %s24, %s36
    %p249 = scmp.eq.s32.totalorder %s248, 0
    %s251 = sadd.s32 %s250, 1
    %s252 = scalar_select %p249, %s250, %s251
    %p255 = pneg %p249
    %p256 = scmp.eq.s32.totalorder %s17, 1
    %p257 = por %p255, %p256
    %p258 = scmp.ne.s32.totalorder %s250, %s253
    %p259 = scmp.eq.s32.totalorder %s17, 0
    %p260 = por %p258, %p259
    %p261 = scmp.ne.s32.totalorder %s250, %s253
    %p262 = scmp.eq.s32.totalorder %s22, 1
    %p263 = por %p261, %p262
    %p264 = scmp.ne.s32.totalorder %s253, %s254
    %p265 = scmp.eq.s32.totalorder %s22, 0
    %p266 = por %p264, %p265
    %p267 = scmp.ne.s32.totalorder %s253, %s254
    %p268 = scmp.eq.s32.totalorder %s23, 1
    %p269 = por %p267, %p268
    %p271 = scmp.ne.s32.totalorder %s254, %s270
    %p272 = scmp.eq.s32.totalorder %s23, 0
    %p273 = por %p271, %p272
    %s274 = ssub.s32 %s24, %s36
    %p275 = scmp.eq.s32.totalorder %s274, 0
    %s277 = sadd.s32 %s276, 1
    %s278 = scalar_select %p275, %s276, %s277
    %p281 = pneg %p275
    %p282 = scmp.eq.s32.totalorder %s17, 1
    %p283 = por %p281, %p282
    %p284 = scmp.ne.s32.totalorder %s276, %s279
    %p285 = scmp.eq.s32.totalorder %s17, 0
    %p286 = por %p284, %p285
    %p287 = scmp.ne.s32.totalorder %s276, %s279
    %p288 = scmp.eq.s32.totalorder %s22, 1
    %p289 = por %p287, %p288
    %p290 = scmp.ne.s32.totalorder %s279, %s280
    %p291 = scmp.eq.s32.totalorder %s22, 0
    %p292 = por %p290, %p291
    %p293 = scmp.ne.s32.totalorder %s279, %s280
    %p294 = scmp.eq.s32.totalorder %s23, 1
    %p295 = por %p293, %p294
    %p297 = scmp.ne.s32.totalorder %s280, %s296
    %p298 = scmp.eq.s32.totalorder %s23, 0
    %p299 = por %p297, %p298
    %p300 = scmp.le.s32.totalorder 1, %s17
    %p301 = scmp.lt.s32.totalorder %s17, 3
    %p302 = pnand %p300, %p301
    %p303 = pneg %p302
    // Predicated region
    $region9: #{shallow_pointnet_feat.9} parent=5 // pred_check
      _
    $region10: #{shallow_pointnet_feat.9} parent=5 // pred_check_branch
      %305 = sbr.rel (%p302) target = $region12
    $region11: #{shallow_pointnet_feat.9} parent=5 // pred_region
      %s306 = ssub.s32 %s17, 1
      // Predicated region
      $region13: #{shallow_pointnet_feat.9} parent=11 // pred_check
        %p307 = pneg %p104
      $region14: #{shallow_pointnet_feat.9} parent=11 // pred_check_branch
        %309 = sbr.rel (%p307) target = $region16
      $region15: #{shallow_pointnet_feat.9} parent=11 // pred_region
        _
      $region16: #{shallow_pointnet_feat.9} parent=11 // pred_fallthru
        _
      // Predicated region
      $region17: #{shallow_pointnet_feat.9} parent=11 // pred_check
        %p310 = pneg %p125
      $region18: #{shallow_pointnet_feat.9} parent=11 // pred_check_branch
        %312 = sbr.rel (%p310) target = $region20
      $region19: #{shallow_pointnet_feat.9} parent=11 // pred_region
        _
      $region20: #{shallow_pointnet_feat.9} parent=11 // pred_fallthru
        _
      // Predicated region
      $region21: #{shallow_pointnet_feat.9} parent=11 // pred_check
        %p313 = pneg %p146
      $region22: #{shallow_pointnet_feat.9} parent=11 // pred_check_branch
        %315 = sbr.rel (%p313) target = $region24
      $region23: #{shallow_pointnet_feat.9} parent=11 // pred_region
        _
      $region24: #{shallow_pointnet_feat.9} parent=11 // pred_fallthru
        _
      // Predicated region
      $region25: #{shallow_pointnet_feat.9} parent=11 // pred_check
        %p316 = pneg %p167
      $region26: #{shallow_pointnet_feat.9} parent=11 // pred_check_branch
        %318 = sbr.rel (%p316) target = $region28
      $region27: #{shallow_pointnet_feat.9} parent=11 // pred_region
        _
      $region28: #{shallow_pointnet_feat.9} parent=11 // pred_fallthru
        _
      // Predicated region
      $region29: #{shallow_pointnet_feat.9} parent=11 // pred_check
        %p319 = pneg %p188
      $region30: #{shallow_pointnet_feat.9} parent=11 // pred_check_branch
        %321 = sbr.rel (%p319) target = $region32
      $region31: #{shallow_pointnet_feat.9} parent=11 // pred_region
        _
      $region32: #{shallow_pointnet_feat.9} parent=11 // pred_fallthru
        _
    $region12: #{shallow_pointnet_feat.9} parent=5 // pred_fallthru
      _
    %p322 = scmp.lt.s32.totalorder %s17, 2
    // Predicated region
    $region33: #{shallow_pointnet_feat.9} parent=5 // pred_check
      %p323 = pneg %p322
    $region34: #{shallow_pointnet_feat.9} parent=5 // pred_check_branch
      %325 = sbr.rel (%p323) target = $region36
    $region35: #{shallow_pointnet_feat.9} parent=5 // pred_region
      // Predicated region
      $region37: #{shallow_pointnet_feat.9} parent=35 // pred_check
        %p326 = pneg %p51
      $region38: #{shallow_pointnet_feat.9} parent=35 // pred_check_branch
        %328 = sbr.rel (%p326) target = $region40
      $region39: #{shallow_pointnet_feat.9} parent=35 // pred_region
        %s329 = smul.u32 8, %s25
        %p330 = scmp.lt.s32.totalorder %s24, 1
        %s331 = scalar_select %p330, %s24, 1
        %p332 = scmp.lt.s32.totalorder %s329, 7
        %s333 = scalar_select %p332, %s329, 7
        %s334 = smul.addr %s331, 8
        %s335 = sadd.s32 %s333, %s334
        %s336 = smul.addr %s335, 8
        %s337 = scalar_lea.vmem %s0, %s336
        %s338 = smul.u32 8, %s25
      $region40: #{shallow_pointnet_feat.9} parent=35 // pred_fallthru
        _
      // Predicated region
      $region41: #{shallow_pointnet_feat.9} parent=35 // pred_check
        %p339 = pneg %p77
      $region42: #{shallow_pointnet_feat.9} parent=35 // pred_check_branch
        %341 = sbr.rel (%p339) target = $region44
      $region43: #{shallow_pointnet_feat.9} parent=35 // pred_region
        %p342 = scmp.lt.s32.totalorder %s24, 1
        %s343 = scalar_select %p342, %s24, 1
        %s344 = smul.addr %s343, 2
        %s345 = scalar_lea.vmem %s1, %s344
      $region44: #{shallow_pointnet_feat.9} parent=35 // pred_fallthru
        _
    $region36: #{shallow_pointnet_feat.9} parent=5 // pred_fallthru
      _
    %p346 = scmp.le.s32.totalorder 1, %s17
    %p347 = scmp.lt.s32.totalorder %s17, 3
    %p348 = pnand %p346, %p347
    %p349 = pneg %p348
    // Predicated region
    $region45: #{shallow_pointnet_feat.9} parent=5 // pred_check
      _
    $region46: #{shallow_pointnet_feat.9} parent=5 // pred_check_branch
      %351 = sbr.rel (%p348) target = $region48
    $region47: #{shallow_pointnet_feat.9} parent=5 // pred_region
      %s352 = ssub.s32 %s17, 1
      %s353 = smul.u32 8, %s27
      %p354 = scmp.lt.s32.totalorder %s26, 1
      %s355 = scalar_select %p354, %s26, 1
      %p356 = scmp.lt.s32.totalorder %s353, 7
      %s357 = scalar_select %p356, %s353, 7
      %s358 = smul.addr %s355, 8
      %s359 = sadd.s32 %s357, %s358
      %s360 = smul.addr %s359, 8
      %s361 = scalar_lea.vmem %s0, %s360
      %p362 = pneg %p57
      %p363 = pneg %p54
      %p364 = scmp.lt.s32.totalorder %s26, 1
      %s365 = scalar_select %p364, %s26, 1
      %s366 = smul.addr %s365, 2
      %s367 = scalar_lea.vmem %s1, %s366
      %p368 = pneg %p83
      %p369 = pneg %p80
      %p370 = pneg %p104
      %p371 = pneg %p101
      %p372 = pneg %p125
      %p373 = pneg %p122
      %p374 = pneg %p146
      %p375 = pneg %p143
      %p376 = pneg %p167
      %p377 = pneg %p164
      %p378 = pneg %p188
      %p379 = pneg %p185
      %p380 = pneg %p214
      %p381 = pneg %p211
      %p382 = scmp.lt.s32.totalorder %s26, 1
      %s383 = scalar_select %p382, %s26, 1
      %s384 = scalar_lea.vmem %s7, %s383
      %p385 = pneg %p240
      %p386 = pneg %p237
      %p387 = scmp.lt.s32.totalorder %s26, 1
      %s388 = scalar_select %p387, %s26, 1
      %s389 = scalar_lea.vmem %s8, %s388
      %p390 = pneg %p266
      %p391 = pneg %p263
      %p392 = scmp.lt.s32.totalorder %s26, 1
      %s393 = scalar_select %p392, %s26, 1
      %s394 = scalar_lea.vmem %s9, %s393
      %p395 = pneg %p292
      %p396 = pneg %p289
      %p397 = scmp.lt.s32.totalorder %s26, 1
      %s398 = scalar_select %p397, %s26, 1
      %s399 = scalar_lea.vmem %s10, %s398
      %s400 = smul.u32 8, %s27
      %p401 = scmp.lt.s32.totalorder %s26, 1
      %s402 = scalar_select %p401, %s26, 1
      %p403 = scmp.lt.s32.totalorder %s400, 7
      %s404 = scalar_select %p403, %s400, 7
      %s405 = smul.addr %s402, 8
      %s406 = sadd.s32 %s404, %s405
      %s407 = smul.addr %s406, 8
      %s408 = scalar_lea.vmem %s0, %s407
      %s409 = smul.u32 8, %s27
      %p410 = scmp.lt.s32.totalorder %s26, 1
      %s411 = scalar_select %p410, %s26, 1
      %s412 = smul.addr %s411, 2
      %s413 = scalar_lea.vmem %s1, %s412
      %p414 = scmp.lt.s32.totalorder %s26, 1
      %s415 = scalar_select %p414, %s26, 1
      %s416 = scalar_lea.vmem %s7, %s415
      %p417 = scmp.lt.s32.totalorder %s26, 1
      %s418 = scalar_select %p417, %s26, 1
      %s419 = scalar_lea.vmem %s8, %s418
      %p420 = scmp.lt.s32.totalorder %s26, 1
      %s421 = scalar_select %p420, %s26, 1
      %s422 = scalar_lea.vmem %s9, %s421
      %p423 = scmp.lt.s32.totalorder %s26, 1
      %s424 = scalar_select %p423, %s26, 1
      %s425 = scalar_lea.vmem %s10, %s424
      %v426 = vld [vmem:[%s408] sm:$0xff]
      %v427 = vld [vmem:[%s408 + $0x8] sm:$0xff]
      %v428 = vld [vmem:[%s408 + $0x10] sm:$0xff]
      %v429 = vld [vmem:[%s408 + $0x18] sm:$0xff]
      %v430 = vld [vmem:[%s408 + $0x20] sm:$0xff]
      %v431 = vld [vmem:[%s408 + $0x28] sm:$0xff]
      %v432 = vld [vmem:[%s408 + $0x30] sm:$0xff]
      %v433 = vld [vmem:[%s408 + $0x38] sm:$0xff]
      %v434 = vld [vmem:[%s413] sm:$0x3]
      %v435 = vld [vmem:[%s2] sm:$0x1]
      %437 = vset.pattern.permute.xlu0 0
      %438 = vperm.xlu0 %437, %v426
      %v439 = vpop.permute.xlu0 %438
      %442 = vset.pattern.permute.xlu0 0
      %443 = vperm.xlu0 %442, %v427
      %v444 = vpop.permute.xlu0 %443
      %447 = vset.pattern.permute.xlu0 0
      %448 = vperm.xlu0 %447, %v428
      %v449 = vpop.permute.xlu0 %448
      %452 = vset.pattern.permute.xlu0 0
      %453 = vperm.xlu0 %452, %v429
      %v454 = vpop.permute.xlu0 %453
      %457 = vset.pattern.permute.xlu0 0
      %458 = vperm.xlu0 %457, %v430
      %v459 = vpop.permute.xlu0 %458
      %462 = vset.pattern.permute.xlu0 0
      %463 = vperm.xlu0 %462, %v431
      %v464 = vpop.permute.xlu0 %463
      %467 = vset.pattern.permute.xlu0 0
      %468 = vperm.xlu0 %467, %v432
      %v469 = vpop.permute.xlu0 %468
      %472 = vset.pattern.permute.xlu0 0
      %473 = vperm.xlu0 %472, %v433
      %v474 = vpop.permute.xlu0 %473
      %v476 = vperm.slane %v434, 0
      %v477 = vmul.f32 %v439, %v476
      %v478 = vmul.f32 %v444, %v476
      %v479 = vmul.f32 %v449, %v476
      %v480 = vmul.f32 %v454, %v476
      %v481 = vmul.f32 %v459, %v476
      %v482 = vmul.f32 %v464, %v476
      %v483 = vmul.f32 %v469, %v476
      %v484 = vmul.f32 %v474, %v476
      %v486 = vperm.slane %v435, 0
      %v488 = vadd.f32 %v477, %v486
      %v489 = vadd.f32 %v478, %v486
      %v490 = vadd.f32 %v479, %v486
      %v491 = vadd.f32 %v480, %v486
      %v492 = vadd.f32 %v481, %v486
      %v493 = vadd.f32 %v482, %v486
      %v494 = vadd.f32 %v483, %v486
      %v495 = vadd.f32 %v484, %v486
      %496 = vset.pattern.permute.xlu0 1
      %497 = vperm.xlu0 %496, %v426
      %v498 = vpop.permute.xlu0 %497
      %500 = vset.pattern.permute.xlu0 1
      %501 = vperm.xlu0 %500, %v427
      %v502 = vpop.permute.xlu0 %501
      %504 = vset.pattern.permute.xlu0 1
      %505 = vperm.xlu0 %504, %v428
      %v506 = vpop.permute.xlu0 %505
      %508 = vset.pattern.permute.xlu0 1
      %509 = vperm.xlu0 %508, %v429
      %v510 = vpop.permute.xlu0 %509
      %512 = vset.pattern.permute.xlu0 1
      %513 = vperm.xlu0 %512, %v430
      %v514 = vpop.permute.xlu0 %513
      %516 = vset.pattern.permute.xlu0 1
      %517 = vperm.xlu0 %516, %v431
      %v518 = vpop.permute.xlu0 %517
      %520 = vset.pattern.permute.xlu0 1
      %521 = vperm.xlu0 %520, %v432
      %v522 = vpop.permute.xlu0 %521
      %524 = vset.pattern.permute.xlu0 1
      %525 = vperm.xlu0 %524, %v433
      %v526 = vpop.permute.xlu0 %525
      %v528 = vperm.slane %v434, 1
      %v529 = vmul.f32 %v498, %v528
      %v530 = vmul.f32 %v502, %v528
      %v531 = vmul.f32 %v506, %v528
      %v532 = vmul.f32 %v510, %v528
      %v533 = vmul.f32 %v514, %v528
      %v534 = vmul.f32 %v518, %v528
      %v535 = vmul.f32 %v522, %v528
      %v536 = vmul.f32 %v526, %v528
      %v537 = vadd.f32 %v488, %v529
      %v538 = vadd.f32 %v489, %v530
      %v539 = vadd.f32 %v490, %v531
      %v540 = vadd.f32 %v491, %v532
      %v541 = vadd.f32 %v492, %v533
      %v542 = vadd.f32 %v493, %v534
      %v543 = vadd.f32 %v494, %v535
      %v544 = vadd.f32 %v495, %v536
      %v545 = vld [vmem:[%s3] sm:$0x1]
      %v547 = vperm.slane %v545, 0
      %v549 = vmul.f32 %v537, %v547
      %v550 = vmul.f32 %v538, %v547
      %v551 = vmul.f32 %v539, %v547
      %v552 = vmul.f32 %v540, %v547
      %v553 = vmul.f32 %v541, %v547
      %v554 = vmul.f32 %v542, %v547
      %v555 = vmul.f32 %v543, %v547
      %v556 = vmul.f32 %v544, %v547
      %v557 = vld [vmem:[%s4] sm:$0x1]
      %v559 = vperm.slane %v557, 0
      %v561 = vadd.f32 %v549, %v559
      %v562 = vadd.f32 %v550, %v559
      %v563 = vadd.f32 %v551, %v559
      %v564 = vadd.f32 %v552, %v559
      %v565 = vadd.f32 %v553, %v559
      %v566 = vadd.f32 %v554, %v559
      %v567 = vadd.f32 %v555, %v559
      %v568 = vadd.f32 %v556, %v559
      %v569 = vmax.f32 %v561, 0.0
      %v570 = vmax.f32 %v562, 0.0
      %v571 = vmax.f32 %v563, 0.0
      %v572 = vmax.f32 %v564, 0.0
      %v573 = vmax.f32 %v565, 0.0
      %v574 = vmax.f32 %v566, 0.0
      %v575 = vmax.f32 %v567, 0.0
      %v576 = vmax.f32 %v568, 0.0
      %v577 = vld [vmem:[%s5] sm:$0xff]
      %v578 = vld [vmem:[%s5 + $0x8] sm:$0xff]
      %v579 = vld [vmem:[%s5 + $0x10] sm:$0xff]
      %v580 = vld [vmem:[%s5 + $0x18] sm:$0xff]
      %v581 = vld [vmem:[%s5 + $0x20] sm:$0xff]
      %v582 = vld [vmem:[%s5 + $0x28] sm:$0xff]
      %v583 = vld [vmem:[%s5 + $0x30] sm:$0xff]
      %v584 = vld [vmem:[%s5 + $0x38] sm:$0xff]
      %v585 = vld [vmem:[%s6] sm:$0x1]
      %v587 = vperm.slane %v585, 0
      %vm589 = vcmask 523264
      %v591 = vsel %vm589, %v569, 0
      %v594 = vsel %vm589, %v570, 0
      %v597 = vsel %vm589, %v571, 0
      %v600 = vsel %vm589, %v572, 0
      %v603 = vsel %vm589, %v573, 0
      %v606 = vsel %vm589, %v574, 0
      %v609 = vsel %vm589, %v575, 0
      %v612 = vsel %vm589, %v576, 0
      %614 = vmatpush.msra.mxu0 0.0
      %615 = vmatpush.msra.mxu0 0.0
      %616 = vmatpush.msra.mxu0 0.0
      %617 = vmatpush.msra.mxu0 0.0
      %618 = vmatpush.msra.mxu0 0.0
      %619 = vmatpush.msra.mxu0 0.0
      %620 = vmatpush.msra.mxu0 0.0
      %621 = vmatpush.msra.mxu0 0.0
      %622 = vmatpush.msra.mxu0 %v584
      %623 = vmatpush.msra.mxu0 %v583
      %624 = vmatpush.msra.mxu0 %v582
      %625 = vmatpush.msra.mxu0 %v581
      %626 = vmatpush.msra.mxu0 %v580
      %627 = vmatpush.msra.mxu0 %v579
      %628 = vmatpush.msra.mxu0 %v578
      %629 = vmatpush.msra.mxu0 %v577
      %630 = vmatmul.f32.gmra.mxu0 %v591
      %v631 = vpop.f32.mrf.mxu0
      %v632 = vadd.f32 %v587, %v631
      %633 = vmatmul.f32.gmra.mxu0 %v594
      %v634 = vpop.f32.mrf.mxu0
      %v635 = vadd.f32 %v587, %v634
      %636 = vmatmul.f32.gmra.mxu0 %v597
      %v637 = vpop.f32.mrf.mxu0
      %v638 = vadd.f32 %v587, %v637
      %639 = vmatmul.f32.gmra.mxu0 %v600
      %v640 = vpop.f32.mrf.mxu0
      %v641 = vadd.f32 %v587, %v640
      %642 = vmatmul.f32.gmra.mxu0 %v603
      %v643 = vpop.f32.mrf.mxu0
      %v644 = vadd.f32 %v587, %v643
      %645 = vmatmul.f32.gmra.mxu0 %v606
      %v646 = vpop.f32.mrf.mxu0
      %v647 = vadd.f32 %v587, %v646
      %648 = vmatmul.f32.gmra.mxu0 %v609
      %v649 = vpop.f32.mrf.mxu0
      %v650 = vadd.f32 %v587, %v649
      %651 = vmatmul.f32.gmra.mxu0 %v612
      %v652 = vpop.f32.mrf.mxu0
      %v653 = vadd.f32 %v587, %v652
      %654 = vdwg.mxu0
      %v655 = vadd.f32 %v632, %v635
      %v656 = vadd.f32 %v655, %v638
      %v657 = vadd.f32 %v656, %v641
      %v658 = vadd.f32 %v657, %v644
      %v659 = vadd.f32 %v658, %v647
      %v660 = vadd.f32 %v659, %v650
      %v661 = vadd.f32 %v660, %v653
      %v662 = vrot.slane %v661, 4
      %v663 = vadd.f32 %v661, %v662
      %v664 = vrot.slane %v663, 2
      %v665 = vadd.f32 %v663, %v664
      %v666 = vrot.slane %v665, 1
      %v667 = vadd.f32 %v665, %v666
      %v668 = vmul.f32 %v632, %v632
      %v669 = vmul.f32 %v635, %v635
      %v670 = vmul.f32 %v638, %v638
      %v671 = vmul.f32 %v641, %v641
      %v672 = vmul.f32 %v644, %v644
      %v673 = vmul.f32 %v647, %v647
      %v674 = vmul.f32 %v650, %v650
      %v675 = vmul.f32 %v653, %v653
      %v676 = vadd.f32 %v668, %v669
      %v677 = vadd.f32 %v676, %v670
      %v678 = vadd.f32 %v677, %v671
      %v679 = vadd.f32 %v678, %v672
      %v680 = vadd.f32 %v679, %v673
      %v681 = vadd.f32 %v680, %v674
      %v682 = vadd.f32 %v681, %v675
      %v683 = vrot.slane %v682, 4
      %v684 = vadd.f32 %v682, %v683
      %v685 = vrot.slane %v684, 2
      %v686 = vadd.f32 %v684, %v685
      %v687 = vrot.slane %v686, 1
      %v688 = vadd.f32 %v686, %v687
      %v689 = vmax.f32 %v632, %v644
      %v690 = vmax.f32 %v635, %v647
      %v691 = vmax.f32 %v638, %v650
      %v692 = vmax.f32 %v641, %v653
      %v693 = vmax.f32 %v689, %v690
      %v694 = vmax.f32 %v691, %v692
      %v695 = vmax.f32 %v693, %v694
      %v696 = vrot.slane %v695, 4
      %v697 = vmax.f32 %v695, %v696
      %v698 = vrot.slane %v697, 2
      %v699 = vmax.f32 %v697, %v698
      %v700 = vrot.slane %v699, 1
      %v701 = vmax.f32 %v699, %v700
      %v702 = vmin.f32 %v632, %v644
      %v703 = vmin.f32 %v635, %v647
      %v704 = vmin.f32 %v638, %v650
      %v705 = vmin.f32 %v641, %v653
      %v706 = vmin.f32 %v702, %v703
      %v707 = vmin.f32 %v704, %v705
      %v708 = vmin.f32 %v706, %v707
      %v709 = vrot.slane %v708, 4
      %v710 = vmin.f32 %v708, %v709
      %v711 = vrot.slane %v710, 2
      %v712 = vmin.f32 %v710, %v711
      %v713 = vrot.slane %v712, 1
      %v714 = vmin.f32 %v712, %v713
      %p715 = scmp.eq.s32.totalorder %s27, 0
      // Predicated region
      $region49: #{shallow_pointnet_feat.9} parent=47 // pred_check
        %p716 = pneg %p715
      $region50: #{shallow_pointnet_feat.9} parent=47 // pred_check_branch
        %718 = sbr.rel (%p716) target = $region52
      $region51: #{shallow_pointnet_feat.9} parent=47 // pred_region
        %719 = vst [vmem:[%s416] sm:$0x1] 0.0
        %720 = vst [vmem:[%s419] sm:$0x1] 0.0
        %721 = vst [vmem:[%s422] sm:$0x1] -inf
        %722 = vst [vmem:[%s425] sm:$0x1] inf
      $region52: #{shallow_pointnet_feat.9} parent=47 // pred_fallthru
        _
      %v723 = vld [vmem:[%s416] sm:$0x1]
      %v724 = vadd.f32 %v723, %v667
      %725 = vst [vmem:[%s416] sm:$0x1] %v724
      %v726 = vld [vmem:[%s419] sm:$0x1]
      %v727 = vadd.f32 %v726, %v688
      %728 = vst [vmem:[%s419] sm:$0x1] %v727
      %v729 = vld [vmem:[%s422] sm:$0x1]
      %v730 = vmax.f32 %v729, %v701
      %731 = vst [vmem:[%s422] sm:$0x1] %v730
      %v732 = vld [vmem:[%s425] sm:$0x1]
      %v733 = vmin.f32 %v732, %v714
      %734 = vst [vmem:[%s425] sm:$0x1] %v733
      %p735 = scmp.lt.s32.totalorder %s26, 1
      %s736 = scalar_select %p735, %s26, 1
      %s737 = scalar_lea.vmem %s7, %s736
      %p738 = scmp.lt.s32.totalorder %s26, 1
      %s739 = scalar_select %p738, %s26, 1
      %s740 = scalar_lea.vmem %s8, %s739
      %p741 = scmp.lt.s32.totalorder %s26, 1
      %s742 = scalar_select %p741, %s26, 1
      %s743 = scalar_lea.vmem %s9, %s742
      %p744 = scmp.lt.s32.totalorder %s26, 1
      %s745 = scalar_select %p744, %s26, 1
      %s746 = scalar_lea.vmem %s10, %s745
      // Predicated region
      $region53: #{shallow_pointnet_feat.9} parent=47 // pred_check
        %p747 = pneg %p211
      $region54: #{shallow_pointnet_feat.9} parent=47 // pred_check_branch
        %749 = sbr.rel (%p747) target = $region56
      $region55: #{shallow_pointnet_feat.9} parent=47 // pred_region
        _
      $region56: #{shallow_pointnet_feat.9} parent=47 // pred_fallthru
        _
      // Predicated region
      $region57: #{shallow_pointnet_feat.9} parent=47 // pred_check
        %p750 = pneg %p237
      $region58: #{shallow_pointnet_feat.9} parent=47 // pred_check_branch
        %752 = sbr.rel (%p750) target = $region60
      $region59: #{shallow_pointnet_feat.9} parent=47 // pred_region
        _
      $region60: #{shallow_pointnet_feat.9} parent=47 // pred_fallthru
        _
      // Predicated region
      $region61: #{shallow_pointnet_feat.9} parent=47 // pred_check
        %p753 = pneg %p263
      $region62: #{shallow_pointnet_feat.9} parent=47 // pred_check_branch
        %755 = sbr.rel (%p753) target = $region64
      $region63: #{shallow_pointnet_feat.9} parent=47 // pred_region
        _
      $region64: #{shallow_pointnet_feat.9} parent=47 // pred_fallthru
        _
      // Predicated region
      $region65: #{shallow_pointnet_feat.9} parent=47 // pred_check
        %p756 = pneg %p289
      $region66: #{shallow_pointnet_feat.9} parent=47 // pred_check_branch
        %758 = sbr.rel (%p756) target = $region68
      $region67: #{shallow_pointnet_feat.9} parent=47 // pred_region
        _
      $region68: #{shallow_pointnet_feat.9} parent=47 // pred_fallthru
        _
    $region48: #{shallow_pointnet_feat.9} parent=5 // pred_fallthru
      _
    %p759 = scmp.le.s32.totalorder 2, %s17
    // Predicated region
    $region69: #{shallow_pointnet_feat.9} parent=5 // pred_check
      %p760 = pneg %p759
    $region70: #{shallow_pointnet_feat.9} parent=5 // pred_check_branch
      %762 = sbr.rel (%p760) target = $region72
    $region71: #{shallow_pointnet_feat.9} parent=5 // pred_region
      %s763 = ssub.s32 %s17, 2
      // Predicated region
      $region73: #{shallow_pointnet_feat.9} parent=71 // pred_check
        %p764 = pneg %p217
      $region74: #{shallow_pointnet_feat.9} parent=71 // pred_check_branch
        %766 = sbr.rel (%p764) target = $region76
      $region75: #{shallow_pointnet_feat.9} parent=71 // pred_region
        %p767 = scmp.lt.s32.totalorder %s28, 1
        %s768 = scalar_select %p767, %s28, 1
        %s769 = scalar_lea.vmem %s7, %s768
      $region76: #{shallow_pointnet_feat.9} parent=71 // pred_fallthru
        _
      // Predicated region
      $region77: #{shallow_pointnet_feat.9} parent=71 // pred_check
        %p770 = pneg %p243
      $region78: #{shallow_pointnet_feat.9} parent=71 // pred_check_branch
        %772 = sbr.rel (%p770) target = $region80
      $region79: #{shallow_pointnet_feat.9} parent=71 // pred_region
        %p773 = scmp.lt.s32.totalorder %s28, 1
        %s774 = scalar_select %p773, %s28, 1
        %s775 = scalar_lea.vmem %s8, %s774
      $region80: #{shallow_pointnet_feat.9} parent=71 // pred_fallthru
        _
      // Predicated region
      $region81: #{shallow_pointnet_feat.9} parent=71 // pred_check
        %p776 = pneg %p269
      $region82: #{shallow_pointnet_feat.9} parent=71 // pred_check_branch
        %778 = sbr.rel (%p776) target = $region84
      $region83: #{shallow_pointnet_feat.9} parent=71 // pred_region
        %p779 = scmp.lt.s32.totalorder %s28, 1
        %s780 = scalar_select %p779, %s28, 1
        %s781 = scalar_lea.vmem %s9, %s780
      $region84: #{shallow_pointnet_feat.9} parent=71 // pred_fallthru
        _
      // Predicated region
      $region85: #{shallow_pointnet_feat.9} parent=71 // pred_check
        %p782 = pneg %p295
      $region86: #{shallow_pointnet_feat.9} parent=71 // pred_check_branch
        %784 = sbr.rel (%p782) target = $region88
      $region87: #{shallow_pointnet_feat.9} parent=71 // pred_region
        %p785 = scmp.lt.s32.totalorder %s28, 1
        %s786 = scalar_select %p785, %s28, 1
        %s787 = scalar_lea.vmem %s10, %s786
      $region88: #{shallow_pointnet_feat.9} parent=71 // pred_fallthru
        _
    $region72: #{shallow_pointnet_feat.9} parent=5 // pred_fallthru
      _
  $region6: #{shallow_pointnet_feat.9} parent=0 // loop_footer
    %s21 = sadd.s32 1, %s17
  $region7: #{shallow_pointnet_feat.9} parent=0 // loop_footer_branch
    %16 = sbr.rel target = $region3
  $region8: #{shallow_pointnet_feat.9} parent=0 // loop_exit
    _

</llo_original>
